<compile_context>
chip_gen: v7x
topology: tpu7x:2x2x1
jax: 0.10.0
libtpu: 0.0.40
codegen_flags: <defaults>
</compile_context>

<pallas_src>
import functools

import jax
import jax.numpy as jnp
import numpy as np
from jax.experimental import pallas as pl
from jax.experimental.pallas import tpu as pltpu

HIDDEN = 32
VOCAB = 64
MAXLEN = 8
LANE = 128        # vreg lane width; every fused slot is padded to this
NEG_BIG = -1e30   # baked into bias on padded attention / vocab lanes


def _decoder_kernel(T,
                    ef_ref, h0_ref, encca_ref, wh_ref, wi_ref, wout_ref, b_ref,
                    logp_ref, attnw_ref, hlast_ref):
    f32 = jnp.float32

    ef = ef_ref[...]          # (T, 2*128)  emb @ [W_attn_e | W_comb_e], per step
    encca = encca_ref[...]    # (128, 128)  enc @ W_comb_attn, rows/cols padded
    wh = wh_ref[...]          # (128, 4*128) [W_attn_h | W_hr | W_hz | W_hn]
    wi = wi_ref[...]          # (128, 3*128) [W_ir | W_iz | W_in]
    wout = wout_ref[...]      # (128, 128)
    b = b_ref[...]            # (1, 7*128)  packed biases (+ -1e30 pad masks)

    b_attn = b[:, 0 * LANE:1 * LANE]
    b_comb = b[:, 1 * LANE:2 * LANE]
    b_r = b[:, 2 * LANE:3 * LANE]
    b_z = b[:, 3 * LANE:4 * LANE]
    b_ni = b[:, 4 * LANE:5 * LANE]
    b_nh = b[:, 5 * LANE:6 * LANE]
    b_out = b[:, 6 * LANE:7 * LANE]

    h = h0_ref[...]           # (1, 128); lanes [HIDDEN, 128) stay exactly 0
    logp_rows = []
    attn_rows = []

    for t in range(T):        # small static T -> fully unrolled in-kernel loop
        e_f = ef[t:t + 1, :]                                             # (1, 2*128)
        h_f = jnp.dot(h, wh, preferred_element_type=f32)                 # (1, 4*128)

        # attention softmax over maxlen (padded lanes carry -1e30 via bias)
        attn_logits = e_f[:, :LANE] + h_f[:, :LANE] + b_attn
        m = jnp.max(attn_logits, axis=1, keepdims=True)
        ex = jnp.exp(attn_logits - m)
        attn_w = ex * pl.reciprocal(jnp.sum(ex, axis=1, keepdims=True), approx=True)
        attn_rows.append(attn_w)

        # attn_combine + relu; combine term reassociated: attn_w @ (enc @ W_ca)
        x = jnp.maximum(
            e_f[:, LANE:2 * LANE]
            + jnp.dot(attn_w, encca, preferred_element_type=f32)
            + b_comb, 0.0)                                               # (1, 128)

        # single-step GRU (PyTorch gate order r, z, n); gates on 128-lane slots
        g_i = jnp.dot(x, wi, preferred_element_type=f32)                 # (1, 3*128)
        r = jax.nn.sigmoid(g_i[:, :LANE] + h_f[:, LANE:2 * LANE] + b_r)
        z = jax.nn.sigmoid(g_i[:, LANE:2 * LANE] + h_f[:, 2 * LANE:3 * LANE] + b_z)
        n = jnp.tanh(g_i[:, 2 * LANE:3 * LANE] + b_ni
                     + r * (h_f[:, 3 * LANE:4 * LANE] + b_nh))
        h = (1.0 - z) * n + z * h                                        # (1, 128)

        # output projection + log_softmax (padded vocab lanes carry -1e30 bias)
        logits = jnp.dot(h, wout, preferred_element_type=f32) + b_out
        lm = jnp.max(logits, axis=1, keepdims=True)
        lse = lm + jnp.log(jnp.sum(jnp.exp(logits - lm), axis=1, keepdims=True))
        logp_rows.append(logits - lse)

    # single lane-dense writeback per output
    logp_ref[...] = jnp.concatenate(logp_rows, axis=0)
    attnw_ref[...] = jnp.concatenate(attn_rows, axis=0)
    hlast_ref[...] = h


def init_params(key, vocab=VOCAB, hidden=HIDDEN, maxlen=MAXLEN):
    """Deterministic parameters in PyTorch layouts."""
    ks = jax.random.split(key, 12)
    s = 0.1
    return {
        "embedding": jax.random.normal(ks[0], (vocab, hidden), jnp.float32) * s,
        "attn_w":    jax.random.normal(ks[1], (maxlen, 2 * hidden), jnp.float32) * s,
        "attn_b":    jax.random.normal(ks[2], (maxlen,), jnp.float32) * s,
        "comb_w":    jax.random.normal(ks[3], (hidden, 2 * hidden), jnp.float32) * s,
        "comb_b":    jax.random.normal(ks[4], (hidden,), jnp.float32) * s,
        "w_ih":      jax.random.normal(ks[5], (3 * hidden, hidden), jnp.float32) * s,
        "w_hh":      jax.random.normal(ks[6], (3 * hidden, hidden), jnp.float32) * s,
        "b_ih":      jax.random.normal(ks[7], (3 * hidden,), jnp.float32) * s,
        "b_hh":      jax.random.normal(ks[8], (3 * hidden,), jnp.float32) * s,
        "out_w":     jax.random.normal(ks[9], (vocab, hidden), jnp.float32) * s,
        "out_b":     jax.random.normal(ks[10], (vocab,), jnp.float32) * s,
    }


def _pack_operands(tokens, h, encoder_outputs, p):
    """Repack PyTorch-layout weights into fused, lane-padded kernel operands."""
    H, V, L, LN = HIDDEN, VOCAB, MAXLEN, LANE
    f32 = jnp.float32

    # emb-side fused weights: emb @ [W_attn_e | W_comb_e]  (precomputed per step)
    we = jnp.zeros((H, 2 * LN), f32)
    we = we.at[:, 0:L].set(p["attn_w"][:, :H].T)
    we = we.at[:, LN:LN + H].set(p["comb_w"][:, :H].T)
    emb_rows = p["embedding"].astype(f32)[tokens]                 # (T, H) gather
    ef = jnp.dot(emb_rows, we)                                    # (T, 2*128)

    # h-side fused weights: h @ [W_attn_h | W_hr | W_hz | W_hn]
    wh = jnp.zeros((LN, 4 * LN), f32)
    wh = wh.at[:H, 0:L].set(p["attn_w"][:, H:].T)
    wh = wh.at[:H, LN:LN + H].set(p["w_hh"][:H].T)
    wh = wh.at[:H, 2 * LN:2 * LN + H].set(p["w_hh"][H:2 * H].T)
    wh = wh.at[:H, 3 * LN:3 * LN + H].set(p["w_hh"][2 * H:].T)

    # combine term precomputed on the encoder side: ENC_CA = enc @ W_comb_attn
    wca = p["comb_w"][:, H:].T                                    # (H, H)
    encca = jnp.zeros((LN, LN), f32).at[:L, :H].set(
        encoder_outputs.astype(f32) @ wca)

    # x-side fused GRU input weights: x @ [W_ir | W_iz | W_in]
    wi = jnp.zeros((LN, 3 * LN), f32)
    wi = wi.at[:H, 0:H].set(p["w_ih"][:H].T)
    wi = wi.at[:H, LN:LN + H].set(p["w_ih"][H:2 * H].T)
    wi = wi.at[:H, 2 * LN:2 * LN + H].set(p["w_ih"][2 * H:].T)

    wout = jnp.zeros((LN, LN), f32).at[:H, :V].set(p["out_w"].T)

    # all biases in one lane-dense operand; pad masks baked in as -1e30
    b = jnp.zeros((1, 7 * LN), f32)
    b = b.at[0, 0:LN].set(NEG_BIG)                                 # attn pad mask
    b = b.at[0, 0:L].set(p["attn_b"])
    b = b.at[0, LN:LN + H].set(p["comb_b"])
    b = b.at[0, 2 * LN:2 * LN + H].set(p["b_ih"][:H] + p["b_hh"][:H])            # r
    b = b.at[0, 3 * LN:3 * LN + H].set(p["b_ih"][H:2 * H] + p["b_hh"][H:2 * H])  # z
    b = b.at[0, 4 * LN:4 * LN + H].set(p["b_ih"][2 * H:])                        # n (input)
    b = b.at[0, 5 * LN:5 * LN + H].set(p["b_hh"][2 * H:])                        # n (hidden)
    b = b.at[0, 6 * LN:7 * LN].set(NEG_BIG)                        # vocab pad mask
    b = b.at[0, 6 * LN:6 * LN + V].set(p["out_b"])

    h0 = jnp.zeros((1, LN), f32).at[:, :H].set(h.reshape(1, H).astype(f32))
    return ef, h0, encca, wh, wi, wout, b


def decoder_forward(tokens, h, encoder_outputs, p):
    """tokens: int32 (T,) teacher-forcing ids; h: (1,1,H); enc: (maxlen, H).

    Returns (logp (T, V), attn_w (T, maxlen), h_final (1, 1, H)); for T=1 this is
    exactly one Decoder.forward step.
    """
    H, V, L, LN = HIDDEN, VOCAB, MAXLEN, LANE
    T = tokens.shape[0]
    f32 = jnp.float32

    ef, h0, encca, wh, wi, wout, bias = _pack_operands(
        tokens.astype(jnp.int32), h, encoder_outputs, p)

    def cspec(shape):
        return pl.BlockSpec(shape, lambda i: (0, 0))

    in_specs = [cspec((T, 2 * LN)), cspec((1, LN)), cspec((LN, LN)),
                cspec((LN, 4 * LN)), cspec((LN, 3 * LN)), cspec((LN, LN)),
                cspec((1, 7 * LN))]
    # Lane-dense (T, 128) output blocks; padding sliced off in the wrapper.
    out_shape = (jax.ShapeDtypeStruct((T, LN), f32),
                 jax.ShapeDtypeStruct((T, LN), f32),
                 jax.ShapeDtypeStruct((1, LN), f32))
    out_specs = [cspec((T, LN)), cspec((T, LN)), cspec((1, LN))]

    logp_full, attn_full, h_last = pl.pallas_call(
        functools.partial(_decoder_kernel, T),
        out_shape=out_shape,
        grid=(1,),                                   # single invocation; T-step loop is in-kernel
        in_specs=in_specs,
        out_specs=out_specs,
        compiler_params=pltpu.CompilerParams(
            dimension_semantics=("arbitrary",)),
    )(ef, h0, encca, wh, wi, wout, bias)

    return (logp_full[:, :V], attn_full[:, :L],
            h_last[:, :H].reshape(1, 1, H))


def decoder_reference(tokens, h, encoder_outputs, p):
    """Pure-JAX reference: loop of the PyTorch forward (eval mode), teacher forcing."""
    H = HIDDEN
    hs = h.reshape(1, H)
    logps, attns = [], []
    for t in range(tokens.shape[0]):
        emb = p["embedding"][tokens[t]].reshape(1, H)
        cat1 = jnp.concatenate([emb, hs], axis=1)
        attn_w = jax.nn.softmax(cat1 @ p["attn_w"].T + p["attn_b"], axis=1)
        attn_applied = attn_w @ encoder_outputs
        cat2 = jnp.concatenate([emb, attn_applied], axis=1)
        x = jax.nn.relu(cat2 @ p["comb_w"].T + p["comb_b"])
        gi = x @ p["w_ih"].T + p["b_ih"]
        gh = hs @ p["w_hh"].T + p["b_hh"]
        r = jax.nn.sigmoid(gi[:, :H] + gh[:, :H])
        z = jax.nn.sigmoid(gi[:, H:2 * H] + gh[:, H:2 * H])
        n = jnp.tanh(gi[:, 2 * H:] + r * gh[:, 2 * H:])
        hs = (1.0 - z) * n + z * hs
        logits = hs @ p["out_w"].T + p["out_b"]
        logps.append(jax.nn.log_softmax(logits, axis=1))
        attns.append(attn_w)
    return jnp.concatenate(logps, 0), jnp.concatenate(attns, 0), hs.reshape(1, 1, H)


if __name__ == "__main__":
    key = jax.random.PRNGKey(0)
    pkey, ekey = jax.random.split(key)
    params = init_params(pkey)

    tokens = jnp.array([5, 17, 3, 42, 0, 9], dtype=jnp.int32)      # T=6 decode steps
    h0 = jnp.zeros((1, 1, HIDDEN), dtype=jnp.float32)              # zero_state()
    enc = jax.random.normal(ekey, (MAXLEN, HIDDEN), jnp.float32)   # encoder outputs

    fwd = jax.jit(decoder_forward)
    logp, attn_w, h_new = fwd(tokens, h0, enc, params)
    jax.block_until_ready((logp, attn_w, h_new))

    r_logp, r_aw, r_h = decoder_reference(tokens, h0, enc, params)
    T = tokens.shape[0]
    assert logp.shape == (T, VOCAB) and attn_w.shape == (T, MAXLEN) and h_new.shape == (1, 1, HIDDEN)
    # Tolerance relaxed vs 1e-5: approx EUP reciprocal in the softmax plus the
    # attn_w @ (enc @ W_ca) reassociation perturb f32 results slightly, and the
    # differences compound over the 6 recurrent steps.
    np.testing.assert_allclose(np.asarray(logp), np.asarray(r_logp), atol=1e-3, rtol=1e-3)
    np.testing.assert_allclose(np.asarray(attn_w), np.asarray(r_aw), atol=1e-3, rtol=1e-3)
    np.testing.assert_allclose(np.asarray(h_new), np.asarray(r_h), atol=1e-3, rtol=1e-3)

    print("KERNEL_OK")
</pallas_src>

<mosaic_0001>
module attributes {stable_mosaic.version = 11 : i64} {
  func.func @_decoder_kernel(%arg0: i32, %arg1: memref<6x256xf32, #tpu.memory_space<vmem>>, %arg2: memref<1x128xf32, #tpu.memory_space<vmem>>, %arg3: memref<128x128xf32, #tpu.memory_space<vmem>>, %arg4: memref<128x512xf32, #tpu.memory_space<vmem>>, %arg5: memref<128x384xf32, #tpu.memory_space<vmem>>, %arg6: memref<128x128xf32, #tpu.memory_space<vmem>>, %arg7: memref<1x896xf32, #tpu.memory_space<vmem>>, %arg8: memref<6x128xf32, #tpu.memory_space<vmem>>, %arg9: memref<6x128xf32, #tpu.memory_space<vmem>>, %arg10: memref<1x128xf32, #tpu.memory_space<vmem>>) attributes {dimension_semantics = [#tpu.dimension_semantics<arbitrary>], iteration_bounds = array<i64: 1>, scalar_prefetch = 0 : i64, scratch_operands = 0 : i64, tpu.core_type = #tpu.core_type<tc>, window_params = [{pipeline_mode = #tpu.pipeline_mode<synchronous>, transform_indices = @transform_0, window_bounds = array<i64: 6, 256>}, {pipeline_mode = #tpu.pipeline_mode<synchronous>, transform_indices = @transform_1, window_bounds = array<i64: 1, 128>}, {pipeline_mode = #tpu.pipeline_mode<synchronous>, transform_indices = @transform_2, window_bounds = array<i64: 128, 128>}, {pipeline_mode = #tpu.pipeline_mode<synchronous>, transform_indices = @transform_3, window_bounds = array<i64: 128, 512>}, {pipeline_mode = #tpu.pipeline_mode<synchronous>, transform_indices = @transform_4, window_bounds = array<i64: 128, 384>}, {pipeline_mode = #tpu.pipeline_mode<synchronous>, transform_indices = @transform_5, window_bounds = array<i64: 128, 128>}, {pipeline_mode = #tpu.pipeline_mode<synchronous>, transform_indices = @transform_6, window_bounds = array<i64: 1, 896>}, {pipeline_mode = #tpu.pipeline_mode<synchronous>, transform_indices = @transform_7, window_bounds = array<i64: 6, 128>}, {pipeline_mode = #tpu.pipeline_mode<synchronous>, transform_indices = @transform_8, window_bounds = array<i64: 6, 128>}, {pipeline_mode = #tpu.pipeline_mode<synchronous>, transform_indices = @transform_9, window_bounds = array<i64: 1, 128>}]} {
    %c0 = arith.constant 0 : index
    %c0_0 = arith.constant 0 : index
    %0 = vector.load %arg1[%c0, %c0_0] : memref<6x256xf32, #tpu.memory_space<vmem>>, vector<6x256xf32>
    %c0_1 = arith.constant 0 : index
    %c0_2 = arith.constant 0 : index
    %1 = vector.load %arg3[%c0_1, %c0_2] : memref<128x128xf32, #tpu.memory_space<vmem>>, vector<128x128xf32>
    %c0_3 = arith.constant 0 : index
    %c0_4 = arith.constant 0 : index
    %2 = vector.load %arg4[%c0_3, %c0_4] : memref<128x512xf32, #tpu.memory_space<vmem>>, vector<128x512xf32>
    %c0_5 = arith.constant 0 : index
    %c0_6 = arith.constant 0 : index
    %3 = vector.load %arg5[%c0_5, %c0_6] : memref<128x384xf32, #tpu.memory_space<vmem>>, vector<128x384xf32>
    %c0_7 = arith.constant 0 : index
    %c0_8 = arith.constant 0 : index
    %4 = vector.load %arg6[%c0_7, %c0_8] : memref<128x128xf32, #tpu.memory_space<vmem>>, vector<128x128xf32>
    %c0_9 = arith.constant 0 : index
    %c0_10 = arith.constant 0 : index
    %5 = vector.load %arg7[%c0_9, %c0_10] : memref<1x896xf32, #tpu.memory_space<vmem>>, vector<1x896xf32>
    %6 = vector.extract_strided_slice %5 {offsets = [0, 0], sizes = [1, 128], strides = [1, 1]} : vector<1x896xf32> to vector<1x128xf32>
    %7 = vector.extract_strided_slice %5 {offsets = [0, 128], sizes = [1, 128], strides = [1, 1]} : vector<1x896xf32> to vector<1x128xf32>
    %8 = vector.extract_strided_slice %5 {offsets = [0, 256], sizes = [1, 128], strides = [1, 1]} : vector<1x896xf32> to vector<1x128xf32>
    %9 = vector.extract_strided_slice %5 {offsets = [0, 384], sizes = [1, 128], strides = [1, 1]} : vector<1x896xf32> to vector<1x128xf32>
    %10 = vector.extract_strided_slice %5 {offsets = [0, 512], sizes = [1, 128], strides = [1, 1]} : vector<1x896xf32> to vector<1x128xf32>
    %11 = vector.extract_strided_slice %5 {offsets = [0, 640], sizes = [1, 128], strides = [1, 1]} : vector<1x896xf32> to vector<1x128xf32>
    %12 = vector.extract_strided_slice %5 {offsets = [0, 768], sizes = [1, 128], strides = [1, 1]} : vector<1x896xf32> to vector<1x128xf32>
    %c0_11 = arith.constant 0 : index
    %c0_12 = arith.constant 0 : index
    %13 = vector.load %arg2[%c0_11, %c0_12] : memref<1x128xf32, #tpu.memory_space<vmem>>, vector<1x128xf32>
    %14 = vector.extract_strided_slice %0 {offsets = [0, 0], sizes = [1, 256], strides = [1, 1]} : vector<6x256xf32> to vector<1x256xf32>
    %cst = arith.constant dense<0.000000e+00> : vector<1x512xf32>
    %15 = tpu.matmul %13, %2, %cst {dimension_numbers = #tpu.dot_dimension_numbers<[1], [0], [0], [1], [0, 0, 1, 1], [], []>} : vector<1x128xf32>, vector<128x512xf32>, vector<1x512xf32> -> vector<1x512xf32>
    %16 = vector.extract_strided_slice %14 {offsets = [0, 0], sizes = [1, 128], strides = [1, 1]} : vector<1x256xf32> to vector<1x128xf32>
    %17 = vector.extract_strided_slice %15 {offsets = [0, 0], sizes = [1, 128], strides = [1, 1]} : vector<1x512xf32> to vector<1x128xf32>
    %18 = arith.addf %16, %17 : vector<1x128xf32>
    %19 = arith.addf %18, %6 : vector<1x128xf32>
    %cst_13 = arith.constant dense<0xFF800000> : vector<1xf32>
    %20 = vector.multi_reduction <maximumf>, %19, %cst_13 [1] : vector<1x128xf32> to vector<1xf32>
    %21 = vector.shape_cast %20 : vector<1xf32> to vector<1x1xf32>
    %22 = vector.broadcast %21 : vector<1x1xf32> to vector<1x128xf32>
    %23 = arith.subf %19, %22 : vector<1x128xf32>
    %24 = math.exp %23 : vector<1x128xf32>
    %cst_14 = arith.constant dense<0.000000e+00> : vector<1xf32>
    %25 = vector.multi_reduction <add>, %24, %cst_14 [1] : vector<1x128xf32> to vector<1xf32>
    %26 = vector.shape_cast %25 : vector<1xf32> to vector<1x1xf32>
    %27 = tpu.reciprocal %26 {approx = true} : vector<1x1xf32> -> vector<1x1xf32>
    %28 = vector.broadcast %27 : vector<1x1xf32> to vector<1x128xf32>
    %29 = arith.mulf %24, %28 : vector<1x128xf32>
    %30 = vector.extract_strided_slice %14 {offsets = [0, 128], sizes = [1, 128], strides = [1, 1]} : vector<1x256xf32> to vector<1x128xf32>
    %cst_15 = arith.constant dense<0.000000e+00> : vector<1x128xf32>
    %31 = tpu.matmul %29, %1, %cst_15 {dimension_numbers = #tpu.dot_dimension_numbers<[1], [0], [0], [1], [0, 0, 1, 1], [], []>} : vector<1x128xf32>, vector<128x128xf32>, vector<1x128xf32> -> vector<1x128xf32>
    %32 = arith.addf %30, %31 : vector<1x128xf32>
    %33 = arith.addf %32, %7 : vector<1x128xf32>
    %cst_16 = arith.constant 0.000000e+00 : f32
    %34 = vector.broadcast %cst_16 : f32 to vector<1x128xf32>
    %35 = arith.maximumf %33, %34 : vector<1x128xf32>
    %cst_17 = arith.constant dense<0.000000e+00> : vector<1x384xf32>
    %36 = tpu.matmul %35, %3, %cst_17 {dimension_numbers = #tpu.dot_dimension_numbers<[1], [0], [0], [1], [0, 0, 1, 1], [], []>} : vector<1x128xf32>, vector<128x384xf32>, vector<1x384xf32> -> vector<1x384xf32>
    %37 = vector.extract_strided_slice %36 {offsets = [0, 0], sizes = [1, 128], strides = [1, 1]} : vector<1x384xf32> to vector<1x128xf32>
    %38 = vector.extract_strided_slice %15 {offsets = [0, 128], sizes = [1, 128], strides = [1, 1]} : vector<1x512xf32> to vector<1x128xf32>
    %39 = arith.addf %37, %38 : vector<1x128xf32>
    %40 = arith.addf %39, %8 : vector<1x128xf32>
    %41 = arith.negf %40 : vector<1x128xf32>
    %42 = math.exp %41 : vector<1x128xf32>
    %cst_18 = arith.constant 1.000000e+00 : f32
    %43 = vector.broadcast %cst_18 : f32 to vector<1x128xf32>
    %44 = arith.addf %43, %42 : vector<1x128xf32>
    %45 = arith.divf %43, %44 : vector<1x128xf32>
    %46 = vector.extract_strided_slice %36 {offsets = [0, 128], sizes = [1, 128], strides = [1, 1]} : vector<1x384xf32> to vector<1x128xf32>
    %47 = vector.extract_strided_slice %15 {offsets = [0, 256], sizes = [1, 128], strides = [1, 1]} : vector<1x512xf32> to vector<1x128xf32>
    %48 = arith.addf %46, %47 : vector<1x128xf32>
    %49 = arith.addf %48, %9 : vector<1x128xf32>
    %50 = arith.negf %49 : vector<1x128xf32>
    %51 = math.exp %50 : vector<1x128xf32>
    %cst_19 = arith.constant 1.000000e+00 : f32
    %52 = vector.broadcast %cst_19 : f32 to vector<1x128xf32>
    %53 = arith.addf %52, %51 : vector<1x128xf32>
    %54 = arith.divf %52, %53 : vector<1x128xf32>
    %55 = vector.extract_strided_slice %36 {offsets = [0, 256], sizes = [1, 128], strides = [1, 1]} : vector<1x384xf32> to vector<1x128xf32>
    %56 = arith.addf %55, %10 : vector<1x128xf32>
    %57 = vector.extract_strided_slice %15 {offsets = [0, 384], sizes = [1, 128], strides = [1, 1]} : vector<1x512xf32> to vector<1x128xf32>
    %58 = arith.addf %57, %11 : vector<1x128xf32>
    %59 = arith.mulf %45, %58 : vector<1x128xf32>
    %60 = arith.addf %56, %59 : vector<1x128xf32>
    %61 = math.tanh %60 : vector<1x128xf32>
    %cst_20 = arith.constant 1.000000e+00 : f32
    %62 = vector.broadcast %cst_20 : f32 to vector<1x128xf32>
    %63 = arith.subf %62, %54 : vector<1x128xf32>
    %64 = arith.mulf %63, %61 : vector<1x128xf32>
    %65 = arith.mulf %54, %13 : vector<1x128xf32>
    %66 = arith.addf %64, %65 : vector<1x128xf32>
    %cst_21 = arith.constant dense<0.000000e+00> : vector<1x128xf32>
    %67 = tpu.matmul %66, %4, %cst_21 {dimension_numbers = #tpu.dot_dimension_numbers<[1], [0], [0], [1], [0, 0, 1, 1], [], []>} : vector<1x128xf32>, vector<128x128xf32>, vector<1x128xf32> -> vector<1x128xf32>
    %68 = arith.addf %67, %12 : vector<1x128xf32>
    %cst_22 = arith.constant dense<0xFF800000> : vector<1xf32>
    %69 = vector.multi_reduction <maximumf>, %68, %cst_22 [1] : vector<1x128xf32> to vector<1xf32>
    %70 = vector.shape_cast %69 : vector<1xf32> to vector<1x1xf32>
    %71 = vector.broadcast %70 : vector<1x1xf32> to vector<1x128xf32>
    %72 = arith.subf %68, %71 : vector<1x128xf32>
    %73 = math.exp %72 : vector<1x128xf32>
    %cst_23 = arith.constant dense<0.000000e+00> : vector<1xf32>
    %74 = vector.multi_reduction <add>, %73, %cst_23 [1] : vector<1x128xf32> to vector<1xf32>
    %75 = vector.shape_cast %74 : vector<1xf32> to vector<1x1xf32>
    %76 = math.log %75 : vector<1x1xf32>
    %77 = arith.addf %70, %76 : vector<1x1xf32>
    %78 = vector.broadcast %77 : vector<1x1xf32> to vector<1x128xf32>
    %79 = arith.subf %68, %78 : vector<1x128xf32>
    %80 = vector.extract_strided_slice %0 {offsets = [1, 0], sizes = [1, 256], strides = [1, 1]} : vector<6x256xf32> to vector<1x256xf32>
    %cst_24 = arith.constant dense<0.000000e+00> : vector<1x512xf32>
    %81 = tpu.matmul %66, %2, %cst_24 {dimension_numbers = #tpu.dot_dimension_numbers<[1], [0], [0], [1], [0, 0, 1, 1], [], []>} : vector<1x128xf32>, vector<128x512xf32>, vector<1x512xf32> -> vector<1x512xf32>
    %82 = vector.extract_strided_slice %80 {offsets = [0, 0], sizes = [1, 128], strides = [1, 1]} : vector<1x256xf32> to vector<1x128xf32>
    %83 = vector.extract_strided_slice %81 {offsets = [0, 0], sizes = [1, 128], strides = [1, 1]} : vector<1x512xf32> to vector<1x128xf32>
    %84 = arith.addf %82, %83 : vector<1x128xf32>
    %85 = arith.addf %84, %6 : vector<1x128xf32>
    %cst_25 = arith.constant dense<0xFF800000> : vector<1xf32>
    %86 = vector.multi_reduction <maximumf>, %85, %cst_25 [1] : vector<1x128xf32> to vector<1xf32>
    %87 = vector.shape_cast %86 : vector<1xf32> to vector<1x1xf32>
    %88 = vector.broadcast %87 : vector<1x1xf32> to vector<1x128xf32>
    %89 = arith.subf %85, %88 : vector<1x128xf32>
    %90 = math.exp %89 : vector<1x128xf32>
    %cst_26 = arith.constant dense<0.000000e+00> : vector<1xf32>
    %91 = vector.multi_reduction <add>, %90, %cst_26 [1] : vector<1x128xf32> to vector<1xf32>
    %92 = vector.shape_cast %91 : vector<1xf32> to vector<1x1xf32>
    %93 = tpu.reciprocal %92 {approx = true} : vector<1x1xf32> -> vector<1x1xf32>
    %94 = vector.broadcast %93 : vector<1x1xf32> to vector<1x128xf32>
    %95 = arith.mulf %90, %94 : vector<1x128xf32>
    %96 = vector.extract_strided_slice %80 {offsets = [0, 128], sizes = [1, 128], strides = [1, 1]} : vector<1x256xf32> to vector<1x128xf32>
    %cst_27 = arith.constant dense<0.000000e+00> : vector<1x128xf32>
    %97 = tpu.matmul %95, %1, %cst_27 {dimension_numbers = #tpu.dot_dimension_numbers<[1], [0], [0], [1], [0, 0, 1, 1], [], []>} : vector<1x128xf32>, vector<128x128xf32>, vector<1x128xf32> -> vector<1x128xf32>
    %98 = arith.addf %96, %97 : vector<1x128xf32>
    %99 = arith.addf %98, %7 : vector<1x128xf32>
    %cst_28 = arith.constant 0.000000e+00 : f32
    %100 = vector.broadcast %cst_28 : f32 to vector<1x128xf32>
    %101 = arith.maximumf %99, %100 : vector<1x128xf32>
    %cst_29 = arith.constant dense<0.000000e+00> : vector<1x384xf32>
    %102 = tpu.matmul %101, %3, %cst_29 {dimension_numbers = #tpu.dot_dimension_numbers<[1], [0], [0], [1], [0, 0, 1, 1], [], []>} : vector<1x128xf32>, vector<128x384xf32>, vector<1x384xf32> -> vector<1x384xf32>
    %103 = vector.extract_strided_slice %102 {offsets = [0, 0], sizes = [1, 128], strides = [1, 1]} : vector<1x384xf32> to vector<1x128xf32>
    %104 = vector.extract_strided_slice %81 {offsets = [0, 128], sizes = [1, 128], strides = [1, 1]} : vector<1x512xf32> to vector<1x128xf32>
    %105 = arith.addf %103, %104 : vector<1x128xf32>
    %106 = arith.addf %105, %8 : vector<1x128xf32>
    %107 = arith.negf %106 : vector<1x128xf32>
    %108 = math.exp %107 : vector<1x128xf32>
    %cst_30 = arith.constant 1.000000e+00 : f32
    %109 = vector.broadcast %cst_30 : f32 to vector<1x128xf32>
    %110 = arith.addf %109, %108 : vector<1x128xf32>
    %111 = arith.divf %109, %110 : vector<1x128xf32>
    %112 = vector.extract_strided_slice %102 {offsets = [0, 128], sizes = [1, 128], strides = [1, 1]} : vector<1x384xf32> to vector<1x128xf32>
    %113 = vector.extract_strided_slice %81 {offsets = [0, 256], sizes = [1, 128], strides = [1, 1]} : vector<1x512xf32> to vector<1x128xf32>
    %114 = arith.addf %112, %113 : vector<1x128xf32>
    %115 = arith.addf %114, %9 : vector<1x128xf32>
    %116 = arith.negf %115 : vector<1x128xf32>
    %117 = math.exp %116 : vector<1x128xf32>
    %cst_31 = arith.constant 1.000000e+00 : f32
    %118 = vector.broadcast %cst_31 : f32 to vector<1x128xf32>
    %119 = arith.addf %118, %117 : vector<1x128xf32>
    %120 = arith.divf %118, %119 : vector<1x128xf32>
    %121 = vector.extract_strided_slice %102 {offsets = [0, 256], sizes = [1, 128], strides = [1, 1]} : vector<1x384xf32> to vector<1x128xf32>
    %122 = arith.addf %121, %10 : vector<1x128xf32>
    %123 = vector.extract_strided_slice %81 {offsets = [0, 384], sizes = [1, 128], strides = [1, 1]} : vector<1x512xf32> to vector<1x128xf32>
    %124 = arith.addf %123, %11 : vector<1x128xf32>
    %125 = arith.mulf %111, %124 : vector<1x128xf32>
    %126 = arith.addf %122, %125 : vector<1x128xf32>
    %127 = math.tanh %126 : vector<1x128xf32>
    %cst_32 = arith.constant 1.000000e+00 : f32
    %128 = vector.broadcast %cst_32 : f32 to vector<1x128xf32>
    %129 = arith.subf %128, %120 : vector<1x128xf32>
    %130 = arith.mulf %129, %127 : vector<1x128xf32>
    %131 = arith.mulf %120, %66 : vector<1x128xf32>
    %132 = arith.addf %130, %131 : vector<1x128xf32>
    %cst_33 = arith.constant dense<0.000000e+00> : vector<1x128xf32>
    %133 = tpu.matmul %132, %4, %cst_33 {dimension_numbers = #tpu.dot_dimension_numbers<[1], [0], [0], [1], [0, 0, 1, 1], [], []>} : vector<1x128xf32>, vector<128x128xf32>, vector<1x128xf32> -> vector<1x128xf32>
    %134 = arith.addf %133, %12 : vector<1x128xf32>
    %cst_34 = arith.constant dense<0xFF800000> : vector<1xf32>
    %135 = vector.multi_reduction <maximumf>, %134, %cst_34 [1] : vector<1x128xf32> to vector<1xf32>
    %136 = vector.shape_cast %135 : vector<1xf32> to vector<1x1xf32>
    %137 = vector.broadcast %136 : vector<1x1xf32> to vector<1x128xf32>
    %138 = arith.subf %134, %137 : vector<1x128xf32>
    %139 = math.exp %138 : vector<1x128xf32>
    %cst_35 = arith.constant dense<0.000000e+00> : vector<1xf32>
    %140 = vector.multi_reduction <add>, %139, %cst_35 [1] : vector<1x128xf32> to vector<1xf32>
    %141 = vector.shape_cast %140 : vector<1xf32> to vector<1x1xf32>
    %142 = math.log %141 : vector<1x1xf32>
    %143 = arith.addf %136, %142 : vector<1x1xf32>
    %144 = vector.broadcast %143 : vector<1x1xf32> to vector<1x128xf32>
    %145 = arith.subf %134, %144 : vector<1x128xf32>
    %146 = vector.extract_strided_slice %0 {offsets = [2, 0], sizes = [1, 256], strides = [1, 1]} : vector<6x256xf32> to vector<1x256xf32>
    %cst_36 = arith.constant dense<0.000000e+00> : vector<1x512xf32>
    %147 = tpu.matmul %132, %2, %cst_36 {dimension_numbers = #tpu.dot_dimension_numbers<[1], [0], [0], [1], [0, 0, 1, 1], [], []>} : vector<1x128xf32>, vector<128x512xf32>, vector<1x512xf32> -> vector<1x512xf32>
    %148 = vector.extract_strided_slice %146 {offsets = [0, 0], sizes = [1, 128], strides = [1, 1]} : vector<1x256xf32> to vector<1x128xf32>
    %149 = vector.extract_strided_slice %147 {offsets = [0, 0], sizes = [1, 128], strides = [1, 1]} : vector<1x512xf32> to vector<1x128xf32>
    %150 = arith.addf %148, %149 : vector<1x128xf32>
    %151 = arith.addf %150, %6 : vector<1x128xf32>
    %cst_37 = arith.constant dense<0xFF800000> : vector<1xf32>
    %152 = vector.multi_reduction <maximumf>, %151, %cst_37 [1] : vector<1x128xf32> to vector<1xf32>
    %153 = vector.shape_cast %152 : vector<1xf32> to vector<1x1xf32>
    %154 = vector.broadcast %153 : vector<1x1xf32> to vector<1x128xf32>
    %155 = arith.subf %151, %154 : vector<1x128xf32>
    %156 = math.exp %155 : vector<1x128xf32>
    %cst_38 = arith.constant dense<0.000000e+00> : vector<1xf32>
    %157 = vector.multi_reduction <add>, %156, %cst_38 [1] : vector<1x128xf32> to vector<1xf32>
    %158 = vector.shape_cast %157 : vector<1xf32> to vector<1x1xf32>
    %159 = tpu.reciprocal %158 {approx = true} : vector<1x1xf32> -> vector<1x1xf32>
    %160 = vector.broadcast %159 : vector<1x1xf32> to vector<1x128xf32>
    %161 = arith.mulf %156, %160 : vector<1x128xf32>
    %162 = vector.extract_strided_slice %146 {offsets = [0, 128], sizes = [1, 128], strides = [1, 1]} : vector<1x256xf32> to vector<1x128xf32>
    %cst_39 = arith.constant dense<0.000000e+00> : vector<1x128xf32>
    %163 = tpu.matmul %161, %1, %cst_39 {dimension_numbers = #tpu.dot_dimension_numbers<[1], [0], [0], [1], [0, 0, 1, 1], [], []>} : vector<1x128xf32>, vector<128x128xf32>, vector<1x128xf32> -> vector<1x128xf32>
    %164 = arith.addf %162, %163 : vector<1x128xf32>
    %165 = arith.addf %164, %7 : vector<1x128xf32>
    %cst_40 = arith.constant 0.000000e+00 : f32
    %166 = vector.broadcast %cst_40 : f32 to vector<1x128xf32>
    %167 = arith.maximumf %165, %166 : vector<1x128xf32>
    %cst_41 = arith.constant dense<0.000000e+00> : vector<1x384xf32>
    %168 = tpu.matmul %167, %3, %cst_41 {dimension_numbers = #tpu.dot_dimension_numbers<[1], [0], [0], [1], [0, 0, 1, 1], [], []>} : vector<1x128xf32>, vector<128x384xf32>, vector<1x384xf32> -> vector<1x384xf32>
    %169 = vector.extract_strided_slice %168 {offsets = [0, 0], sizes = [1, 128], strides = [1, 1]} : vector<1x384xf32> to vector<1x128xf32>
    %170 = vector.extract_strided_slice %147 {offsets = [0, 128], sizes = [1, 128], strides = [1, 1]} : vector<1x512xf32> to vector<1x128xf32>
    %171 = arith.addf %169, %170 : vector<1x128xf32>
    %172 = arith.addf %171, %8 : vector<1x128xf32>
    %173 = arith.negf %172 : vector<1x128xf32>
    %174 = math.exp %173 : vector<1x128xf32>
    %cst_42 = arith.constant 1.000000e+00 : f32
    %175 = vector.broadcast %cst_42 : f32 to vector<1x128xf32>
    %176 = arith.addf %175, %174 : vector<1x128xf32>
    %177 = arith.divf %175, %176 : vector<1x128xf32>
    %178 = vector.extract_strided_slice %168 {offsets = [0, 128], sizes = [1, 128], strides = [1, 1]} : vector<1x384xf32> to vector<1x128xf32>
    %179 = vector.extract_strided_slice %147 {offsets = [0, 256], sizes = [1, 128], strides = [1, 1]} : vector<1x512xf32> to vector<1x128xf32>
    %180 = arith.addf %178, %179 : vector<1x128xf32>
    %181 = arith.addf %180, %9 : vector<1x128xf32>
    %182 = arith.negf %181 : vector<1x128xf32>
    %183 = math.exp %182 : vector<1x128xf32>
    %cst_43 = arith.constant 1.000000e+00 : f32
    %184 = vector.broadcast %cst_43 : f32 to vector<1x128xf32>
    %185 = arith.addf %184, %183 : vector<1x128xf32>
    %186 = arith.divf %184, %185 : vector<1x128xf32>
    %187 = vector.extract_strided_slice %168 {offsets = [0, 256], sizes = [1, 128], strides = [1, 1]} : vector<1x384xf32> to vector<1x128xf32>
    %188 = arith.addf %187, %10 : vector<1x128xf32>
    %189 = vector.extract_strided_slice %147 {offsets = [0, 384], sizes = [1, 128], strides = [1, 1]} : vector<1x512xf32> to vector<1x128xf32>
    %190 = arith.addf %189, %11 : vector<1x128xf32>
    %191 = arith.mulf %177, %190 : vector<1x128xf32>
    %192 = arith.addf %188, %191 : vector<1x128xf32>
    %193 = math.tanh %192 : vector<1x128xf32>
    %cst_44 = arith.constant 1.000000e+00 : f32
    %194 = vector.broadcast %cst_44 : f32 to vector<1x128xf32>
    %195 = arith.subf %194, %186 : vector<1x128xf32>
    %196 = arith.mulf %195, %193 : vector<1x128xf32>
    %197 = arith.mulf %186, %132 : vector<1x128xf32>
    %198 = arith.addf %196, %197 : vector<1x128xf32>
    %cst_45 = arith.constant dense<0.000000e+00> : vector<1x128xf32>
    %199 = tpu.matmul %198, %4, %cst_45 {dimension_numbers = #tpu.dot_dimension_numbers<[1], [0], [0], [1], [0, 0, 1, 1], [], []>} : vector<1x128xf32>, vector<128x128xf32>, vector<1x128xf32> -> vector<1x128xf32>
    %200 = arith.addf %199, %12 : vector<1x128xf32>
    %cst_46 = arith.constant dense<0xFF800000> : vector<1xf32>
    %201 = vector.multi_reduction <maximumf>, %200, %cst_46 [1] : vector<1x128xf32> to vector<1xf32>
    %202 = vector.shape_cast %201 : vector<1xf32> to vector<1x1xf32>
    %203 = vector.broadcast %202 : vector<1x1xf32> to vector<1x128xf32>
    %204 = arith.subf %200, %203 : vector<1x128xf32>
    %205 = math.exp %204 : vector<1x128xf32>
    %cst_47 = arith.constant dense<0.000000e+00> : vector<1xf32>
    %206 = vector.multi_reduction <add>, %205, %cst_47 [1] : vector<1x128xf32> to vector<1xf32>
    %207 = vector.shape_cast %206 : vector<1xf32> to vector<1x1xf32>
    %208 = math.log %207 : vector<1x1xf32>
    %209 = arith.addf %202, %208 : vector<1x1xf32>
    %210 = vector.broadcast %209 : vector<1x1xf32> to vector<1x128xf32>
    %211 = arith.subf %200, %210 : vector<1x128xf32>
    %212 = vector.extract_strided_slice %0 {offsets = [3, 0], sizes = [1, 256], strides = [1, 1]} : vector<6x256xf32> to vector<1x256xf32>
    %cst_48 = arith.constant dense<0.000000e+00> : vector<1x512xf32>
    %213 = tpu.matmul %198, %2, %cst_48 {dimension_numbers = #tpu.dot_dimension_numbers<[1], [0], [0], [1], [0, 0, 1, 1], [], []>} : vector<1x128xf32>, vector<128x512xf32>, vector<1x512xf32> -> vector<1x512xf32>
    %214 = vector.extract_strided_slice %212 {offsets = [0, 0], sizes = [1, 128], strides = [1, 1]} : vector<1x256xf32> to vector<1x128xf32>
    %215 = vector.extract_strided_slice %213 {offsets = [0, 0], sizes = [1, 128], strides = [1, 1]} : vector<1x512xf32> to vector<1x128xf32>
    %216 = arith.addf %214, %215 : vector<1x128xf32>
    %217 = arith.addf %216, %6 : vector<1x128xf32>
    %cst_49 = arith.constant dense<0xFF800000> : vector<1xf32>
    %218 = vector.multi_reduction <maximumf>, %217, %cst_49 [1] : vector<1x128xf32> to vector<1xf32>
    %219 = vector.shape_cast %218 : vector<1xf32> to vector<1x1xf32>
    %220 = vector.broadcast %219 : vector<1x1xf32> to vector<1x128xf32>
    %221 = arith.subf %217, %220 : vector<1x128xf32>
    %222 = math.exp %221 : vector<1x128xf32>
    %cst_50 = arith.constant dense<0.000000e+00> : vector<1xf32>
    %223 = vector.multi_reduction <add>, %222, %cst_50 [1] : vector<1x128xf32> to vector<1xf32>
    %224 = vector.shape_cast %223 : vector<1xf32> to vector<1x1xf32>
    %225 = tpu.reciprocal %224 {approx = true} : vector<1x1xf32> -> vector<1x1xf32>
    %226 = vector.broadcast %225 : vector<1x1xf32> to vector<1x128xf32>
    %227 = arith.mulf %222, %226 : vector<1x128xf32>
    %228 = vector.extract_strided_slice %212 {offsets = [0, 128], sizes = [1, 128], strides = [1, 1]} : vector<1x256xf32> to vector<1x128xf32>
    %cst_51 = arith.constant dense<0.000000e+00> : vector<1x128xf32>
    %229 = tpu.matmul %227, %1, %cst_51 {dimension_numbers = #tpu.dot_dimension_numbers<[1], [0], [0], [1], [0, 0, 1, 1], [], []>} : vector<1x128xf32>, vector<128x128xf32>, vector<1x128xf32> -> vector<1x128xf32>
    %230 = arith.addf %228, %229 : vector<1x128xf32>
    %231 = arith.addf %230, %7 : vector<1x128xf32>
    %cst_52 = arith.constant 0.000000e+00 : f32
    %232 = vector.broadcast %cst_52 : f32 to vector<1x128xf32>
    %233 = arith.maximumf %231, %232 : vector<1x128xf32>
    %cst_53 = arith.constant dense<0.000000e+00> : vector<1x384xf32>
    %234 = tpu.matmul %233, %3, %cst_53 {dimension_numbers = #tpu.dot_dimension_numbers<[1], [0], [0], [1], [0, 0, 1, 1], [], []>} : vector<1x128xf32>, vector<128x384xf32>, vector<1x384xf32> -> vector<1x384xf32>
    %235 = vector.extract_strided_slice %234 {offsets = [0, 0], sizes = [1, 128], strides = [1, 1]} : vector<1x384xf32> to vector<1x128xf32>
    %236 = vector.extract_strided_slice %213 {offsets = [0, 128], sizes = [1, 128], strides = [1, 1]} : vector<1x512xf32> to vector<1x128xf32>
    %237 = arith.addf %235, %236 : vector<1x128xf32>
    %238 = arith.addf %237, %8 : vector<1x128xf32>
    %239 = arith.negf %238 : vector<1x128xf32>
    %240 = math.exp %239 : vector<1x128xf32>
    %cst_54 = arith.constant 1.000000e+00 : f32
    %241 = vector.broadcast %cst_54 : f32 to vector<1x128xf32>
    %242 = arith.addf %241, %240 : vector<1x128xf32>
    %243 = arith.divf %241, %242 : vector<1x128xf32>
    %244 = vector.extract_strided_slice %234 {offsets = [0, 128], sizes = [1, 128], strides = [1, 1]} : vector<1x384xf32> to vector<1x128xf32>
    %245 = vector.extract_strided_slice %213 {offsets = [0, 256], sizes = [1, 128], strides = [1, 1]} : vector<1x512xf32> to vector<1x128xf32>
    %246 = arith.addf %244, %245 : vector<1x128xf32>
    %247 = arith.addf %246, %9 : vector<1x128xf32>
    %248 = arith.negf %247 : vector<1x128xf32>
    %249 = math.exp %248 : vector<1x128xf32>
    %cst_55 = arith.constant 1.000000e+00 : f32
    %250 = vector.broadcast %cst_55 : f32 to vector<1x128xf32>
    %251 = arith.addf %250, %249 : vector<1x128xf32>
    %252 = arith.divf %250, %251 : vector<1x128xf32>
    %253 = vector.extract_strided_slice %234 {offsets = [0, 256], sizes = [1, 128], strides = [1, 1]} : vector<1x384xf32> to vector<1x128xf32>
    %254 = arith.addf %253, %10 : vector<1x128xf32>
    %255 = vector.extract_strided_slice %213 {offsets = [0, 384], sizes = [1, 128], strides = [1, 1]} : vector<1x512xf32> to vector<1x128xf32>
    %256 = arith.addf %255, %11 : vector<1x128xf32>
    %257 = arith.mulf %243, %256 : vector<1x128xf32>
    %258 = arith.addf %254, %257 : vector<1x128xf32>
    %259 = math.tanh %258 : vector<1x128xf32>
    %cst_56 = arith.constant 1.000000e+00 : f32
    %260 = vector.broadcast %cst_56 : f32 to vector<1x128xf32>
    %261 = arith.subf %260, %252 : vector<1x128xf32>
    %262 = arith.mulf %261, %259 : vector<1x128xf32>
    %263 = arith.mulf %252, %198 : vector<1x128xf32>
    %264 = arith.addf %262, %263 : vector<1x128xf32>
    %cst_57 = arith.constant dense<0.000000e+00> : vector<1x128xf32>
    %265 = tpu.matmul %264, %4, %cst_57 {dimension_numbers = #tpu.dot_dimension_numbers<[1], [0], [0], [1], [0, 0, 1, 1], [], []>} : vector<1x128xf32>, vector<128x128xf32>, vector<1x128xf32> -> vector<1x128xf32>
    %266 = arith.addf %265, %12 : vector<1x128xf32>
    %cst_58 = arith.constant dense<0xFF800000> : vector<1xf32>
    %267 = vector.multi_reduction <maximumf>, %266, %cst_58 [1] : vector<1x128xf32> to vector<1xf32>
    %268 = vector.shape_cast %267 : vector<1xf32> to vector<1x1xf32>
    %269 = vector.broadcast %268 : vector<1x1xf32> to vector<1x128xf32>
    %270 = arith.subf %266, %269 : vector<1x128xf32>
    %271 = math.exp %270 : vector<1x128xf32>
    %cst_59 = arith.constant dense<0.000000e+00> : vector<1xf32>
    %272 = vector.multi_reduction <add>, %271, %cst_59 [1] : vector<1x128xf32> to vector<1xf32>
    %273 = vector.shape_cast %272 : vector<1xf32> to vector<1x1xf32>
    %274 = math.log %273 : vector<1x1xf32>
    %275 = arith.addf %268, %274 : vector<1x1xf32>
    %276 = vector.broadcast %275 : vector<1x1xf32> to vector<1x128xf32>
    %277 = arith.subf %266, %276 : vector<1x128xf32>
    %278 = vector.extract_strided_slice %0 {offsets = [4, 0], sizes = [1, 256], strides = [1, 1]} : vector<6x256xf32> to vector<1x256xf32>
    %cst_60 = arith.constant dense<0.000000e+00> : vector<1x512xf32>
    %279 = tpu.matmul %264, %2, %cst_60 {dimension_numbers = #tpu.dot_dimension_numbers<[1], [0], [0], [1], [0, 0, 1, 1], [], []>} : vector<1x128xf32>, vector<128x512xf32>, vector<1x512xf32> -> vector<1x512xf32>
    %280 = vector.extract_strided_slice %278 {offsets = [0, 0], sizes = [1, 128], strides = [1, 1]} : vector<1x256xf32> to vector<1x128xf32>
    %281 = vector.extract_strided_slice %279 {offsets = [0, 0], sizes = [1, 128], strides = [1, 1]} : vector<1x512xf32> to vector<1x128xf32>
    %282 = arith.addf %280, %281 : vector<1x128xf32>
    %283 = arith.addf %282, %6 : vector<1x128xf32>
    %cst_61 = arith.constant dense<0xFF800000> : vector<1xf32>
    %284 = vector.multi_reduction <maximumf>, %283, %cst_61 [1] : vector<1x128xf32> to vector<1xf32>
    %285 = vector.shape_cast %284 : vector<1xf32> to vector<1x1xf32>
    %286 = vector.broadcast %285 : vector<1x1xf32> to vector<1x128xf32>
    %287 = arith.subf %283, %286 : vector<1x128xf32>
    %288 = math.exp %287 : vector<1x128xf32>
    %cst_62 = arith.constant dense<0.000000e+00> : vector<1xf32>
    %289 = vector.multi_reduction <add>, %288, %cst_62 [1] : vector<1x128xf32> to vector<1xf32>
    %290 = vector.shape_cast %289 : vector<1xf32> to vector<1x1xf32>
    %291 = tpu.reciprocal %290 {approx = true} : vector<1x1xf32> -> vector<1x1xf32>
    %292 = vector.broadcast %291 : vector<1x1xf32> to vector<1x128xf32>
    %293 = arith.mulf %288, %292 : vector<1x128xf32>
    %294 = vector.extract_strided_slice %278 {offsets = [0, 128], sizes = [1, 128], strides = [1, 1]} : vector<1x256xf32> to vector<1x128xf32>
    %cst_63 = arith.constant dense<0.000000e+00> : vector<1x128xf32>
    %295 = tpu.matmul %293, %1, %cst_63 {dimension_numbers = #tpu.dot_dimension_numbers<[1], [0], [0], [1], [0, 0, 1, 1], [], []>} : vector<1x128xf32>, vector<128x128xf32>, vector<1x128xf32> -> vector<1x128xf32>
    %296 = arith.addf %294, %295 : vector<1x128xf32>
    %297 = arith.addf %296, %7 : vector<1x128xf32>
    %cst_64 = arith.constant 0.000000e+00 : f32
    %298 = vector.broadcast %cst_64 : f32 to vector<1x128xf32>
    %299 = arith.maximumf %297, %298 : vector<1x128xf32>
    %cst_65 = arith.constant dense<0.000000e+00> : vector<1x384xf32>
    %300 = tpu.matmul %299, %3, %cst_65 {dimension_numbers = #tpu.dot_dimension_numbers<[1], [0], [0], [1], [0, 0, 1, 1], [], []>} : vector<1x128xf32>, vector<128x384xf32>, vector<1x384xf32> -> vector<1x384xf32>
    %301 = vector.extract_strided_slice %300 {offsets = [0, 0], sizes = [1, 128], strides = [1, 1]} : vector<1x384xf32> to vector<1x128xf32>
    %302 = vector.extract_strided_slice %279 {offsets = [0, 128], sizes = [1, 128], strides = [1, 1]} : vector<1x512xf32> to vector<1x128xf32>
    %303 = arith.addf %301, %302 : vector<1x128xf32>
    %304 = arith.addf %303, %8 : vector<1x128xf32>
    %305 = arith.negf %304 : vector<1x128xf32>
    %306 = math.exp %305 : vector<1x128xf32>
    %cst_66 = arith.constant 1.000000e+00 : f32
    %307 = vector.broadcast %cst_66 : f32 to vector<1x128xf32>
    %308 = arith.addf %307, %306 : vector<1x128xf32>
    %309 = arith.divf %307, %308 : vector<1x128xf32>
    %310 = vector.extract_strided_slice %300 {offsets = [0, 128], sizes = [1, 128], strides = [1, 1]} : vector<1x384xf32> to vector<1x128xf32>
    %311 = vector.extract_strided_slice %279 {offsets = [0, 256], sizes = [1, 128], strides = [1, 1]} : vector<1x512xf32> to vector<1x128xf32>
    %312 = arith.addf %310, %311 : vector<1x128xf32>
    %313 = arith.addf %312, %9 : vector<1x128xf32>
    %314 = arith.negf %313 : vector<1x128xf32>
    %315 = math.exp %314 : vector<1x128xf32>
    %cst_67 = arith.constant 1.000000e+00 : f32
    %316 = vector.broadcast %cst_67 : f32 to vector<1x128xf32>
    %317 = arith.addf %316, %315 : vector<1x128xf32>
    %318 = arith.divf %316, %317 : vector<1x128xf32>
    %319 = vector.extract_strided_slice %300 {offsets = [0, 256], sizes = [1, 128], strides = [1, 1]} : vector<1x384xf32> to vector<1x128xf32>
    %320 = arith.addf %319, %10 : vector<1x128xf32>
    %321 = vector.extract_strided_slice %279 {offsets = [0, 384], sizes = [1, 128], strides = [1, 1]} : vector<1x512xf32> to vector<1x128xf32>
    %322 = arith.addf %321, %11 : vector<1x128xf32>
    %323 = arith.mulf %309, %322 : vector<1x128xf32>
    %324 = arith.addf %320, %323 : vector<1x128xf32>
    %325 = math.tanh %324 : vector<1x128xf32>
    %cst_68 = arith.constant 1.000000e+00 : f32
    %326 = vector.broadcast %cst_68 : f32 to vector<1x128xf32>
    %327 = arith.subf %326, %318 : vector<1x128xf32>
    %328 = arith.mulf %327, %325 : vector<1x128xf32>
    %329 = arith.mulf %318, %264 : vector<1x128xf32>
    %330 = arith.addf %328, %329 : vector<1x128xf32>
    %cst_69 = arith.constant dense<0.000000e+00> : vector<1x128xf32>
    %331 = tpu.matmul %330, %4, %cst_69 {dimension_numbers = #tpu.dot_dimension_numbers<[1], [0], [0], [1], [0, 0, 1, 1], [], []>} : vector<1x128xf32>, vector<128x128xf32>, vector<1x128xf32> -> vector<1x128xf32>
    %332 = arith.addf %331, %12 : vector<1x128xf32>
    %cst_70 = arith.constant dense<0xFF800000> : vector<1xf32>
    %333 = vector.multi_reduction <maximumf>, %332, %cst_70 [1] : vector<1x128xf32> to vector<1xf32>
    %334 = vector.shape_cast %333 : vector<1xf32> to vector<1x1xf32>
    %335 = vector.broadcast %334 : vector<1x1xf32> to vector<1x128xf32>
    %336 = arith.subf %332, %335 : vector<1x128xf32>
    %337 = math.exp %336 : vector<1x128xf32>
    %cst_71 = arith.constant dense<0.000000e+00> : vector<1xf32>
    %338 = vector.multi_reduction <add>, %337, %cst_71 [1] : vector<1x128xf32> to vector<1xf32>
    %339 = vector.shape_cast %338 : vector<1xf32> to vector<1x1xf32>
    %340 = math.log %339 : vector<1x1xf32>
    %341 = arith.addf %334, %340 : vector<1x1xf32>
    %342 = vector.broadcast %341 : vector<1x1xf32> to vector<1x128xf32>
    %343 = arith.subf %332, %342 : vector<1x128xf32>
    %344 = vector.extract_strided_slice %0 {offsets = [5, 0], sizes = [1, 256], strides = [1, 1]} : vector<6x256xf32> to vector<1x256xf32>
    %cst_72 = arith.constant dense<0.000000e+00> : vector<1x512xf32>
    %345 = tpu.matmul %330, %2, %cst_72 {dimension_numbers = #tpu.dot_dimension_numbers<[1], [0], [0], [1], [0, 0, 1, 1], [], []>} : vector<1x128xf32>, vector<128x512xf32>, vector<1x512xf32> -> vector<1x512xf32>
    %346 = vector.extract_strided_slice %344 {offsets = [0, 0], sizes = [1, 128], strides = [1, 1]} : vector<1x256xf32> to vector<1x128xf32>
    %347 = vector.extract_strided_slice %345 {offsets = [0, 0], sizes = [1, 128], strides = [1, 1]} : vector<1x512xf32> to vector<1x128xf32>
    %348 = arith.addf %346, %347 : vector<1x128xf32>
    %349 = arith.addf %348, %6 : vector<1x128xf32>
    %cst_73 = arith.constant dense<0xFF800000> : vector<1xf32>
    %350 = vector.multi_reduction <maximumf>, %349, %cst_73 [1] : vector<1x128xf32> to vector<1xf32>
    %351 = vector.shape_cast %350 : vector<1xf32> to vector<1x1xf32>
    %352 = vector.broadcast %351 : vector<1x1xf32> to vector<1x128xf32>
    %353 = arith.subf %349, %352 : vector<1x128xf32>
    %354 = math.exp %353 : vector<1x128xf32>
    %cst_74 = arith.constant dense<0.000000e+00> : vector<1xf32>
    %355 = vector.multi_reduction <add>, %354, %cst_74 [1] : vector<1x128xf32> to vector<1xf32>
    %356 = vector.shape_cast %355 : vector<1xf32> to vector<1x1xf32>
    %357 = tpu.reciprocal %356 {approx = true} : vector<1x1xf32> -> vector<1x1xf32>
    %358 = vector.broadcast %357 : vector<1x1xf32> to vector<1x128xf32>
    %359 = arith.mulf %354, %358 : vector<1x128xf32>
    %360 = vector.extract_strided_slice %344 {offsets = [0, 128], sizes = [1, 128], strides = [1, 1]} : vector<1x256xf32> to vector<1x128xf32>
    %cst_75 = arith.constant dense<0.000000e+00> : vector<1x128xf32>
    %361 = tpu.matmul %359, %1, %cst_75 {dimension_numbers = #tpu.dot_dimension_numbers<[1], [0], [0], [1], [0, 0, 1, 1], [], []>} : vector<1x128xf32>, vector<128x128xf32>, vector<1x128xf32> -> vector<1x128xf32>
    %362 = arith.addf %360, %361 : vector<1x128xf32>
    %363 = arith.addf %362, %7 : vector<1x128xf32>
    %cst_76 = arith.constant 0.000000e+00 : f32
    %364 = vector.broadcast %cst_76 : f32 to vector<1x128xf32>
    %365 = arith.maximumf %363, %364 : vector<1x128xf32>
    %cst_77 = arith.constant dense<0.000000e+00> : vector<1x384xf32>
    %366 = tpu.matmul %365, %3, %cst_77 {dimension_numbers = #tpu.dot_dimension_numbers<[1], [0], [0], [1], [0, 0, 1, 1], [], []>} : vector<1x128xf32>, vector<128x384xf32>, vector<1x384xf32> -> vector<1x384xf32>
    %367 = vector.extract_strided_slice %366 {offsets = [0, 0], sizes = [1, 128], strides = [1, 1]} : vector<1x384xf32> to vector<1x128xf32>
    %368 = vector.extract_strided_slice %345 {offsets = [0, 128], sizes = [1, 128], strides = [1, 1]} : vector<1x512xf32> to vector<1x128xf32>
    %369 = arith.addf %367, %368 : vector<1x128xf32>
    %370 = arith.addf %369, %8 : vector<1x128xf32>
    %371 = arith.negf %370 : vector<1x128xf32>
    %372 = math.exp %371 : vector<1x128xf32>
    %cst_78 = arith.constant 1.000000e+00 : f32
    %373 = vector.broadcast %cst_78 : f32 to vector<1x128xf32>
    %374 = arith.addf %373, %372 : vector<1x128xf32>
    %375 = arith.divf %373, %374 : vector<1x128xf32>
    %376 = vector.extract_strided_slice %366 {offsets = [0, 128], sizes = [1, 128], strides = [1, 1]} : vector<1x384xf32> to vector<1x128xf32>
    %377 = vector.extract_strided_slice %345 {offsets = [0, 256], sizes = [1, 128], strides = [1, 1]} : vector<1x512xf32> to vector<1x128xf32>
    %378 = arith.addf %376, %377 : vector<1x128xf32>
    %379 = arith.addf %378, %9 : vector<1x128xf32>
    %380 = arith.negf %379 : vector<1x128xf32>
    %381 = math.exp %380 : vector<1x128xf32>
    %cst_79 = arith.constant 1.000000e+00 : f32
    %382 = vector.broadcast %cst_79 : f32 to vector<1x128xf32>
    %383 = arith.addf %382, %381 : vector<1x128xf32>
    %384 = arith.divf %382, %383 : vector<1x128xf32>
    %385 = vector.extract_strided_slice %366 {offsets = [0, 256], sizes = [1, 128], strides = [1, 1]} : vector<1x384xf32> to vector<1x128xf32>
    %386 = arith.addf %385, %10 : vector<1x128xf32>
    %387 = vector.extract_strided_slice %345 {offsets = [0, 384], sizes = [1, 128], strides = [1, 1]} : vector<1x512xf32> to vector<1x128xf32>
    %388 = arith.addf %387, %11 : vector<1x128xf32>
    %389 = arith.mulf %375, %388 : vector<1x128xf32>
    %390 = arith.addf %386, %389 : vector<1x128xf32>
    %391 = math.tanh %390 : vector<1x128xf32>
    %cst_80 = arith.constant 1.000000e+00 : f32
    %392 = vector.broadcast %cst_80 : f32 to vector<1x128xf32>
    %393 = arith.subf %392, %384 : vector<1x128xf32>
    %394 = arith.mulf %393, %391 : vector<1x128xf32>
    %395 = arith.mulf %384, %330 : vector<1x128xf32>
    %396 = arith.addf %394, %395 : vector<1x128xf32>
    %cst_81 = arith.constant dense<0.000000e+00> : vector<1x128xf32>
    %397 = tpu.matmul %396, %4, %cst_81 {dimension_numbers = #tpu.dot_dimension_numbers<[1], [0], [0], [1], [0, 0, 1, 1], [], []>} : vector<1x128xf32>, vector<128x128xf32>, vector<1x128xf32> -> vector<1x128xf32>
    %398 = arith.addf %397, %12 : vector<1x128xf32>
    %cst_82 = arith.constant dense<0xFF800000> : vector<1xf32>
    %399 = vector.multi_reduction <maximumf>, %398, %cst_82 [1] : vector<1x128xf32> to vector<1xf32>
    %400 = vector.shape_cast %399 : vector<1xf32> to vector<1x1xf32>
    %401 = vector.broadcast %400 : vector<1x1xf32> to vector<1x128xf32>
    %402 = arith.subf %398, %401 : vector<1x128xf32>
    %403 = math.exp %402 : vector<1x128xf32>
    %cst_83 = arith.constant dense<0.000000e+00> : vector<1xf32>
    %404 = vector.multi_reduction <add>, %403, %cst_83 [1] : vector<1x128xf32> to vector<1xf32>
    %405 = vector.shape_cast %404 : vector<1xf32> to vector<1x1xf32>
    %406 = math.log %405 : vector<1x1xf32>
    %407 = arith.addf %400, %406 : vector<1x1xf32>
    %408 = vector.broadcast %407 : vector<1x1xf32> to vector<1x128xf32>
    %409 = arith.subf %398, %408 : vector<1x128xf32>
    %410 = tpu.concatenate %79, %145, %211, %277, %343, %409 in 0 : vector<1x128xf32>, vector<1x128xf32>, vector<1x128xf32>, vector<1x128xf32>, vector<1x128xf32>, vector<1x128xf32> -> vector<6x128xf32>
    %c0_84 = arith.constant 0 : index
    %c0_85 = arith.constant 0 : index
    %411 = vector.load %arg8[%c0_84, %c0_85] : memref<6x128xf32, #tpu.memory_space<vmem>>, vector<6x128xf32>
    tpu.vector_store %arg8[%c0_84, %c0_85], %410 {strides = array<i32>} : memref<6x128xf32, #tpu.memory_space<vmem>>, vector<6x128xf32>,
    %412 = tpu.concatenate %29, %95, %161, %227, %293, %359 in 0 : vector<1x128xf32>, vector<1x128xf32>, vector<1x128xf32>, vector<1x128xf32>, vector<1x128xf32>, vector<1x128xf32> -> vector<6x128xf32>
    %c0_86 = arith.constant 0 : index
    %c0_87 = arith.constant 0 : index
    %413 = vector.load %arg9[%c0_86, %c0_87] : memref<6x128xf32, #tpu.memory_space<vmem>>, vector<6x128xf32>
    tpu.vector_store %arg9[%c0_86, %c0_87], %412 {strides = array<i32>} : memref<6x128xf32, #tpu.memory_space<vmem>>, vector<6x128xf32>,
    %c0_88 = arith.constant 0 : index
    %c0_89 = arith.constant 0 : index
    %414 = vector.load %arg10[%c0_88, %c0_89] : memref<1x128xf32, #tpu.memory_space<vmem>>, vector<1x128xf32>
    tpu.vector_store %arg10[%c0_88, %c0_89], %396 {strides = array<i32>} : memref<1x128xf32, #tpu.memory_space<vmem>>, vector<1x128xf32>,
    return
  }
  func.func @transform_0(%arg0: i32) -> (i32, i32) {
    %c0_i32 = arith.constant 0 : i32
    %c0_i32_0 = arith.constant 0 : i32
    %c0_i32_1 = arith.constant 0 : i32
    return %c0_i32, %c0_i32_0 : i32, i32
  }
  func.func @transform_1(%arg0: i32) -> (i32, i32) {
    %c0_i32 = arith.constant 0 : i32
    %c0_i32_0 = arith.constant 0 : i32
    %c0_i32_1 = arith.constant 0 : i32
    return %c0_i32, %c0_i32_0 : i32, i32
  }
  func.func @transform_2(%arg0: i32) -> (i32, i32) {
    %c0_i32 = arith.constant 0 : i32
    %c0_i32_0 = arith.constant 0 : i32
    %c0_i32_1 = arith.constant 0 : i32
    return %c0_i32, %c0_i32_0 : i32, i32
  }
  func.func @transform_3(%arg0: i32) -> (i32, i32) {
    %c0_i32 = arith.constant 0 : i32
    %c0_i32_0 = arith.constant 0 : i32
    %c0_i32_1 = arith.constant 0 : i32
    return %c0_i32, %c0_i32_0 : i32, i32
  }
  func.func @transform_4(%arg0: i32) -> (i32, i32) {
    %c0_i32 = arith.constant 0 : i32
    %c0_i32_0 = arith.constant 0 : i32
    %c0_i32_1 = arith.constant 0 : i32
    return %c0_i32, %c0_i32_0 : i32, i32
  }
  func.func @transform_5(%arg0: i32) -> (i32, i32) {
    %c0_i32 = arith.constant 0 : i32
    %c0_i32_0 = arith.constant 0 : i32
    %c0_i32_1 = arith.constant 0 : i32
    return %c0_i32, %c0_i32_0 : i32, i32
  }
  func.func @transform_6(%arg0: i32) -> (i32, i32) {
    %c0_i32 = arith.constant 0 : i32
    %c0_i32_0 = arith.constant 0 : i32
    %c0_i32_1 = arith.constant 0 : i32
    return %c0_i32, %c0_i32_0 : i32, i32
  }
  func.func @transform_7(%arg0: i32) -> (i32, i32) {
    %c0_i32 = arith.constant 0 : i32
    %c0_i32_0 = arith.constant 0 : i32
    %c0_i32_1 = arith.constant 0 : i32
    return %c0_i32, %c0_i32_0 : i32, i32
  }
  func.func @transform_8(%arg0: i32) -> (i32, i32) {
    %c0_i32 = arith.constant 0 : i32
    %c0_i32_0 = arith.constant 0 : i32
    %c0_i32_1 = arith.constant 0 : i32
    return %c0_i32, %c0_i32_0 : i32, i32
  }
  func.func @transform_9(%arg0: i32) -> (i32, i32) {
    %c0_i32 = arith.constant 0 : i32
    %c0_i32_0 = arith.constant 0 : i32
    %c0_i32_1 = arith.constant 0 : i32
    return %c0_i32, %c0_i32_0 : i32, i32
  }
}

</mosaic_0001>

<llo_original>
// kernel: decoder_forward.1
$region0: #{decoder_forward.1}
  #allocation0 [shape = 'u32[]', space=smem, size = 0x4, offset = 0x4, fixed_abs, tag = 'smem constant byte address 0x4 - core index']
  #allocation1 [shape = 'u32[144,128]{1,0:T(1,128)}', space=vmem, size = 0x12000, scoped, tag = 'internal scratch']
  %s0 = inlined_call_operand.vmem [shape: f32[6,256], index: 0, kind: input, shape index: {}]
  %s1 = inlined_call_operand.vmem [shape: f32[1,128], index: 1, kind: input, shape index: {}]
  %s2 = inlined_call_operand.vmem [shape: f32[128,128], index: 2, kind: input, shape index: {}]
  %s3 = inlined_call_operand.vmem [shape: f32[128,512], index: 3, kind: input, shape index: {}]
  %s4 = inlined_call_operand.vmem [shape: f32[128,384], index: 4, kind: input, shape index: {}]
  %s5 = inlined_call_operand.vmem [shape: f32[128,128], index: 5, kind: input, shape index: {}]
  %s6 = inlined_call_operand.vmem [shape: f32[1,896], index: 6, kind: input, shape index: {}]
  %s7 = inlined_call_operand.hbm [shape: f32[6,128], index: 7, kind: output, shape index: {0}]
  %s8 = inlined_call_operand.hbm [shape: f32[6,128], index: 8, kind: output, shape index: {1}]
  %s9 = inlined_call_operand.vmem [shape: f32[1,128], index: 9, kind: output, shape index: {2}]
  %10 = xla_tuple %s7, %s8, %s9
  %s11 = sld [smem:[#allocation0]]
  $region54: #{decoder_forward.1} parent=0
    _
  %s13 = ssub.s32 1, %s11
  %s14 = scalar_select 0, %s13, %s11
  $region1: #{decoder_forward.1} parent=0
    #allocation2 [shape = 'u8[4096]{0}', space=vmem, size = 0x1000, scoped, tag = 'output window, operand 0, single buffered']
    #allocation3 [shape = 's32[1]{0}', space=sflag, size = 0x4, scoped, tag = 'scoped memory for decoder_forward.1']
    #allocation4 [shape = 'u8[4096]{0}', space=vmem, size = 0x1000, scoped, tag = 'output window, operand 1, single buffered']
    #allocation5 [shape = 's32[1]{0}', space=sflag, size = 0x4, scoped, tag = 'scoped memory for decoder_forward.1']
    %15 = vsyncpa [#allocation3], 0
    %16 = vsyncpa [#allocation5], 0
    // Predicated region
    $region2: #{decoder_forward.1} parent=1 // pred_check
      _
    $region3: #{decoder_forward.1} parent=1 // pred_check_branch
      %18 = sbr.rel (0) target = $region5
    $region4: #{decoder_forward.1} parent=1 // pred_region
      _
    $region5: #{decoder_forward.1} parent=1 // pred_fallthru
      _
    // Predicated region
    $region6: #{decoder_forward.1} parent=1 // pred_check
      _
    $region7: #{decoder_forward.1} parent=1 // pred_check_branch
      %20 = sbr.rel (0) target = $region9
    $region8: #{decoder_forward.1} parent=1 // pred_region
      _
    $region9: #{decoder_forward.1} parent=1 // pred_fallthru
      _
    // Predicated region
    $region10: #{decoder_forward.1} parent=1 // pred_check
      _
    $region11: #{decoder_forward.1} parent=1 // pred_check_branch
      %22 = sbr.rel (0) target = $region13
    $region12: #{decoder_forward.1} parent=1 // pred_region
      _
    $region13: #{decoder_forward.1} parent=1 // pred_fallthru
      _
    // Predicated region
    $region14: #{decoder_forward.1} parent=1 // pred_check
      _
    $region15: #{decoder_forward.1} parent=1 // pred_check_branch
      %24 = sbr.rel (0) target = $region17
    $region16: #{decoder_forward.1} parent=1 // pred_region
      _
    $region17: #{decoder_forward.1} parent=1 // pred_fallthru
      _
    // Predicated region
    $region18: #{decoder_forward.1} parent=1 // pred_check
      _
    $region19: #{decoder_forward.1} parent=1 // pred_check_branch
      %26 = sbr.rel (0) target = $region21
    $region20: #{decoder_forward.1} parent=1 // pred_region
      _
    $region21: #{decoder_forward.1} parent=1 // pred_fallthru
      _
    // Predicated region
    $region22: #{decoder_forward.1} parent=1 // pred_check
      _
    $region23: #{decoder_forward.1} parent=1 // pred_check_branch
      %28 = sbr.rel (0) target = $region25
    $region24: #{decoder_forward.1} parent=1 // pred_region
      _
    $region25: #{decoder_forward.1} parent=1 // pred_fallthru
      _
    // Predicated region
    $region26: #{decoder_forward.1} parent=1 // pred_check
      _
    $region27: #{decoder_forward.1} parent=1 // pred_check_branch
      %30 = sbr.rel (0) target = $region29
    $region28: #{decoder_forward.1} parent=1 // pred_region
      _
    $region29: #{decoder_forward.1} parent=1 // pred_fallthru
      _
    %v31 = vld [vmem:[%s0] sm:$0x3f]
    %v32 = vld [vmem:[%s0 + $0x8] sm:$0x3f]
    %v33 = vld [vmem:[%s2] sm:$0xff]
    %v34 = vld [vmem:[%s2 + $0x8] sm:$0xff]
    %v35 = vld [vmem:[%s2 + $0x10] sm:$0xff]
    %v36 = vld [vmem:[%s2 + $0x18] sm:$0xff]
    %v37 = vld [vmem:[%s2 + $0x20] sm:$0xff]
    %v38 = vld [vmem:[%s2 + $0x28] sm:$0xff]
    %v39 = vld [vmem:[%s2 + $0x30] sm:$0xff]
    %v40 = vld [vmem:[%s2 + $0x38] sm:$0xff]
    %v41 = vld [vmem:[%s2 + $0x40] sm:$0xff]
    %v42 = vld [vmem:[%s2 + $0x48] sm:$0xff]
    %v43 = vld [vmem:[%s2 + $0x50] sm:$0xff]
    %v44 = vld [vmem:[%s2 + $0x58] sm:$0xff]
    %v45 = vld [vmem:[%s2 + $0x60] sm:$0xff]
    %v46 = vld [vmem:[%s2 + $0x68] sm:$0xff]
    %v47 = vld [vmem:[%s2 + $0x70] sm:$0xff]
    %v48 = vld [vmem:[%s2 + $0x78] sm:$0xff]
    %v49 = vld [vmem:[%s3] sm:$0xff]
    %v50 = vld [vmem:[%s3 + $0x8] sm:$0xff]
    %v51 = vld [vmem:[%s3 + $0x10] sm:$0xff]
    %v52 = vld [vmem:[%s3 + $0x18] sm:$0xff]
    %v53 = vld [vmem:[%s3 + $0x20] sm:$0xff]
    %v54 = vld [vmem:[%s3 + $0x28] sm:$0xff]
    %v55 = vld [vmem:[%s3 + $0x30] sm:$0xff]
    %v56 = vld [vmem:[%s3 + $0x38] sm:$0xff]
    %v57 = vld [vmem:[%s3 + $0x40] sm:$0xff]
    %v58 = vld [vmem:[%s3 + $0x48] sm:$0xff]
    %v59 = vld [vmem:[%s3 + $0x50] sm:$0xff]
    %v60 = vld [vmem:[%s3 + $0x58] sm:$0xff]
    %v61 = vld [vmem:[%s3 + $0x60] sm:$0xff]
    %v62 = vld [vmem:[%s3 + $0x68] sm:$0xff]
    %v63 = vld [vmem:[%s3 + $0x70] sm:$0xff]
    %v64 = vld [vmem:[%s3 + $0x78] sm:$0xff]
    %v65 = vld [vmem:[%s3 + $0x80] sm:$0xff]
    %v66 = vld [vmem:[%s3 + $0x88] sm:$0xff]
    %v67 = vld [vmem:[%s3 + $0x90] sm:$0xff]
    %v68 = vld [vmem:[%s3 + $0x98] sm:$0xff]
    %v69 = vld [vmem:[%s3 + $0xa0] sm:$0xff]
    %v70 = vld [vmem:[%s3 + $0xa8] sm:$0xff]
    %v71 = vld [vmem:[%s3 + $0xb0] sm:$0xff]
    %v72 = vld [vmem:[%s3 + $0xb8] sm:$0xff]
    %v73 = vld [vmem:[%s3 + $0xc0] sm:$0xff]
    %v74 = vld [vmem:[%s3 + $0xc8] sm:$0xff]
    %v75 = vld [vmem:[%s3 + $0xd0] sm:$0xff]
    %v76 = vld [vmem:[%s3 + $0xd8] sm:$0xff]
    %v77 = vld [vmem:[%s3 + $0xe0] sm:$0xff]
    %v78 = vld [vmem:[%s3 + $0xe8] sm:$0xff]
    %v79 = vld [vmem:[%s3 + $0xf0] sm:$0xff]
    %v80 = vld [vmem:[%s3 + $0xf8] sm:$0xff]
    %v81 = vld [vmem:[%s3 + $0x100] sm:$0xff]
    %v82 = vld [vmem:[%s3 + $0x108] sm:$0xff]
    %v83 = vld [vmem:[%s3 + $0x110] sm:$0xff]
    %v84 = vld [vmem:[%s3 + $0x118] sm:$0xff]
    %v85 = vld [vmem:[%s3 + $0x120] sm:$0xff]
    %v86 = vld [vmem:[%s3 + $0x128] sm:$0xff]
    %v87 = vld [vmem:[%s3 + $0x130] sm:$0xff]
    %v88 = vld [vmem:[%s3 + $0x138] sm:$0xff]
    %v89 = vld [vmem:[%s3 + $0x140] sm:$0xff]
    %v90 = vld [vmem:[%s3 + $0x148] sm:$0xff]
    %v91 = vld [vmem:[%s3 + $0x150] sm:$0xff]
    %v92 = vld [vmem:[%s3 + $0x158] sm:$0xff]
    %v93 = vld [vmem:[%s3 + $0x160] sm:$0xff]
    %v94 = vld [vmem:[%s3 + $0x168] sm:$0xff]
    %v95 = vld [vmem:[%s3 + $0x170] sm:$0xff]
    %v96 = vld [vmem:[%s3 + $0x178] sm:$0xff]
    %v97 = vld [vmem:[%s3 + $0x180] sm:$0xff]
    %v98 = vld [vmem:[%s3 + $0x188] sm:$0xff]
    %v99 = vld [vmem:[%s3 + $0x190] sm:$0xff]
    %v100 = vld [vmem:[%s3 + $0x198] sm:$0xff]
    %v101 = vld [vmem:[%s3 + $0x1a0] sm:$0xff]
    %v102 = vld [vmem:[%s3 + $0x1a8] sm:$0xff]
    %v103 = vld [vmem:[%s3 + $0x1b0] sm:$0xff]
    %v104 = vld [vmem:[%s3 + $0x1b8] sm:$0xff]
    %v105 = vld [vmem:[%s3 + $0x1c0] sm:$0xff]
    %v106 = vld [vmem:[%s3 + $0x1c8] sm:$0xff]
    %v107 = vld [vmem:[%s3 + $0x1d0] sm:$0xff]
    %v108 = vld [vmem:[%s3 + $0x1d8] sm:$0xff]
    %v109 = vld [vmem:[%s3 + $0x1e0] sm:$0xff]
    %v110 = vld [vmem:[%s3 + $0x1e8] sm:$0xff]
    %v111 = vld [vmem:[%s3 + $0x1f0] sm:$0xff]
    %v112 = vld [vmem:[%s3 + $0x1f8] sm:$0xff]
    %v113 = vld [vmem:[%s4] sm:$0xff]
    %v114 = vld [vmem:[%s4 + $0x8] sm:$0xff]
    %v115 = vld [vmem:[%s4 + $0x10] sm:$0xff]
    %v116 = vld [vmem:[%s4 + $0x18] sm:$0xff]
    %v117 = vld [vmem:[%s4 + $0x20] sm:$0xff]
    %v118 = vld [vmem:[%s4 + $0x28] sm:$0xff]
    %v119 = vld [vmem:[%s4 + $0x30] sm:$0xff]
    %v120 = vld [vmem:[%s4 + $0x38] sm:$0xff]
    %v121 = vld [vmem:[%s4 + $0x40] sm:$0xff]
    %v122 = vld [vmem:[%s4 + $0x48] sm:$0xff]
    %v123 = vld [vmem:[%s4 + $0x50] sm:$0xff]
    %v124 = vld [vmem:[%s4 + $0x58] sm:$0xff]
    %v125 = vld [vmem:[%s4 + $0x60] sm:$0xff]
    %v126 = vld [vmem:[%s4 + $0x68] sm:$0xff]
    %v127 = vld [vmem:[%s4 + $0x70] sm:$0xff]
    %v128 = vld [vmem:[%s4 + $0x78] sm:$0xff]
    %v129 = vld [vmem:[%s4 + $0x80] sm:$0xff]
    %v130 = vld [vmem:[%s4 + $0x88] sm:$0xff]
    %v131 = vld [vmem:[%s4 + $0x90] sm:$0xff]
    %v132 = vld [vmem:[%s4 + $0x98] sm:$0xff]
    %v133 = vld [vmem:[%s4 + $0xa0] sm:$0xff]
    %v134 = vld [vmem:[%s4 + $0xa8] sm:$0xff]
    %v135 = vld [vmem:[%s4 + $0xb0] sm:$0xff]
    %v136 = vld [vmem:[%s4 + $0xb8] sm:$0xff]
    %v137 = vld [vmem:[%s4 + $0xc0] sm:$0xff]
    %v138 = vld [vmem:[%s4 + $0xc8] sm:$0xff]
    %v139 = vld [vmem:[%s4 + $0xd0] sm:$0xff]
    %v140 = vld [vmem:[%s4 + $0xd8] sm:$0xff]
    %v141 = vld [vmem:[%s4 + $0xe0] sm:$0xff]
    %v142 = vld [vmem:[%s4 + $0xe8] sm:$0xff]
    %v143 = vld [vmem:[%s4 + $0xf0] sm:$0xff]
    %v144 = vld [vmem:[%s4 + $0xf8] sm:$0xff]
    %v145 = vld [vmem:[%s4 + $0x100] sm:$0xff]
    %v146 = vld [vmem:[%s4 + $0x108] sm:$0xff]
    %v147 = vld [vmem:[%s4 + $0x110] sm:$0xff]
    %v148 = vld [vmem:[%s4 + $0x118] sm:$0xff]
    %v149 = vld [vmem:[%s4 + $0x120] sm:$0xff]
    %v150 = vld [vmem:[%s4 + $0x128] sm:$0xff]
    %v151 = vld [vmem:[%s4 + $0x130] sm:$0xff]
    %v152 = vld [vmem:[%s4 + $0x138] sm:$0xff]
    %v153 = vld [vmem:[%s4 + $0x140] sm:$0xff]
    %v154 = vld [vmem:[%s4 + $0x148] sm:$0xff]
    %v155 = vld [vmem:[%s4 + $0x150] sm:$0xff]
    %v156 = vld [vmem:[%s4 + $0x158] sm:$0xff]
    %v157 = vld [vmem:[%s4 + $0x160] sm:$0xff]
    %v158 = vld [vmem:[%s4 + $0x168] sm:$0xff]
    %v159 = vld [vmem:[%s4 + $0x170] sm:$0xff]
    %v160 = vld [vmem:[%s4 + $0x178] sm:$0xff]
    %v161 = vld [vmem:[%s5] sm:$0xff]
    %v162 = vld [vmem:[%s5 + $0x8] sm:$0xff]
    %v163 = vld [vmem:[%s5 + $0x10] sm:$0xff]
    %v164 = vld [vmem:[%s5 + $0x18] sm:$0xff]
    %v165 = vld [vmem:[%s5 + $0x20] sm:$0xff]
    %v166 = vld [vmem:[%s5 + $0x28] sm:$0xff]
    %v167 = vld [vmem:[%s5 + $0x30] sm:$0xff]
    %v168 = vld [vmem:[%s5 + $0x38] sm:$0xff]
    %v169 = vld [vmem:[%s5 + $0x40] sm:$0xff]
    %v170 = vld [vmem:[%s5 + $0x48] sm:$0xff]
    %v171 = vld [vmem:[%s5 + $0x50] sm:$0xff]
    %v172 = vld [vmem:[%s5 + $0x58] sm:$0xff]
    %v173 = vld [vmem:[%s5 + $0x60] sm:$0xff]
    %v174 = vld [vmem:[%s5 + $0x68] sm:$0xff]
    %v175 = vld [vmem:[%s5 + $0x70] sm:$0xff]
    %v176 = vld [vmem:[%s5 + $0x78] sm:$0xff]
    %v177 = vld [vmem:[%s6] sm:$0xff]
    %v178 = vld [vmem:[%s1] sm:$0x1]
    %179 = vmatprep.subr.mxu0 %v50
    %180 = vmatpush1.msra.mxu0 %v49
    %181 = vmatprep.subr.mxu0 %v54
    %182 = vmatpush1.msra.mxu0 %v53
    %183 = vmatprep.subr.mxu0 %v58
    %184 = vmatpush1.msra.mxu0 %v57
    %185 = vmatprep.subr.mxu0 %v62
    %186 = vmatpush1.msra.mxu0 %v61
    %187 = vmatprep.subr.mxu0 %v66
    %188 = vmatpush1.msra.mxu0 %v65
    %189 = vmatprep.subr.mxu0 %v70
    %190 = vmatpush1.msra.mxu0 %v69
    %191 = vmatprep.subr.mxu0 %v74
    %192 = vmatpush1.msra.mxu0 %v73
    %193 = vmatprep.subr.mxu0 %v78
    %194 = vmatpush1.msra.mxu0 %v77
    %195 = vmatprep.subr.mxu0 %v82
    %196 = vmatpush1.msra.mxu0 %v81
    %197 = vmatprep.subr.mxu0 %v86
    %198 = vmatpush1.msra.mxu0 %v85
    %199 = vmatprep.subr.mxu0 %v90
    %200 = vmatpush1.msra.mxu0 %v89
    %201 = vmatprep.subr.mxu0 %v94
    %202 = vmatpush1.msra.mxu0 %v93
    %203 = vmatprep.subr.mxu0 %v98
    %204 = vmatpush1.msra.mxu0 %v97
    %205 = vmatprep.subr.mxu0 %v102
    %206 = vmatpush1.msra.mxu0 %v101
    %207 = vmatprep.subr.mxu0 %v106
    %208 = vmatpush1.msra.mxu0 %v105
    %209 = vmatprep.subr.mxu0 %v110
    %210 = vmatpush1.msra.mxu0 %v109
    %211 = vmatprep.subr.mxu0 0.0
    %212 = vmatpush1.msra.mxu0 0.0
    %213 = vmatprep.subr.mxu0 0.0
    %214 = vmatpush1.msra.mxu0 0.0
    %215 = vmatprep.subr.mxu0 0.0
    %216 = vmatpush1.msra.mxu0 0.0
    %217 = vmatprep.subr.mxu0 0.0
    %218 = vmatpush1.msra.mxu0 0.0
    %219 = vmatprep.subr.mxu0 0.0
    %220 = vmatpush1.msra.mxu0 0.0
    %221 = vmatprep.subr.mxu0 0.0
    %222 = vmatpush1.msra.mxu0 0.0
    %223 = vmatprep.subr.mxu0 0.0
    %224 = vmatpush1.msra.mxu0 0.0
    %225 = vmatprep.subr.mxu0 0.0
    %226 = vmatpush1.msra.mxu0 0.0
    %227 = vmatprep.subr.mxu0 0.0
    %228 = vmatpush1.msra.mxu0 0.0
    %229 = vmatprep.subr.mxu0 0.0
    %230 = vmatpush1.msra.mxu0 0.0
    %231 = vmatprep.subr.mxu0 0.0
    %232 = vmatpush1.msra.mxu0 0.0
    %233 = vmatprep.subr.mxu0 0.0
    %234 = vmatpush1.msra.mxu0 0.0
    %235 = vmatprep.subr.mxu0 0.0
    %236 = vmatpush1.msra.mxu0 0.0
    %237 = vmatprep.subr.mxu0 0.0
    %238 = vmatpush1.msra.mxu0 0.0
    %239 = vmatprep.subr.mxu0 0.0
    %240 = vmatpush1.msra.mxu0 0.0
    %241 = vmatprep.subr.mxu0 0.0
    %242 = vmatpush1.msra.mxu0 0.0
    %243 = vmatprep.mubr.f32.mxu0 0.0
    %244 = vmatmul.mubr.f32.gmra.mrb[0].mxu0 %v178
    %v245 = vpop.f32.mrb[0].mxu0
    %v246 = vadd.f32 0.0, %v245
    %v247 = vpop.f32.mrb[0].mxu0
    %v248 = vadd.f32 0.0, %v247
    %249 = vdwg.mxu0
    %250 = vmatprep.subr.mxu0 %v52
    %251 = vmatpush1.msra.mxu0 %v51
    %252 = vmatprep.subr.mxu0 %v56
    %253 = vmatpush1.msra.mxu0 %v55
    %254 = vmatprep.subr.mxu0 %v60
    %255 = vmatpush1.msra.mxu0 %v59
    %256 = vmatprep.subr.mxu0 %v64
    %257 = vmatpush1.msra.mxu0 %v63
    %258 = vmatprep.subr.mxu0 %v68
    %259 = vmatpush1.msra.mxu0 %v67
    %260 = vmatprep.subr.mxu0 %v72
    %261 = vmatpush1.msra.mxu0 %v71
    %262 = vmatprep.subr.mxu0 %v76
    %263 = vmatpush1.msra.mxu0 %v75
    %264 = vmatprep.subr.mxu0 %v80
    %265 = vmatpush1.msra.mxu0 %v79
    %266 = vmatprep.subr.mxu0 %v84
    %267 = vmatpush1.msra.mxu0 %v83
    %268 = vmatprep.subr.mxu0 %v88
    %269 = vmatpush1.msra.mxu0 %v87
    %270 = vmatprep.subr.mxu0 %v92
    %271 = vmatpush1.msra.mxu0 %v91
    %272 = vmatprep.subr.mxu0 %v96
    %273 = vmatpush1.msra.mxu0 %v95
    %274 = vmatprep.subr.mxu0 %v100
    %275 = vmatpush1.msra.mxu0 %v99
    %276 = vmatprep.subr.mxu0 %v104
    %277 = vmatpush1.msra.mxu0 %v103
    %278 = vmatprep.subr.mxu0 %v108
    %279 = vmatpush1.msra.mxu0 %v107
    %280 = vmatprep.subr.mxu0 %v112
    %281 = vmatpush1.msra.mxu0 %v111
    %282 = vmatprep.subr.mxu0 0.0
    %283 = vmatpush1.msra.mxu0 0.0
    %284 = vmatprep.subr.mxu0 0.0
    %285 = vmatpush1.msra.mxu0 0.0
    %286 = vmatprep.subr.mxu0 0.0
    %287 = vmatpush1.msra.mxu0 0.0
    %288 = vmatprep.subr.mxu0 0.0
    %289 = vmatpush1.msra.mxu0 0.0
    %290 = vmatprep.subr.mxu0 0.0
    %291 = vmatpush1.msra.mxu0 0.0
    %292 = vmatprep.subr.mxu0 0.0
    %293 = vmatpush1.msra.mxu0 0.0
    %294 = vmatprep.subr.mxu0 0.0
    %295 = vmatpush1.msra.mxu0 0.0
    %296 = vmatprep.subr.mxu0 0.0
    %297 = vmatpush1.msra.mxu0 0.0
    %298 = vmatprep.subr.mxu0 0.0
    %299 = vmatpush1.msra.mxu0 0.0
    %300 = vmatprep.subr.mxu0 0.0
    %301 = vmatpush1.msra.mxu0 0.0
    %302 = vmatprep.subr.mxu0 0.0
    %303 = vmatpush1.msra.mxu0 0.0
    %304 = vmatprep.subr.mxu0 0.0
    %305 = vmatpush1.msra.mxu0 0.0
    %306 = vmatprep.subr.mxu0 0.0
    %307 = vmatpush1.msra.mxu0 0.0
    %308 = vmatprep.subr.mxu0 0.0
    %309 = vmatpush1.msra.mxu0 0.0
    %310 = vmatprep.subr.mxu0 0.0
    %311 = vmatpush1.msra.mxu0 0.0
    %312 = vmatprep.subr.mxu0 0.0
    %313 = vmatpush1.msra.mxu0 0.0
    %314 = vmatprep.mubr.f32.mxu0 0.0
    %315 = vmatmul.mubr.f32.gmra.mrb[0].mxu0 %v178
    %v316 = vpop.f32.mrb[0].mxu0
    %v317 = vadd.f32 0.0, %v316
    %v318 = vpop.f32.mrb[0].mxu0
    %v319 = vadd.f32 0.0, %v318
    %320 = vdwg.mxu0
    %v321 = vadd.f32 %v31, %v246
    %v322 = vadd.f32 %v321, %v177
    %vm323 = vcmask 1040384
    %v324 = vsel %vm323, %v322, -inf
    %325 = vmax.xlane.f32.xlu0 %v324
    %v326 = vpop.xlane.xlu0 %325
    %v327 = vsub.f32 %v322, %v326
    %v328 = vmul.f32 %v327, 1.442695
    %v329 = vpow.pop %v328
    %v330 = vsel %vm323, %v329, 0.0
    %331 = vadd.xlane.f32.xlu0 %v330
    %v332 = vpop.xlane.xlu0 %331
    %v333 = vrcp.pop %v332
    %v334 = vmul.f32 %v329, %v333
    %335 = vmatprep.subr.mxu0 0.0
    %336 = vmatpush1.msra.mxu0 %v33
    %337 = vmatprep.subr.mxu0 0.0
    %338 = vmatpush1.msra.mxu0 %v34
    %339 = vmatprep.subr.mxu0 0.0
    %340 = vmatpush1.msra.mxu0 %v35
    %341 = vmatprep.subr.mxu0 0.0
    %342 = vmatpush1.msra.mxu0 %v36
    %343 = vmatprep.subr.mxu0 0.0
    %344 = vmatpush1.msra.mxu0 %v37
    %345 = vmatprep.subr.mxu0 0.0
    %346 = vmatpush1.msra.mxu0 %v38
    %347 = vmatprep.subr.mxu0 0.0
    %348 = vmatpush1.msra.mxu0 %v39
    %349 = vmatprep.subr.mxu0 0.0
    %350 = vmatpush1.msra.mxu0 %v40
    %351 = vmatprep.subr.mxu0 0.0
    %352 = vmatpush1.msra.mxu0 %v41
    %353 = vmatprep.subr.mxu0 0.0
    %354 = vmatpush1.msra.mxu0 %v42
    %355 = vmatprep.subr.mxu0 0.0
    %356 = vmatpush1.msra.mxu0 %v43
    %357 = vmatprep.subr.mxu0 0.0
    %358 = vmatpush1.msra.mxu0 %v44
    %359 = vmatprep.subr.mxu0 0.0
    %360 = vmatpush1.msra.mxu0 %v45
    %361 = vmatprep.subr.mxu0 0.0
    %362 = vmatpush1.msra.mxu0 %v46
    %363 = vmatprep.subr.mxu0 0.0
    %364 = vmatpush1.msra.mxu0 %v47
    %365 = vmatprep.subr.mxu0 0.0
    %366 = vmatpush1.msra.mxu0 %v48
    %367 = vmatprep.subr.mxu0 0.0
    %368 = vmatpush1.msra.mxu0 0.0
    %369 = vmatprep.subr.mxu0 0.0
    %370 = vmatpush1.msra.mxu0 0.0
    %371 = vmatprep.subr.mxu0 0.0
    %372 = vmatpush1.msra.mxu0 0.0
    %373 = vmatprep.subr.mxu0 0.0
    %374 = vmatpush1.msra.mxu0 0.0
    %375 = vmatprep.subr.mxu0 0.0
    %376 = vmatpush1.msra.mxu0 0.0
    %377 = vmatprep.subr.mxu0 0.0
    %378 = vmatpush1.msra.mxu0 0.0
    %379 = vmatprep.subr.mxu0 0.0
    %380 = vmatpush1.msra.mxu0 0.0
    %381 = vmatprep.subr.mxu0 0.0
    %382 = vmatpush1.msra.mxu0 0.0
    %383 = vmatprep.subr.mxu0 0.0
    %384 = vmatpush1.msra.mxu0 0.0
    %385 = vmatprep.subr.mxu0 0.0
    %386 = vmatpush1.msra.mxu0 0.0
    %387 = vmatprep.subr.mxu0 0.0
    %388 = vmatpush1.msra.mxu0 0.0
    %389 = vmatprep.subr.mxu0 0.0
    %390 = vmatpush1.msra.mxu0 0.0
    %391 = vmatprep.subr.mxu0 0.0
    %392 = vmatpush1.msra.mxu0 0.0
    %393 = vmatprep.subr.mxu0 0.0
    %394 = vmatpush1.msra.mxu0 0.0
    %395 = vmatprep.subr.mxu0 0.0
    %396 = vmatpush1.msra.mxu0 0.0
    %397 = vmatprep.subr.mxu0 0.0
    %398 = vmatpush1.msra.mxu0 0.0
    %399 = vmatprep.mubr.f32.mxu0 0.0
    %400 = vmatmul.mubr.f32.gmra.mrb[0].mxu0 %v334
    %v401 = vpop.f32.mrb[0].mxu0
    %v402 = vadd.f32 0.0, %v401
    %v403 = vpop.f32.mrb[0].mxu0
    %404 = vdwg.mxu0
    %v405 = vadd.f32 %v32, %v402
    %v407 = vlaneseq
    %v408 = vshrl.u32 %v407, 7
    %v409 = vsub.s32 1, %v408
    %v410 = vrot.slane %v177, %v409
    %v412 = vadd.f32 %v405, %v410
    %v413 = vmax.f32 %v412, 0.0
    %414 = vmatprep.subr.mxu0 %v114
    %415 = vmatpush1.msra.mxu0 %v113
    %416 = vmatprep.subr.mxu0 %v117
    %417 = vmatpush1.msra.mxu0 %v116
    %418 = vmatprep.subr.mxu0 %v120
    %419 = vmatpush1.msra.mxu0 %v119
    %420 = vmatprep.subr.mxu0 %v123
    %421 = vmatpush1.msra.mxu0 %v122
    %422 = vmatprep.subr.mxu0 %v126
    %423 = vmatpush1.msra.mxu0 %v125
    %424 = vmatprep.subr.mxu0 %v129
    %425 = vmatpush1.msra.mxu0 %v128
    %426 = vmatprep.subr.mxu0 %v132
    %427 = vmatpush1.msra.mxu0 %v131
    %428 = vmatprep.subr.mxu0 %v135
    %429 = vmatpush1.msra.mxu0 %v134
    %430 = vmatprep.subr.mxu0 %v138
    %431 = vmatpush1.msra.mxu0 %v137
    %432 = vmatprep.subr.mxu0 %v141
    %433 = vmatpush1.msra.mxu0 %v140
    %434 = vmatprep.subr.mxu0 %v144
    %435 = vmatpush1.msra.mxu0 %v143
    %436 = vmatprep.subr.mxu0 %v147
    %437 = vmatpush1.msra.mxu0 %v146
    %438 = vmatprep.subr.mxu0 %v150
    %439 = vmatpush1.msra.mxu0 %v149
    %440 = vmatprep.subr.mxu0 %v153
    %441 = vmatpush1.msra.mxu0 %v152
    %442 = vmatprep.subr.mxu0 %v156
    %443 = vmatpush1.msra.mxu0 %v155
    %444 = vmatprep.subr.mxu0 %v159
    %445 = vmatpush1.msra.mxu0 %v158
    %446 = vmatprep.subr.mxu0 0.0
    %447 = vmatpush1.msra.mxu0 0.0
    %448 = vmatprep.subr.mxu0 0.0
    %449 = vmatpush1.msra.mxu0 0.0
    %450 = vmatprep.subr.mxu0 0.0
    %451 = vmatpush1.msra.mxu0 0.0
    %452 = vmatprep.subr.mxu0 0.0
    %453 = vmatpush1.msra.mxu0 0.0
    %454 = vmatprep.subr.mxu0 0.0
    %455 = vmatpush1.msra.mxu0 0.0
    %456 = vmatprep.subr.mxu0 0.0
    %457 = vmatpush1.msra.mxu0 0.0
    %458 = vmatprep.subr.mxu0 0.0
    %459 = vmatpush1.msra.mxu0 0.0
    %460 = vmatprep.subr.mxu0 0.0
    %461 = vmatpush1.msra.mxu0 0.0
    %462 = vmatprep.subr.mxu0 0.0
    %463 = vmatpush1.msra.mxu0 0.0
    %464 = vmatprep.subr.mxu0 0.0
    %465 = vmatpush1.msra.mxu0 0.0
    %466 = vmatprep.subr.mxu0 0.0
    %467 = vmatpush1.msra.mxu0 0.0
    %468 = vmatprep.subr.mxu0 0.0
    %469 = vmatpush1.msra.mxu0 0.0
    %470 = vmatprep.subr.mxu0 0.0
    %471 = vmatpush1.msra.mxu0 0.0
    %472 = vmatprep.subr.mxu0 0.0
    %473 = vmatpush1.msra.mxu0 0.0
    %474 = vmatprep.subr.mxu0 0.0
    %475 = vmatpush1.msra.mxu0 0.0
    %476 = vmatprep.subr.mxu0 0.0
    %477 = vmatpush1.msra.mxu0 0.0
    %478 = vmatprep.mubr.f32.mxu0 0.0
    %479 = vmatmul.mubr.f32.gmra.mrb[0].mxu0 %v413
    %v480 = vpop.f32.mrb[0].mxu0
    %v481 = vadd.f32 0.0, %v480
    %v482 = vpop.f32.mrb[0].mxu0
    %v483 = vadd.f32 0.0, %v482
    %484 = vdwg.mxu0
    %485 = vmatprep.subr.mxu0 0.0
    %486 = vmatpush1.msra.mxu0 %v115
    %487 = vmatprep.subr.mxu0 0.0
    %488 = vmatpush1.msra.mxu0 %v118
    %489 = vmatprep.subr.mxu0 0.0
    %490 = vmatpush1.msra.mxu0 %v121
    %491 = vmatprep.subr.mxu0 0.0
    %492 = vmatpush1.msra.mxu0 %v124
    %493 = vmatprep.subr.mxu0 0.0
    %494 = vmatpush1.msra.mxu0 %v127
    %495 = vmatprep.subr.mxu0 0.0
    %496 = vmatpush1.msra.mxu0 %v130
    %497 = vmatprep.subr.mxu0 0.0
    %498 = vmatpush1.msra.mxu0 %v133
    %499 = vmatprep.subr.mxu0 0.0
    %500 = vmatpush1.msra.mxu0 %v136
    %501 = vmatprep.subr.mxu0 0.0
    %502 = vmatpush1.msra.mxu0 %v139
    %503 = vmatprep.subr.mxu0 0.0
    %504 = vmatpush1.msra.mxu0 %v142
    %505 = vmatprep.subr.mxu0 0.0
    %506 = vmatpush1.msra.mxu0 %v145
    %507 = vmatprep.subr.mxu0 0.0
    %508 = vmatpush1.msra.mxu0 %v148
    %509 = vmatprep.subr.mxu0 0.0
    %510 = vmatpush1.msra.mxu0 %v151
    %511 = vmatprep.subr.mxu0 0.0
    %512 = vmatpush1.msra.mxu0 %v154
    %513 = vmatprep.subr.mxu0 0.0
    %514 = vmatpush1.msra.mxu0 %v157
    %515 = vmatprep.subr.mxu0 0.0
    %516 = vmatpush1.msra.mxu0 %v160
    %517 = vmatprep.subr.mxu0 0.0
    %518 = vmatpush1.msra.mxu0 0.0
    %519 = vmatprep.subr.mxu0 0.0
    %520 = vmatpush1.msra.mxu0 0.0
    %521 = vmatprep.subr.mxu0 0.0
    %522 = vmatpush1.msra.mxu0 0.0
    %523 = vmatprep.subr.mxu0 0.0
    %524 = vmatpush1.msra.mxu0 0.0
    %525 = vmatprep.subr.mxu0 0.0
    %526 = vmatpush1.msra.mxu0 0.0
    %527 = vmatprep.subr.mxu0 0.0
    %528 = vmatpush1.msra.mxu0 0.0
    %529 = vmatprep.subr.mxu0 0.0
    %530 = vmatpush1.msra.mxu0 0.0
    %531 = vmatprep.subr.mxu0 0.0
    %532 = vmatpush1.msra.mxu0 0.0
    %533 = vmatprep.subr.mxu0 0.0
    %534 = vmatpush1.msra.mxu0 0.0
    %535 = vmatprep.subr.mxu0 0.0
    %536 = vmatpush1.msra.mxu0 0.0
    %537 = vmatprep.subr.mxu0 0.0
    %538 = vmatpush1.msra.mxu0 0.0
    %539 = vmatprep.subr.mxu0 0.0
    %540 = vmatpush1.msra.mxu0 0.0
    %541 = vmatprep.subr.mxu0 0.0
    %542 = vmatpush1.msra.mxu0 0.0
    %543 = vmatprep.subr.mxu0 0.0
    %544 = vmatpush1.msra.mxu0 0.0
    %545 = vmatprep.subr.mxu0 0.0
    %546 = vmatpush1.msra.mxu0 0.0
    %547 = vmatprep.subr.mxu0 0.0
    %548 = vmatpush1.msra.mxu0 0.0
    %549 = vmatprep.mubr.f32.mxu0 0.0
    %550 = vmatmul.mubr.f32.gmra.mrb[0].mxu0 %v413
    %v551 = vpop.f32.mrb[0].mxu0
    %v552 = vadd.f32 0.0, %v551
    %v553 = vpop.f32.mrb[0].mxu0
    %554 = vdwg.mxu0
    %v555 = vadd.f32 %v481, %v248
    %v556 = vlaneseq
    %v557 = vshrl.u32 %v556, 7
    %v558 = vsub.s32 2, %v557
    %v559 = vrot.slane %v177, %v558
    %v561 = vadd.f32 %v555, %v559
    %v562 = vxor.u32 %v561, 2147483648
    %v563 = vmul.f32 %v562, 1.442695
    %v564 = vpow.pop %v563
    %v565 = vadd.f32 %v564, 1.0
    %v566 = vrcp.pop %v565
    %v567 = vmul.f32 1.0, %v566
    %v568 = vadd.f32 %v483, %v317
    %v569 = vlaneseq
    %v570 = vshrl.u32 %v569, 7
    %v571 = vsub.s32 3, %v570
    %v572 = vrot.slane %v177, %v571
    %v574 = vadd.f32 %v568, %v572
    %v575 = vxor.u32 %v574, 2147483648
    %v576 = vmul.f32 %v575, 1.442695
    %v577 = vpow.pop %v576
    %v578 = vadd.f32 %v577, 1.0
    %v579 = vrcp.pop %v578
    %v580 = vmul.f32 1.0, %v579
    %v581 = vlaneseq
    %v582 = vshrl.u32 %v581, 7
    %v583 = vsub.s32 4, %v582
    %v584 = vrot.slane %v177, %v583
    %v586 = vadd.f32 %v552, %v584
    %v587 = vlaneseq
    %v588 = vshrl.u32 %v587, 7
    %v589 = vsub.s32 5, %v588
    %v590 = vrot.slane %v177, %v589
    %v592 = vadd.f32 %v319, %v590
    %v593 = vmul.f32 %v567, %v592
    %v594 = vadd.f32 %v586, %v593
    %v595 = vtanh.pop %v594
    %v596 = vsub.f32 1.0, %v580
    %v597 = vmul.f32 %v596, %v595
    %v598 = vmul.f32 %v580, %v178
    %v599 = vadd.f32 %v597, %v598
    %v600 = vlaneseq
    %v601 = vshrl.u32 %v600, 7
    %v602 = vsub.s32 6, %v601
    %v603 = vrot.slane %v177, %v602
    %605 = vmatprep.subr.mxu0 0.0
    %606 = vmatpush1.msra.mxu0 %v161
    %607 = vmatprep.subr.mxu0 0.0
    %608 = vmatpush1.msra.mxu0 %v162
    %609 = vmatprep.subr.mxu0 0.0
    %610 = vmatpush1.msra.mxu0 %v163
    %611 = vmatprep.subr.mxu0 0.0
    %612 = vmatpush1.msra.mxu0 %v164
    %613 = vmatprep.subr.mxu0 0.0
    %614 = vmatpush1.msra.mxu0 %v165
    %615 = vmatprep.subr.mxu0 0.0
    %616 = vmatpush1.msra.mxu0 %v166
    %617 = vmatprep.subr.mxu0 0.0
    %618 = vmatpush1.msra.mxu0 %v167
    %619 = vmatprep.subr.mxu0 0.0
    %620 = vmatpush1.msra.mxu0 %v168
    %621 = vmatprep.subr.mxu0 0.0
    %622 = vmatpush1.msra.mxu0 %v169
    %623 = vmatprep.subr.mxu0 0.0
    %624 = vmatpush1.msra.mxu0 %v170
    %625 = vmatprep.subr.mxu0 0.0
    %626 = vmatpush1.msra.mxu0 %v171
    %627 = vmatprep.subr.mxu0 0.0
    %628 = vmatpush1.msra.mxu0 %v172
    %629 = vmatprep.subr.mxu0 0.0
    %630 = vmatpush1.msra.mxu0 %v173
    %631 = vmatprep.subr.mxu0 0.0
    %632 = vmatpush1.msra.mxu0 %v174
    %633 = vmatprep.subr.mxu0 0.0
    %634 = vmatpush1.msra.mxu0 %v175
    %635 = vmatprep.subr.mxu0 0.0
    %636 = vmatpush1.msra.mxu0 %v176
    %637 = vmatprep.subr.mxu0 0.0
    %638 = vmatpush1.msra.mxu0 0.0
    %639 = vmatprep.subr.mxu0 0.0
    %640 = vmatpush1.msra.mxu0 0.0
    %641 = vmatprep.subr.mxu0 0.0
    %642 = vmatpush1.msra.mxu0 0.0
    %643 = vmatprep.subr.mxu0 0.0
    %644 = vmatpush1.msra.mxu0 0.0
    %645 = vmatprep.subr.mxu0 0.0
    %646 = vmatpush1.msra.mxu0 0.0
    %647 = vmatprep.subr.mxu0 0.0
    %648 = vmatpush1.msra.mxu0 0.0
    %649 = vmatprep.subr.mxu0 0.0
    %650 = vmatpush1.msra.mxu0 0.0
    %651 = vmatprep.subr.mxu0 0.0
    %652 = vmatpush1.msra.mxu0 0.0
    %653 = vmatprep.subr.mxu0 0.0
    %654 = vmatpush1.msra.mxu0 0.0
    %655 = vmatprep.subr.mxu0 0.0
    %656 = vmatpush1.msra.mxu0 0.0
    %657 = vmatprep.subr.mxu0 0.0
    %658 = vmatpush1.msra.mxu0 0.0
    %659 = vmatprep.subr.mxu0 0.0
    %660 = vmatpush1.msra.mxu0 0.0
    %661 = vmatprep.subr.mxu0 0.0
    %662 = vmatpush1.msra.mxu0 0.0
    %663 = vmatprep.subr.mxu0 0.0
    %664 = vmatpush1.msra.mxu0 0.0
    %665 = vmatprep.subr.mxu0 0.0
    %666 = vmatpush1.msra.mxu0 0.0
    %667 = vmatprep.subr.mxu0 0.0
    %668 = vmatpush1.msra.mxu0 0.0
    %669 = vmatprep.mubr.f32.mxu0 0.0
    %670 = vmatmul.mubr.f32.gmra.mrb[0].mxu0 %v599
    %v671 = vpop.f32.mrb[0].mxu0
    %v672 = vadd.f32 %v603, %v671
    %v673 = vpop.f32.mrb[0].mxu0
    %674 = vdwg.mxu0
    %v675 = vsel %vm323, %v672, -inf
    %676 = vmax.xlane.f32.xlu0 %v675
    %v677 = vpop.xlane.xlu0 %676
    %v678 = vsub.f32 %v672, %v677
    %v679 = vmul.f32 %v678, 1.442695
    %v680 = vpow.pop %v679
    %v681 = vsel %vm323, %v680, 0.0
    %682 = vadd.xlane.f32.xlu0 %v681
    %v683 = vpop.xlane.xlu0 %682
    %v684 = vlog2.pop %v683
    %v685 = vmul.f32 %v684, 0.6931472
    %v686 = vadd.f32 %v677, %v685
    %v687 = vsub.f32 %v672, %v686
    %688 = vmatprep.subr.mxu0 %v50
    %689 = vmatpush1.msra.mxu0 %v49
    %690 = vmatprep.subr.mxu0 %v54
    %691 = vmatpush1.msra.mxu0 %v53
    %692 = vmatprep.subr.mxu0 %v58
    %693 = vmatpush1.msra.mxu0 %v57
    %694 = vmatprep.subr.mxu0 %v62
    %695 = vmatpush1.msra.mxu0 %v61
    %696 = vmatprep.subr.mxu0 %v66
    %697 = vmatpush1.msra.mxu0 %v65
    %698 = vmatprep.subr.mxu0 %v70
    %699 = vmatpush1.msra.mxu0 %v69
    %700 = vmatprep.subr.mxu0 %v74
    %701 = vmatpush1.msra.mxu0 %v73
    %702 = vmatprep.subr.mxu0 %v78
    %703 = vmatpush1.msra.mxu0 %v77
    %704 = vmatprep.subr.mxu0 %v82
    %705 = vmatpush1.msra.mxu0 %v81
    %706 = vmatprep.subr.mxu0 %v86
    %707 = vmatpush1.msra.mxu0 %v85
    %708 = vmatprep.subr.mxu0 %v90
    %709 = vmatpush1.msra.mxu0 %v89
    %710 = vmatprep.subr.mxu0 %v94
    %711 = vmatpush1.msra.mxu0 %v93
    %712 = vmatprep.subr.mxu0 %v98
    %713 = vmatpush1.msra.mxu0 %v97
    %714 = vmatprep.subr.mxu0 %v102
    %715 = vmatpush1.msra.mxu0 %v101
    %716 = vmatprep.subr.mxu0 %v106
    %717 = vmatpush1.msra.mxu0 %v105
    %718 = vmatprep.subr.mxu0 %v110
    %719 = vmatpush1.msra.mxu0 %v109
    %720 = vmatprep.subr.mxu0 0.0
    %721 = vmatpush1.msra.mxu0 0.0
    %722 = vmatprep.subr.mxu0 0.0
    %723 = vmatpush1.msra.mxu0 0.0
    %724 = vmatprep.subr.mxu0 0.0
    %725 = vmatpush1.msra.mxu0 0.0
    %726 = vmatprep.subr.mxu0 0.0
    %727 = vmatpush1.msra.mxu0 0.0
    %728 = vmatprep.subr.mxu0 0.0
    %729 = vmatpush1.msra.mxu0 0.0
    %730 = vmatprep.subr.mxu0 0.0
    %731 = vmatpush1.msra.mxu0 0.0
    %732 = vmatprep.subr.mxu0 0.0
    %733 = vmatpush1.msra.mxu0 0.0
    %734 = vmatprep.subr.mxu0 0.0
    %735 = vmatpush1.msra.mxu0 0.0
    %736 = vmatprep.subr.mxu0 0.0
    %737 = vmatpush1.msra.mxu0 0.0
    %738 = vmatprep.subr.mxu0 0.0
    %739 = vmatpush1.msra.mxu0 0.0
    %740 = vmatprep.subr.mxu0 0.0
    %741 = vmatpush1.msra.mxu0 0.0
    %742 = vmatprep.subr.mxu0 0.0
    %743 = vmatpush1.msra.mxu0 0.0
    %744 = vmatprep.subr.mxu0 0.0
    %745 = vmatpush1.msra.mxu0 0.0
    %746 = vmatprep.subr.mxu0 0.0
    %747 = vmatpush1.msra.mxu0 0.0
    %748 = vmatprep.subr.mxu0 0.0
    %749 = vmatpush1.msra.mxu0 0.0
    %750 = vmatprep.subr.mxu0 0.0
    %751 = vmatpush1.msra.mxu0 0.0
    %752 = vmatprep.mubr.f32.mxu0 0.0
    %753 = vmatmul.mubr.f32.gmra.mrb[0].mxu0 %v599
    %v754 = vpop.f32.mrb[0].mxu0
    %v755 = vadd.f32 0.0, %v754
    %v756 = vpop.f32.mrb[0].mxu0
    %v757 = vadd.f32 0.0, %v756
    %758 = vdwg.mxu0
    %759 = vmatprep.subr.mxu0 %v52
    %760 = vmatpush1.msra.mxu0 %v51
    %761 = vmatprep.subr.mxu0 %v56
    %762 = vmatpush1.msra.mxu0 %v55
    %763 = vmatprep.subr.mxu0 %v60
    %764 = vmatpush1.msra.mxu0 %v59
    %765 = vmatprep.subr.mxu0 %v64
    %766 = vmatpush1.msra.mxu0 %v63
    %767 = vmatprep.subr.mxu0 %v68
    %768 = vmatpush1.msra.mxu0 %v67
    %769 = vmatprep.subr.mxu0 %v72
    %770 = vmatpush1.msra.mxu0 %v71
    %771 = vmatprep.subr.mxu0 %v76
    %772 = vmatpush1.msra.mxu0 %v75
    %773 = vmatprep.subr.mxu0 %v80
    %774 = vmatpush1.msra.mxu0 %v79
    %775 = vmatprep.subr.mxu0 %v84
    %776 = vmatpush1.msra.mxu0 %v83
    %777 = vmatprep.subr.mxu0 %v88
    %778 = vmatpush1.msra.mxu0 %v87
    %779 = vmatprep.subr.mxu0 %v92
    %780 = vmatpush1.msra.mxu0 %v91
    %781 = vmatprep.subr.mxu0 %v96
    %782 = vmatpush1.msra.mxu0 %v95
    %783 = vmatprep.subr.mxu0 %v100
    %784 = vmatpush1.msra.mxu0 %v99
    %785 = vmatprep.subr.mxu0 %v104
    %786 = vmatpush1.msra.mxu0 %v103
    %787 = vmatprep.subr.mxu0 %v108
    %788 = vmatpush1.msra.mxu0 %v107
    %789 = vmatprep.subr.mxu0 %v112
    %790 = vmatpush1.msra.mxu0 %v111
    %791 = vmatprep.subr.mxu0 0.0
    %792 = vmatpush1.msra.mxu0 0.0
    %793 = vmatprep.subr.mxu0 0.0
    %794 = vmatpush1.msra.mxu0 0.0
    %795 = vmatprep.subr.mxu0 0.0
    %796 = vmatpush1.msra.mxu0 0.0
    %797 = vmatprep.subr.mxu0 0.0
    %798 = vmatpush1.msra.mxu0 0.0
    %799 = vmatprep.subr.mxu0 0.0
    %800 = vmatpush1.msra.mxu0 0.0
    %801 = vmatprep.subr.mxu0 0.0
    %802 = vmatpush1.msra.mxu0 0.0
    %803 = vmatprep.subr.mxu0 0.0
    %804 = vmatpush1.msra.mxu0 0.0
    %805 = vmatprep.subr.mxu0 0.0
    %806 = vmatpush1.msra.mxu0 0.0
    %807 = vmatprep.subr.mxu0 0.0
    %808 = vmatpush1.msra.mxu0 0.0
    %809 = vmatprep.subr.mxu0 0.0
    %810 = vmatpush1.msra.mxu0 0.0
    %811 = vmatprep.subr.mxu0 0.0
    %812 = vmatpush1.msra.mxu0 0.0
    %813 = vmatprep.subr.mxu0 0.0
    %814 = vmatpush1.msra.mxu0 0.0
    %815 = vmatprep.subr.mxu0 0.0
    %816 = vmatpush1.msra.mxu0 0.0
    %817 = vmatprep.subr.mxu0 0.0
    %818 = vmatpush1.msra.mxu0 0.0
    %819 = vmatprep.subr.mxu0 0.0
    %820 = vmatpush1.msra.mxu0 0.0
    %821 = vmatprep.subr.mxu0 0.0
    %822 = vmatpush1.msra.mxu0 0.0
    %823 = vmatprep.mubr.f32.mxu0 0.0
    %824 = vmatmul.mubr.f32.gmra.mrb[0].mxu0 %v599
    %v825 = vpop.f32.mrb[0].mxu0
    %v826 = vadd.f32 0.0, %v825
    %v827 = vpop.f32.mrb[0].mxu0
    %v828 = vadd.f32 0.0, %v827
    %829 = vdwg.mxu0
    %v831 = vrot.slane %v755, 7
    %v833 = vadd.f32 %v31, %v831
    %v834 = vlaneseq
    %v835 = vshrl.u32 %v834, 7
    %v836 = vsub.s32 0, %v835
    %v837 = vrot.slane %v177, %v836
    %v839 = vadd.f32 %v833, %v837
    %vm840 = vcmask 1041409
    %v841 = vsel %vm840, %v839, -inf
    %842 = vmax.xlane.f32.xlu0 %v841
    %v843 = vpop.xlane.xlu0 %842
    %v844 = vsub.f32 %v839, %v843
    %v845 = vmul.f32 %v844, 1.442695
    %v846 = vpow.pop %v845
    %v847 = vsel %vm840, %v846, 0.0
    %848 = vadd.xlane.f32.xlu0 %v847
    %v849 = vpop.xlane.xlu0 %848
    %v850 = vrcp.pop %v849
    %v851 = vmul.f32 %v846, %v850
    %v853 = vrot.slane %v851, 1
    %855 = vmatprep.subr.mxu0 0.0
    %856 = vmatpush1.msra.mxu0 %v33
    %857 = vmatprep.subr.mxu0 0.0
    %858 = vmatpush1.msra.mxu0 %v34
    %859 = vmatprep.subr.mxu0 0.0
    %860 = vmatpush1.msra.mxu0 %v35
    %861 = vmatprep.subr.mxu0 0.0
    %862 = vmatpush1.msra.mxu0 %v36
    %863 = vmatprep.subr.mxu0 0.0
    %864 = vmatpush1.msra.mxu0 %v37
    %865 = vmatprep.subr.mxu0 0.0
    %866 = vmatpush1.msra.mxu0 %v38
    %867 = vmatprep.subr.mxu0 0.0
    %868 = vmatpush1.msra.mxu0 %v39
    %869 = vmatprep.subr.mxu0 0.0
    %870 = vmatpush1.msra.mxu0 %v40
    %871 = vmatprep.subr.mxu0 0.0
    %872 = vmatpush1.msra.mxu0 %v41
    %873 = vmatprep.subr.mxu0 0.0
    %874 = vmatpush1.msra.mxu0 %v42
    %875 = vmatprep.subr.mxu0 0.0
    %876 = vmatpush1.msra.mxu0 %v43
    %877 = vmatprep.subr.mxu0 0.0
    %878 = vmatpush1.msra.mxu0 %v44
    %879 = vmatprep.subr.mxu0 0.0
    %880 = vmatpush1.msra.mxu0 %v45
    %881 = vmatprep.subr.mxu0 0.0
    %882 = vmatpush1.msra.mxu0 %v46
    %883 = vmatprep.subr.mxu0 0.0
    %884 = vmatpush1.msra.mxu0 %v47
    %885 = vmatprep.subr.mxu0 0.0
    %886 = vmatpush1.msra.mxu0 %v48
    %887 = vmatprep.subr.mxu0 0.0
    %888 = vmatpush1.msra.mxu0 0.0
    %889 = vmatprep.subr.mxu0 0.0
    %890 = vmatpush1.msra.mxu0 0.0
    %891 = vmatprep.subr.mxu0 0.0
    %892 = vmatpush1.msra.mxu0 0.0
    %893 = vmatprep.subr.mxu0 0.0
    %894 = vmatpush1.msra.mxu0 0.0
    %895 = vmatprep.subr.mxu0 0.0
    %896 = vmatpush1.msra.mxu0 0.0
    %897 = vmatprep.subr.mxu0 0.0
    %898 = vmatpush1.msra.mxu0 0.0
    %899 = vmatprep.subr.mxu0 0.0
    %900 = vmatpush1.msra.mxu0 0.0
    %901 = vmatprep.subr.mxu0 0.0
    %902 = vmatpush1.msra.mxu0 0.0
    %903 = vmatprep.subr.mxu0 0.0
    %904 = vmatpush1.msra.mxu0 0.0
    %905 = vmatprep.subr.mxu0 0.0
    %906 = vmatpush1.msra.mxu0 0.0
    %907 = vmatprep.subr.mxu0 0.0
    %908 = vmatpush1.msra.mxu0 0.0
    %909 = vmatprep.subr.mxu0 0.0
    %910 = vmatpush1.msra.mxu0 0.0
    %911 = vmatprep.subr.mxu0 0.0
    %912 = vmatpush1.msra.mxu0 0.0
    %913 = vmatprep.subr.mxu0 0.0
    %914 = vmatpush1.msra.mxu0 0.0
    %915 = vmatprep.subr.mxu0 0.0
    %916 = vmatpush1.msra.mxu0 0.0
    %917 = vmatprep.subr.mxu0 0.0
    %918 = vmatpush1.msra.mxu0 0.0
    %919 = vmatprep.mubr.f32.mxu0 0.0
    %920 = vmatmul.mubr.f32.gmra.mrb[0].mxu0 %v853
    %v921 = vpop.f32.mrb[0].mxu0
    %v922 = vadd.f32 0.0, %v921
    %v923 = vpop.f32.mrb[0].mxu0
    %924 = vdwg.mxu0
    %v926 = vrot.slane %v922, 7
    %v928 = vadd.f32 %v32, %v926
    %v929 = vadd.f32 %v928, %v410
    %v930 = vmax.f32 %v929, 0.0
    %v932 = vrot.slane %v930, 1
    %934 = vmatprep.subr.mxu0 %v114
    %935 = vmatpush1.msra.mxu0 %v113
    %936 = vmatprep.subr.mxu0 %v117
    %937 = vmatpush1.msra.mxu0 %v116
    %938 = vmatprep.subr.mxu0 %v120
    %939 = vmatpush1.msra.mxu0 %v119
    %940 = vmatprep.subr.mxu0 %v123
    %941 = vmatpush1.msra.mxu0 %v122
    %942 = vmatprep.subr.mxu0 %v126
    %943 = vmatpush1.msra.mxu0 %v125
    %944 = vmatprep.subr.mxu0 %v129
    %945 = vmatpush1.msra.mxu0 %v128
    %946 = vmatprep.subr.mxu0 %v132
    %947 = vmatpush1.msra.mxu0 %v131
    %948 = vmatprep.subr.mxu0 %v135
    %949 = vmatpush1.msra.mxu0 %v134
    %950 = vmatprep.subr.mxu0 %v138
    %951 = vmatpush1.msra.mxu0 %v137
    %952 = vmatprep.subr.mxu0 %v141
    %953 = vmatpush1.msra.mxu0 %v140
    %954 = vmatprep.subr.mxu0 %v144
    %955 = vmatpush1.msra.mxu0 %v143
    %956 = vmatprep.subr.mxu0 %v147
    %957 = vmatpush1.msra.mxu0 %v146
    %958 = vmatprep.subr.mxu0 %v150
    %959 = vmatpush1.msra.mxu0 %v149
    %960 = vmatprep.subr.mxu0 %v153
    %961 = vmatpush1.msra.mxu0 %v152
    %962 = vmatprep.subr.mxu0 %v156
    %963 = vmatpush1.msra.mxu0 %v155
    %964 = vmatprep.subr.mxu0 %v159
    %965 = vmatpush1.msra.mxu0 %v158
    %966 = vmatprep.subr.mxu0 0.0
    %967 = vmatpush1.msra.mxu0 0.0
    %968 = vmatprep.subr.mxu0 0.0
    %969 = vmatpush1.msra.mxu0 0.0
    %970 = vmatprep.subr.mxu0 0.0
    %971 = vmatpush1.msra.mxu0 0.0
    %972 = vmatprep.subr.mxu0 0.0
    %973 = vmatpush1.msra.mxu0 0.0
    %974 = vmatprep.subr.mxu0 0.0
    %975 = vmatpush1.msra.mxu0 0.0
    %976 = vmatprep.subr.mxu0 0.0
    %977 = vmatpush1.msra.mxu0 0.0
    %978 = vmatprep.subr.mxu0 0.0
    %979 = vmatpush1.msra.mxu0 0.0
    %980 = vmatprep.subr.mxu0 0.0
    %981 = vmatpush1.msra.mxu0 0.0
    %982 = vmatprep.subr.mxu0 0.0
    %983 = vmatpush1.msra.mxu0 0.0
    %984 = vmatprep.subr.mxu0 0.0
    %985 = vmatpush1.msra.mxu0 0.0
    %986 = vmatprep.subr.mxu0 0.0
    %987 = vmatpush1.msra.mxu0 0.0
    %988 = vmatprep.subr.mxu0 0.0
    %989 = vmatpush1.msra.mxu0 0.0
    %990 = vmatprep.subr.mxu0 0.0
    %991 = vmatpush1.msra.mxu0 0.0
    %992 = vmatprep.subr.mxu0 0.0
    %993 = vmatpush1.msra.mxu0 0.0
    %994 = vmatprep.subr.mxu0 0.0
    %995 = vmatpush1.msra.mxu0 0.0
    %996 = vmatprep.subr.mxu0 0.0
    %997 = vmatpush1.msra.mxu0 0.0
    %998 = vmatprep.mubr.f32.mxu0 0.0
    %999 = vmatmul.mubr.f32.gmra.mrb[0].mxu0 %v932
    %v1000 = vpop.f32.mrb[0].mxu0
    %v1001 = vadd.f32 0.0, %v1000
    %v1002 = vpop.f32.mrb[0].mxu0
    %v1003 = vadd.f32 0.0, %v1002
    %1004 = vdwg.mxu0
    %1005 = vmatprep.subr.mxu0 0.0
    %1006 = vmatpush1.msra.mxu0 %v115
    %1007 = vmatprep.subr.mxu0 0.0
    %1008 = vmatpush1.msra.mxu0 %v118
    %1009 = vmatprep.subr.mxu0 0.0
    %1010 = vmatpush1.msra.mxu0 %v121
    %1011 = vmatprep.subr.mxu0 0.0
    %1012 = vmatpush1.msra.mxu0 %v124
    %1013 = vmatprep.subr.mxu0 0.0
    %1014 = vmatpush1.msra.mxu0 %v127
    %1015 = vmatprep.subr.mxu0 0.0
    %1016 = vmatpush1.msra.mxu0 %v130
    %1017 = vmatprep.subr.mxu0 0.0
    %1018 = vmatpush1.msra.mxu0 %v133
    %1019 = vmatprep.subr.mxu0 0.0
    %1020 = vmatpush1.msra.mxu0 %v136
    %1021 = vmatprep.subr.mxu0 0.0
    %1022 = vmatpush1.msra.mxu0 %v139
    %1023 = vmatprep.subr.mxu0 0.0
    %1024 = vmatpush1.msra.mxu0 %v142
    %1025 = vmatprep.subr.mxu0 0.0
    %1026 = vmatpush1.msra.mxu0 %v145
    %1027 = vmatprep.subr.mxu0 0.0
    %1028 = vmatpush1.msra.mxu0 %v148
    %1029 = vmatprep.subr.mxu0 0.0
    %1030 = vmatpush1.msra.mxu0 %v151
    %1031 = vmatprep.subr.mxu0 0.0
    %1032 = vmatpush1.msra.mxu0 %v154
    %1033 = vmatprep.subr.mxu0 0.0
    %1034 = vmatpush1.msra.mxu0 %v157
    %1035 = vmatprep.subr.mxu0 0.0
    %1036 = vmatpush1.msra.mxu0 %v160
    %1037 = vmatprep.subr.mxu0 0.0
    %1038 = vmatpush1.msra.mxu0 0.0
    %1039 = vmatprep.subr.mxu0 0.0
    %1040 = vmatpush1.msra.mxu0 0.0
    %1041 = vmatprep.subr.mxu0 0.0
    %1042 = vmatpush1.msra.mxu0 0.0
    %1043 = vmatprep.subr.mxu0 0.0
    %1044 = vmatpush1.msra.mxu0 0.0
    %1045 = vmatprep.subr.mxu0 0.0
    %1046 = vmatpush1.msra.mxu0 0.0
    %1047 = vmatprep.subr.mxu0 0.0
    %1048 = vmatpush1.msra.mxu0 0.0
    %1049 = vmatprep.subr.mxu0 0.0
    %1050 = vmatpush1.msra.mxu0 0.0
    %1051 = vmatprep.subr.mxu0 0.0
    %1052 = vmatpush1.msra.mxu0 0.0
    %1053 = vmatprep.subr.mxu0 0.0
    %1054 = vmatpush1.msra.mxu0 0.0
    %1055 = vmatprep.subr.mxu0 0.0
    %1056 = vmatpush1.msra.mxu0 0.0
    %1057 = vmatprep.subr.mxu0 0.0
    %1058 = vmatpush1.msra.mxu0 0.0
    %1059 = vmatprep.subr.mxu0 0.0
    %1060 = vmatpush1.msra.mxu0 0.0
    %1061 = vmatprep.subr.mxu0 0.0
    %1062 = vmatpush1.msra.mxu0 0.0
    %1063 = vmatprep.subr.mxu0 0.0
    %1064 = vmatpush1.msra.mxu0 0.0
    %1065 = vmatprep.subr.mxu0 0.0
    %1066 = vmatpush1.msra.mxu0 0.0
    %1067 = vmatprep.subr.mxu0 0.0
    %1068 = vmatpush1.msra.mxu0 0.0
    %1069 = vmatprep.mubr.f32.mxu0 0.0
    %1070 = vmatmul.mubr.f32.gmra.mrb[0].mxu0 %v932
    %v1071 = vpop.f32.mrb[0].mxu0
    %v1072 = vadd.f32 0.0, %v1071
    %v1073 = vpop.f32.mrb[0].mxu0
    %1074 = vdwg.mxu0
    %v1075 = vadd.f32 %v1001, %v757
    %v1076 = vadd.f32 %v1075, %v559
    %v1077 = vxor.u32 %v1076, 2147483648
    %v1078 = vmul.f32 %v1077, 1.442695
    %v1079 = vpow.pop %v1078
    %v1080 = vadd.f32 %v1079, 1.0
    %v1081 = vrcp.pop %v1080
    %v1082 = vmul.f32 1.0, %v1081
    %v1083 = vadd.f32 %v1003, %v826
    %v1084 = vadd.f32 %v1083, %v572
    %v1085 = vxor.u32 %v1084, 2147483648
    %v1086 = vmul.f32 %v1085, 1.442695
    %v1087 = vpow.pop %v1086
    %v1088 = vadd.f32 %v1087, 1.0
    %v1089 = vrcp.pop %v1088
    %v1090 = vmul.f32 1.0, %v1089
    %v1091 = vadd.f32 %v1072, %v584
    %v1092 = vadd.f32 %v828, %v590
    %v1093 = vmul.f32 %v1082, %v1092
    %v1094 = vadd.f32 %v1091, %v1093
    %v1095 = vtanh.pop %v1094
    %v1096 = vsub.f32 1.0, %v1090
    %v1097 = vmul.f32 %v1096, %v1095
    %v1098 = vmul.f32 %v1090, %v599
    %v1099 = vadd.f32 %v1097, %v1098
    %1100 = vmatprep.subr.mxu0 0.0
    %1101 = vmatpush1.msra.mxu0 %v161
    %1102 = vmatprep.subr.mxu0 0.0
    %1103 = vmatpush1.msra.mxu0 %v162
    %1104 = vmatprep.subr.mxu0 0.0
    %1105 = vmatpush1.msra.mxu0 %v163
    %1106 = vmatprep.subr.mxu0 0.0
    %1107 = vmatpush1.msra.mxu0 %v164
    %1108 = vmatprep.subr.mxu0 0.0
    %1109 = vmatpush1.msra.mxu0 %v165
    %1110 = vmatprep.subr.mxu0 0.0
    %1111 = vmatpush1.msra.mxu0 %v166
    %1112 = vmatprep.subr.mxu0 0.0
    %1113 = vmatpush1.msra.mxu0 %v167
    %1114 = vmatprep.subr.mxu0 0.0
    %1115 = vmatpush1.msra.mxu0 %v168
    %1116 = vmatprep.subr.mxu0 0.0
    %1117 = vmatpush1.msra.mxu0 %v169
    %1118 = vmatprep.subr.mxu0 0.0
    %1119 = vmatpush1.msra.mxu0 %v170
    %1120 = vmatprep.subr.mxu0 0.0
    %1121 = vmatpush1.msra.mxu0 %v171
    %1122 = vmatprep.subr.mxu0 0.0
    %1123 = vmatpush1.msra.mxu0 %v172
    %1124 = vmatprep.subr.mxu0 0.0
    %1125 = vmatpush1.msra.mxu0 %v173
    %1126 = vmatprep.subr.mxu0 0.0
    %1127 = vmatpush1.msra.mxu0 %v174
    %1128 = vmatprep.subr.mxu0 0.0
    %1129 = vmatpush1.msra.mxu0 %v175
    %1130 = vmatprep.subr.mxu0 0.0
    %1131 = vmatpush1.msra.mxu0 %v176
    %1132 = vmatprep.subr.mxu0 0.0
    %1133 = vmatpush1.msra.mxu0 0.0
    %1134 = vmatprep.subr.mxu0 0.0
    %1135 = vmatpush1.msra.mxu0 0.0
    %1136 = vmatprep.subr.mxu0 0.0
    %1137 = vmatpush1.msra.mxu0 0.0
    %1138 = vmatprep.subr.mxu0 0.0
    %1139 = vmatpush1.msra.mxu0 0.0
    %1140 = vmatprep.subr.mxu0 0.0
    %1141 = vmatpush1.msra.mxu0 0.0
    %1142 = vmatprep.subr.mxu0 0.0
    %1143 = vmatpush1.msra.mxu0 0.0
    %1144 = vmatprep.subr.mxu0 0.0
    %1145 = vmatpush1.msra.mxu0 0.0
    %1146 = vmatprep.subr.mxu0 0.0
    %1147 = vmatpush1.msra.mxu0 0.0
    %1148 = vmatprep.subr.mxu0 0.0
    %1149 = vmatpush1.msra.mxu0 0.0
    %1150 = vmatprep.subr.mxu0 0.0
    %1151 = vmatpush1.msra.mxu0 0.0
    %1152 = vmatprep.subr.mxu0 0.0
    %1153 = vmatpush1.msra.mxu0 0.0
    %1154 = vmatprep.subr.mxu0 0.0
    %1155 = vmatpush1.msra.mxu0 0.0
    %1156 = vmatprep.subr.mxu0 0.0
    %1157 = vmatpush1.msra.mxu0 0.0
    %1158 = vmatprep.subr.mxu0 0.0
    %1159 = vmatpush1.msra.mxu0 0.0
    %1160 = vmatprep.subr.mxu0 0.0
    %1161 = vmatpush1.msra.mxu0 0.0
    %1162 = vmatprep.subr.mxu0 0.0
    %1163 = vmatpush1.msra.mxu0 0.0
    %1164 = vmatprep.mubr.f32.mxu0 0.0
    %1165 = vmatmul.mubr.f32.gmra.mrb[0].mxu0 %v1099
    %v1166 = vpop.f32.mrb[0].mxu0
    %v1167 = vadd.f32 %v603, %v1166
    %v1168 = vpop.f32.mrb[0].mxu0
    %1169 = vdwg.mxu0
    %v1170 = vsel %vm323, %v1167, -inf
    %1171 = vmax.xlane.f32.xlu0 %v1170
    %v1172 = vpop.xlane.xlu0 %1171
    %v1173 = vsub.f32 %v1167, %v1172
    %v1174 = vmul.f32 %v1173, 1.442695
    %v1175 = vpow.pop %v1174
    %v1176 = vsel %vm323, %v1175, 0.0
    %1177 = vadd.xlane.f32.xlu0 %v1176
    %v1178 = vpop.xlane.xlu0 %1177
    %v1179 = vlog2.pop %v1178
    %v1180 = vmul.f32 %v1179, 0.6931472
    %v1181 = vadd.f32 %v1172, %v1180
    %v1182 = vsub.f32 %v1167, %v1181
    %1183 = vmatprep.subr.mxu0 %v50
    %1184 = vmatpush1.msra.mxu0 %v49
    %1185 = vmatprep.subr.mxu0 %v54
    %1186 = vmatpush1.msra.mxu0 %v53
    %1187 = vmatprep.subr.mxu0 %v58
    %1188 = vmatpush1.msra.mxu0 %v57
    %1189 = vmatprep.subr.mxu0 %v62
    %1190 = vmatpush1.msra.mxu0 %v61
    %1191 = vmatprep.subr.mxu0 %v66
    %1192 = vmatpush1.msra.mxu0 %v65
    %1193 = vmatprep.subr.mxu0 %v70
    %1194 = vmatpush1.msra.mxu0 %v69
    %1195 = vmatprep.subr.mxu0 %v74
    %1196 = vmatpush1.msra.mxu0 %v73
    %1197 = vmatprep.subr.mxu0 %v78
    %1198 = vmatpush1.msra.mxu0 %v77
    %1199 = vmatprep.subr.mxu0 %v82
    %1200 = vmatpush1.msra.mxu0 %v81
    %1201 = vmatprep.subr.mxu0 %v86
    %1202 = vmatpush1.msra.mxu0 %v85
    %1203 = vmatprep.subr.mxu0 %v90
    %1204 = vmatpush1.msra.mxu0 %v89
    %1205 = vmatprep.subr.mxu0 %v94
    %1206 = vmatpush1.msra.mxu0 %v93
    %1207 = vmatprep.subr.mxu0 %v98
    %1208 = vmatpush1.msra.mxu0 %v97
    %1209 = vmatprep.subr.mxu0 %v102
    %1210 = vmatpush1.msra.mxu0 %v101
    %1211 = vmatprep.subr.mxu0 %v106
    %1212 = vmatpush1.msra.mxu0 %v105
    %1213 = vmatprep.subr.mxu0 %v110
    %1214 = vmatpush1.msra.mxu0 %v109
    %1215 = vmatprep.subr.mxu0 0.0
    %1216 = vmatpush1.msra.mxu0 0.0
    %1217 = vmatprep.subr.mxu0 0.0
    %1218 = vmatpush1.msra.mxu0 0.0
    %1219 = vmatprep.subr.mxu0 0.0
    %1220 = vmatpush1.msra.mxu0 0.0
    %1221 = vmatprep.subr.mxu0 0.0
    %1222 = vmatpush1.msra.mxu0 0.0
    %1223 = vmatprep.subr.mxu0 0.0
    %1224 = vmatpush1.msra.mxu0 0.0
    %1225 = vmatprep.subr.mxu0 0.0
    %1226 = vmatpush1.msra.mxu0 0.0
    %1227 = vmatprep.subr.mxu0 0.0
    %1228 = vmatpush1.msra.mxu0 0.0
    %1229 = vmatprep.subr.mxu0 0.0
    %1230 = vmatpush1.msra.mxu0 0.0
    %1231 = vmatprep.subr.mxu0 0.0
    %1232 = vmatpush1.msra.mxu0 0.0
    %1233 = vmatprep.subr.mxu0 0.0
    %1234 = vmatpush1.msra.mxu0 0.0
    %1235 = vmatprep.subr.mxu0 0.0
    %1236 = vmatpush1.msra.mxu0 0.0
    %1237 = vmatprep.subr.mxu0 0.0
    %1238 = vmatpush1.msra.mxu0 0.0
    %1239 = vmatprep.subr.mxu0 0.0
    %1240 = vmatpush1.msra.mxu0 0.0
    %1241 = vmatprep.subr.mxu0 0.0
    %1242 = vmatpush1.msra.mxu0 0.0
    %1243 = vmatprep.subr.mxu0 0.0
    %1244 = vmatpush1.msra.mxu0 0.0
    %1245 = vmatprep.subr.mxu0 0.0
    %1246 = vmatpush1.msra.mxu0 0.0
    %1247 = vmatprep.mubr.f32.mxu0 0.0
    %1248 = vmatmul.mubr.f32.gmra.mrb[0].mxu0 %v1099
    %v1249 = vpop.f32.mrb[0].mxu0
    %v1250 = vadd.f32 0.0, %v1249
    %v1251 = vpop.f32.mrb[0].mxu0
    %v1252 = vadd.f32 0.0, %v1251
    %1253 = vdwg.mxu0
    %1254 = vmatprep.subr.mxu0 %v52
    %1255 = vmatpush1.msra.mxu0 %v51
    %1256 = vmatprep.subr.mxu0 %v56
    %1257 = vmatpush1.msra.mxu0 %v55
    %1258 = vmatprep.subr.mxu0 %v60
    %1259 = vmatpush1.msra.mxu0 %v59
    %1260 = vmatprep.subr.mxu0 %v64
    %1261 = vmatpush1.msra.mxu0 %v63
    %1262 = vmatprep.subr.mxu0 %v68
    %1263 = vmatpush1.msra.mxu0 %v67
    %1264 = vmatprep.subr.mxu0 %v72
    %1265 = vmatpush1.msra.mxu0 %v71
    %1266 = vmatprep.subr.mxu0 %v76
    %1267 = vmatpush1.msra.mxu0 %v75
    %1268 = vmatprep.subr.mxu0 %v80
    %1269 = vmatpush1.msra.mxu0 %v79
    %1270 = vmatprep.subr.mxu0 %v84
    %1271 = vmatpush1.msra.mxu0 %v83
    %1272 = vmatprep.subr.mxu0 %v88
    %1273 = vmatpush1.msra.mxu0 %v87
    %1274 = vmatprep.subr.mxu0 %v92
    %1275 = vmatpush1.msra.mxu0 %v91
    %1276 = vmatprep.subr.mxu0 %v96
    %1277 = vmatpush1.msra.mxu0 %v95
    %1278 = vmatprep.subr.mxu0 %v100
    %1279 = vmatpush1.msra.mxu0 %v99
    %1280 = vmatprep.subr.mxu0 %v104
    %1281 = vmatpush1.msra.mxu0 %v103
    %1282 = vmatprep.subr.mxu0 %v108
    %1283 = vmatpush1.msra.mxu0 %v107
    %1284 = vmatprep.subr.mxu0 %v112
    %1285 = vmatpush1.msra.mxu0 %v111
    %1286 = vmatprep.subr.mxu0 0.0
    %1287 = vmatpush1.msra.mxu0 0.0
    %1288 = vmatprep.subr.mxu0 0.0
    %1289 = vmatpush1.msra.mxu0 0.0
    %1290 = vmatprep.subr.mxu0 0.0
    %1291 = vmatpush1.msra.mxu0 0.0
    %1292 = vmatprep.subr.mxu0 0.0
    %1293 = vmatpush1.msra.mxu0 0.0
    %1294 = vmatprep.subr.mxu0 0.0
    %1295 = vmatpush1.msra.mxu0 0.0
    %1296 = vmatprep.subr.mxu0 0.0
    %1297 = vmatpush1.msra.mxu0 0.0
    %1298 = vmatprep.subr.mxu0 0.0
    %1299 = vmatpush1.msra.mxu0 0.0
    %1300 = vmatprep.subr.mxu0 0.0
    %1301 = vmatpush1.msra.mxu0 0.0
    %1302 = vmatprep.subr.mxu0 0.0
    %1303 = vmatpush1.msra.mxu0 0.0
    %1304 = vmatprep.subr.mxu0 0.0
    %1305 = vmatpush1.msra.mxu0 0.0
    %1306 = vmatprep.subr.mxu0 0.0
    %1307 = vmatpush1.msra.mxu0 0.0
    %1308 = vmatprep.subr.mxu0 0.0
    %1309 = vmatpush1.msra.mxu0 0.0
    %1310 = vmatprep.subr.mxu0 0.0
    %1311 = vmatpush1.msra.mxu0 0.0
    %1312 = vmatprep.subr.mxu0 0.0
    %1313 = vmatpush1.msra.mxu0 0.0
    %1314 = vmatprep.subr.mxu0 0.0
    %1315 = vmatpush1.msra.mxu0 0.0
    %1316 = vmatprep.subr.mxu0 0.0
    %1317 = vmatpush1.msra.mxu0 0.0
    %1318 = vmatprep.mubr.f32.mxu0 0.0
    %1319 = vmatmul.mubr.f32.gmra.mrb[0].mxu0 %v1099
    %v1320 = vpop.f32.mrb[0].mxu0
    %v1321 = vadd.f32 0.0, %v1320
    %v1322 = vpop.f32.mrb[0].mxu0
    %v1323 = vadd.f32 0.0, %v1322
    %1324 = vdwg.mxu0
    %v1326 = vrot.slane %v1250, 6
    %v1328 = vadd.f32 %v31, %v1326
    %v1329 = vadd.f32 %v1328, %v837
    %vm1330 = vcmask 1042434
    %v1331 = vsel %vm1330, %v1329, -inf
    %1332 = vmax.xlane.f32.xlu0 %v1331
    %v1333 = vpop.xlane.xlu0 %1332
    %v1334 = vsub.f32 %v1329, %v1333
    %v1335 = vmul.f32 %v1334, 1.442695
    %v1336 = vpow.pop %v1335
    %v1337 = vsel %vm1330, %v1336, 0.0
    %1338 = vadd.xlane.f32.xlu0 %v1337
    %v1339 = vpop.xlane.xlu0 %1338
    %v1340 = vrcp.pop %v1339
    %v1341 = vmul.f32 %v1336, %v1340
    %v1343 = vrot.slane %v1341, 2
    %1345 = vmatprep.subr.mxu0 0.0
    %1346 = vmatpush1.msra.mxu0 %v33
    %1347 = vmatprep.subr.mxu0 0.0
    %1348 = vmatpush1.msra.mxu0 %v34
    %1349 = vmatprep.subr.mxu0 0.0
    %1350 = vmatpush1.msra.mxu0 %v35
    %1351 = vmatprep.subr.mxu0 0.0
    %1352 = vmatpush1.msra.mxu0 %v36
    %1353 = vmatprep.subr.mxu0 0.0
    %1354 = vmatpush1.msra.mxu0 %v37
    %1355 = vmatprep.subr.mxu0 0.0
    %1356 = vmatpush1.msra.mxu0 %v38
    %1357 = vmatprep.subr.mxu0 0.0
    %1358 = vmatpush1.msra.mxu0 %v39
    %1359 = vmatprep.subr.mxu0 0.0
    %1360 = vmatpush1.msra.mxu0 %v40
    %1361 = vmatprep.subr.mxu0 0.0
    %1362 = vmatpush1.msra.mxu0 %v41
    %1363 = vmatprep.subr.mxu0 0.0
    %1364 = vmatpush1.msra.mxu0 %v42
    %1365 = vmatprep.subr.mxu0 0.0
    %1366 = vmatpush1.msra.mxu0 %v43
    %1367 = vmatprep.subr.mxu0 0.0
    %1368 = vmatpush1.msra.mxu0 %v44
    %1369 = vmatprep.subr.mxu0 0.0
    %1370 = vmatpush1.msra.mxu0 %v45
    %1371 = vmatprep.subr.mxu0 0.0
    %1372 = vmatpush1.msra.mxu0 %v46
    %1373 = vmatprep.subr.mxu0 0.0
    %1374 = vmatpush1.msra.mxu0 %v47
    %1375 = vmatprep.subr.mxu0 0.0
    %1376 = vmatpush1.msra.mxu0 %v48
    %1377 = vmatprep.subr.mxu0 0.0
    %1378 = vmatpush1.msra.mxu0 0.0
    %1379 = vmatprep.subr.mxu0 0.0
    %1380 = vmatpush1.msra.mxu0 0.0
    %1381 = vmatprep.subr.mxu0 0.0
    %1382 = vmatpush1.msra.mxu0 0.0
    %1383 = vmatprep.subr.mxu0 0.0
    %1384 = vmatpush1.msra.mxu0 0.0
    %1385 = vmatprep.subr.mxu0 0.0
    %1386 = vmatpush1.msra.mxu0 0.0
    %1387 = vmatprep.subr.mxu0 0.0
    %1388 = vmatpush1.msra.mxu0 0.0
    %1389 = vmatprep.subr.mxu0 0.0
    %1390 = vmatpush1.msra.mxu0 0.0
    %1391 = vmatprep.subr.mxu0 0.0
    %1392 = vmatpush1.msra.mxu0 0.0
    %1393 = vmatprep.subr.mxu0 0.0
    %1394 = vmatpush1.msra.mxu0 0.0
    %1395 = vmatprep.subr.mxu0 0.0
    %1396 = vmatpush1.msra.mxu0 0.0
    %1397 = vmatprep.subr.mxu0 0.0
    %1398 = vmatpush1.msra.mxu0 0.0
    %1399 = vmatprep.subr.mxu0 0.0
    %1400 = vmatpush1.msra.mxu0 0.0
    %1401 = vmatprep.subr.mxu0 0.0
    %1402 = vmatpush1.msra.mxu0 0.0
    %1403 = vmatprep.subr.mxu0 0.0
    %1404 = vmatpush1.msra.mxu0 0.0
    %1405 = vmatprep.subr.mxu0 0.0
    %1406 = vmatpush1.msra.mxu0 0.0
    %1407 = vmatprep.subr.mxu0 0.0
    %1408 = vmatpush1.msra.mxu0 0.0
    %1409 = vmatprep.mubr.f32.mxu0 0.0
    %1410 = vmatmul.mubr.f32.gmra.mrb[0].mxu0 %v1343
    %v1411 = vpop.f32.mrb[0].mxu0
    %v1412 = vadd.f32 0.0, %v1411
    %v1413 = vpop.f32.mrb[0].mxu0
    %1414 = vdwg.mxu0
    %v1416 = vrot.slane %v1412, 6
    %v1418 = vadd.f32 %v32, %v1416
    %v1419 = vadd.f32 %v1418, %v410
    %v1420 = vmax.f32 %v1419, 0.0
    %v1422 = vrot.slane %v1420, 2
    %1424 = vmatprep.subr.mxu0 %v114
    %1425 = vmatpush1.msra.mxu0 %v113
    %1426 = vmatprep.subr.mxu0 %v117
    %1427 = vmatpush1.msra.mxu0 %v116
    %1428 = vmatprep.subr.mxu0 %v120
    %1429 = vmatpush1.msra.mxu0 %v119
    %1430 = vmatprep.subr.mxu0 %v123
    %1431 = vmatpush1.msra.mxu0 %v122
    %1432 = vmatprep.subr.mxu0 %v126
    %1433 = vmatpush1.msra.mxu0 %v125
    %1434 = vmatprep.subr.mxu0 %v129
    %1435 = vmatpush1.msra.mxu0 %v128
    %1436 = vmatprep.subr.mxu0 %v132
    %1437 = vmatpush1.msra.mxu0 %v131
    %1438 = vmatprep.subr.mxu0 %v135
    %1439 = vmatpush1.msra.mxu0 %v134
    %1440 = vmatprep.subr.mxu0 %v138
    %1441 = vmatpush1.msra.mxu0 %v137
    %1442 = vmatprep.subr.mxu0 %v141
    %1443 = vmatpush1.msra.mxu0 %v140
    %1444 = vmatprep.subr.mxu0 %v144
    %1445 = vmatpush1.msra.mxu0 %v143
    %1446 = vmatprep.subr.mxu0 %v147
    %1447 = vmatpush1.msra.mxu0 %v146
    %1448 = vmatprep.subr.mxu0 %v150
    %1449 = vmatpush1.msra.mxu0 %v149
    %1450 = vmatprep.subr.mxu0 %v153
    %1451 = vmatpush1.msra.mxu0 %v152
    %1452 = vmatprep.subr.mxu0 %v156
    %1453 = vmatpush1.msra.mxu0 %v155
    %1454 = vmatprep.subr.mxu0 %v159
    %1455 = vmatpush1.msra.mxu0 %v158
    %1456 = vmatprep.subr.mxu0 0.0
    %1457 = vmatpush1.msra.mxu0 0.0
    %1458 = vmatprep.subr.mxu0 0.0
    %1459 = vmatpush1.msra.mxu0 0.0
    %1460 = vmatprep.subr.mxu0 0.0
    %1461 = vmatpush1.msra.mxu0 0.0
    %1462 = vmatprep.subr.mxu0 0.0
    %1463 = vmatpush1.msra.mxu0 0.0
    %1464 = vmatprep.subr.mxu0 0.0
    %1465 = vmatpush1.msra.mxu0 0.0
    %1466 = vmatprep.subr.mxu0 0.0
    %1467 = vmatpush1.msra.mxu0 0.0
    %1468 = vmatprep.subr.mxu0 0.0
    %1469 = vmatpush1.msra.mxu0 0.0
    %1470 = vmatprep.subr.mxu0 0.0
    %1471 = vmatpush1.msra.mxu0 0.0
    %1472 = vmatprep.subr.mxu0 0.0
    %1473 = vmatpush1.msra.mxu0 0.0
    %1474 = vmatprep.subr.mxu0 0.0
    %1475 = vmatpush1.msra.mxu0 0.0
    %1476 = vmatprep.subr.mxu0 0.0
    %1477 = vmatpush1.msra.mxu0 0.0
    %1478 = vmatprep.subr.mxu0 0.0
    %1479 = vmatpush1.msra.mxu0 0.0
    %1480 = vmatprep.subr.mxu0 0.0
    %1481 = vmatpush1.msra.mxu0 0.0
    %1482 = vmatprep.subr.mxu0 0.0
    %1483 = vmatpush1.msra.mxu0 0.0
    %1484 = vmatprep.subr.mxu0 0.0
    %1485 = vmatpush1.msra.mxu0 0.0
    %1486 = vmatprep.subr.mxu0 0.0
    %1487 = vmatpush1.msra.mxu0 0.0
    %1488 = vmatprep.mubr.f32.mxu0 0.0
    %1489 = vmatmul.mubr.f32.gmra.mrb[0].mxu0 %v1422
    %v1490 = vpop.f32.mrb[0].mxu0
    %v1491 = vadd.f32 0.0, %v1490
    %v1492 = vpop.f32.mrb[0].mxu0
    %v1493 = vadd.f32 0.0, %v1492
    %1494 = vdwg.mxu0
    %1495 = vmatprep.subr.mxu0 0.0
    %1496 = vmatpush1.msra.mxu0 %v115
    %1497 = vmatprep.subr.mxu0 0.0
    %1498 = vmatpush1.msra.mxu0 %v118
    %1499 = vmatprep.subr.mxu0 0.0
    %1500 = vmatpush1.msra.mxu0 %v121
    %1501 = vmatprep.subr.mxu0 0.0
    %1502 = vmatpush1.msra.mxu0 %v124
    %1503 = vmatprep.subr.mxu0 0.0
    %1504 = vmatpush1.msra.mxu0 %v127
    %1505 = vmatprep.subr.mxu0 0.0
    %1506 = vmatpush1.msra.mxu0 %v130
    %1507 = vmatprep.subr.mxu0 0.0
    %1508 = vmatpush1.msra.mxu0 %v133
    %1509 = vmatprep.subr.mxu0 0.0
    %1510 = vmatpush1.msra.mxu0 %v136
    %1511 = vmatprep.subr.mxu0 0.0
    %1512 = vmatpush1.msra.mxu0 %v139
    %1513 = vmatprep.subr.mxu0 0.0
    %1514 = vmatpush1.msra.mxu0 %v142
    %1515 = vmatprep.subr.mxu0 0.0
    %1516 = vmatpush1.msra.mxu0 %v145
    %1517 = vmatprep.subr.mxu0 0.0
    %1518 = vmatpush1.msra.mxu0 %v148
    %1519 = vmatprep.subr.mxu0 0.0
    %1520 = vmatpush1.msra.mxu0 %v151
    %1521 = vmatprep.subr.mxu0 0.0
    %1522 = vmatpush1.msra.mxu0 %v154
    %1523 = vmatprep.subr.mxu0 0.0
    %1524 = vmatpush1.msra.mxu0 %v157
    %1525 = vmatprep.subr.mxu0 0.0
    %1526 = vmatpush1.msra.mxu0 %v160
    %1527 = vmatprep.subr.mxu0 0.0
    %1528 = vmatpush1.msra.mxu0 0.0
    %1529 = vmatprep.subr.mxu0 0.0
    %1530 = vmatpush1.msra.mxu0 0.0
    %1531 = vmatprep.subr.mxu0 0.0
    %1532 = vmatpush1.msra.mxu0 0.0
    %1533 = vmatprep.subr.mxu0 0.0
    %1534 = vmatpush1.msra.mxu0 0.0
    %1535 = vmatprep.subr.mxu0 0.0
    %1536 = vmatpush1.msra.mxu0 0.0
    %1537 = vmatprep.subr.mxu0 0.0
    %1538 = vmatpush1.msra.mxu0 0.0
    %1539 = vmatprep.subr.mxu0 0.0
    %1540 = vmatpush1.msra.mxu0 0.0
    %1541 = vmatprep.subr.mxu0 0.0
    %1542 = vmatpush1.msra.mxu0 0.0
    %1543 = vmatprep.subr.mxu0 0.0
    %1544 = vmatpush1.msra.mxu0 0.0
    %1545 = vmatprep.subr.mxu0 0.0
    %1546 = vmatpush1.msra.mxu0 0.0
    %1547 = vmatprep.subr.mxu0 0.0
    %1548 = vmatpush1.msra.mxu0 0.0
    %1549 = vmatprep.subr.mxu0 0.0
    %1550 = vmatpush1.msra.mxu0 0.0
    %1551 = vmatprep.subr.mxu0 0.0
    %1552 = vmatpush1.msra.mxu0 0.0
    %1553 = vmatprep.subr.mxu0 0.0
    %1554 = vmatpush1.msra.mxu0 0.0
    %1555 = vmatprep.subr.mxu0 0.0
    %1556 = vmatpush1.msra.mxu0 0.0
    %1557 = vmatprep.subr.mxu0 0.0
    %1558 = vmatpush1.msra.mxu0 0.0
    %1559 = vmatprep.mubr.f32.mxu0 0.0
    %1560 = vmatmul.mubr.f32.gmra.mrb[0].mxu0 %v1422
    %v1561 = vpop.f32.mrb[0].mxu0
    %v1562 = vadd.f32 0.0, %v1561
    %v1563 = vpop.f32.mrb[0].mxu0
    %1564 = vdwg.mxu0
    %v1565 = vadd.f32 %v1491, %v1252
    %v1566 = vadd.f32 %v1565, %v559
    %v1567 = vxor.u32 %v1566, 2147483648
    %v1568 = vmul.f32 %v1567, 1.442695
    %v1569 = vpow.pop %v1568
    %v1570 = vadd.f32 %v1569, 1.0
    %v1571 = vrcp.pop %v1570
    %v1572 = vmul.f32 1.0, %v1571
    %v1573 = vadd.f32 %v1493, %v1321
    %v1574 = vadd.f32 %v1573, %v572
    %v1575 = vxor.u32 %v1574, 2147483648
    %v1576 = vmul.f32 %v1575, 1.442695
    %v1577 = vpow.pop %v1576
    %v1578 = vadd.f32 %v1577, 1.0
    %v1579 = vrcp.pop %v1578
    %v1580 = vmul.f32 1.0, %v1579
    %v1581 = vadd.f32 %v1562, %v584
    %v1582 = vadd.f32 %v1323, %v590
    %v1583 = vmul.f32 %v1572, %v1582
    %v1584 = vadd.f32 %v1581, %v1583
    %v1585 = vtanh.pop %v1584
    %v1586 = vsub.f32 1.0, %v1580
    %v1587 = vmul.f32 %v1586, %v1585
    %v1588 = vmul.f32 %v1580, %v1099
    %v1589 = vadd.f32 %v1587, %v1588
    %1590 = vmatprep.subr.mxu0 0.0
    %1591 = vmatpush1.msra.mxu0 %v161
    %1592 = vmatprep.subr.mxu0 0.0
    %1593 = vmatpush1.msra.mxu0 %v162
    %1594 = vmatprep.subr.mxu0 0.0
    %1595 = vmatpush1.msra.mxu0 %v163
    %1596 = vmatprep.subr.mxu0 0.0
    %1597 = vmatpush1.msra.mxu0 %v164
    %1598 = vmatprep.subr.mxu0 0.0
    %1599 = vmatpush1.msra.mxu0 %v165
    %1600 = vmatprep.subr.mxu0 0.0
    %1601 = vmatpush1.msra.mxu0 %v166
    %1602 = vmatprep.subr.mxu0 0.0
    %1603 = vmatpush1.msra.mxu0 %v167
    %1604 = vmatprep.subr.mxu0 0.0
    %1605 = vmatpush1.msra.mxu0 %v168
    %1606 = vmatprep.subr.mxu0 0.0
    %1607 = vmatpush1.msra.mxu0 %v169
    %1608 = vmatprep.subr.mxu0 0.0
    %1609 = vmatpush1.msra.mxu0 %v170
    %1610 = vmatprep.subr.mxu0 0.0
    %1611 = vmatpush1.msra.mxu0 %v171
    %1612 = vmatprep.subr.mxu0 0.0
    %1613 = vmatpush1.msra.mxu0 %v172
    %1614 = vmatprep.subr.mxu0 0.0
    %1615 = vmatpush1.msra.mxu0 %v173
    %1616 = vmatprep.subr.mxu0 0.0
    %1617 = vmatpush1.msra.mxu0 %v174
    %1618 = vmatprep.subr.mxu0 0.0
    %1619 = vmatpush1.msra.mxu0 %v175
    %1620 = vmatprep.subr.mxu0 0.0
    %1621 = vmatpush1.msra.mxu0 %v176
    %1622 = vmatprep.subr.mxu0 0.0
    %1623 = vmatpush1.msra.mxu0 0.0
    %1624 = vmatprep.subr.mxu0 0.0
    %1625 = vmatpush1.msra.mxu0 0.0
    %1626 = vmatprep.subr.mxu0 0.0
    %1627 = vmatpush1.msra.mxu0 0.0
    %1628 = vmatprep.subr.mxu0 0.0
    %1629 = vmatpush1.msra.mxu0 0.0
    %1630 = vmatprep.subr.mxu0 0.0
    %1631 = vmatpush1.msra.mxu0 0.0
    %1632 = vmatprep.subr.mxu0 0.0
    %1633 = vmatpush1.msra.mxu0 0.0
    %1634 = vmatprep.subr.mxu0 0.0
    %1635 = vmatpush1.msra.mxu0 0.0
    %1636 = vmatprep.subr.mxu0 0.0
    %1637 = vmatpush1.msra.mxu0 0.0
    %1638 = vmatprep.subr.mxu0 0.0
    %1639 = vmatpush1.msra.mxu0 0.0
    %1640 = vmatprep.subr.mxu0 0.0
    %1641 = vmatpush1.msra.mxu0 0.0
    %1642 = vmatprep.subr.mxu0 0.0
    %1643 = vmatpush1.msra.mxu0 0.0
    %1644 = vmatprep.subr.mxu0 0.0
    %1645 = vmatpush1.msra.mxu0 0.0
    %1646 = vmatprep.subr.mxu0 0.0
    %1647 = vmatpush1.msra.mxu0 0.0
    %1648 = vmatprep.subr.mxu0 0.0
    %1649 = vmatpush1.msra.mxu0 0.0
    %1650 = vmatprep.subr.mxu0 0.0
    %1651 = vmatpush1.msra.mxu0 0.0
    %1652 = vmatprep.subr.mxu0 0.0
    %1653 = vmatpush1.msra.mxu0 0.0
    %1654 = vmatprep.mubr.f32.mxu0 0.0
    %1655 = vmatmul.mubr.f32.gmra.mrb[0].mxu0 %v1589
    %v1656 = vpop.f32.mrb[0].mxu0
    %v1657 = vadd.f32 %v603, %v1656
    %v1658 = vpop.f32.mrb[0].mxu0
    %1659 = vdwg.mxu0
    %v1660 = vsel %vm323, %v1657, -inf
    %1661 = vmax.xlane.f32.xlu0 %v1660
    %v1662 = vpop.xlane.xlu0 %1661
    %v1663 = vsub.f32 %v1657, %v1662
    %v1664 = vmul.f32 %v1663, 1.442695
    %v1665 = vpow.pop %v1664
    %v1666 = vsel %vm323, %v1665, 0.0
    %1667 = vadd.xlane.f32.xlu0 %v1666
    %v1668 = vpop.xlane.xlu0 %1667
    %v1669 = vlog2.pop %v1668
    %v1670 = vmul.f32 %v1669, 0.6931472
    %v1671 = vadd.f32 %v1662, %v1670
    %v1672 = vsub.f32 %v1657, %v1671
    %1673 = vmatprep.subr.mxu0 %v50
    %1674 = vmatpush1.msra.mxu0 %v49
    %1675 = vmatprep.subr.mxu0 %v54
    %1676 = vmatpush1.msra.mxu0 %v53
    %1677 = vmatprep.subr.mxu0 %v58
    %1678 = vmatpush1.msra.mxu0 %v57
    %1679 = vmatprep.subr.mxu0 %v62
    %1680 = vmatpush1.msra.mxu0 %v61
    %1681 = vmatprep.subr.mxu0 %v66
    %1682 = vmatpush1.msra.mxu0 %v65
    %1683 = vmatprep.subr.mxu0 %v70
    %1684 = vmatpush1.msra.mxu0 %v69
    %1685 = vmatprep.subr.mxu0 %v74
    %1686 = vmatpush1.msra.mxu0 %v73
    %1687 = vmatprep.subr.mxu0 %v78
    %1688 = vmatpush1.msra.mxu0 %v77
    %1689 = vmatprep.subr.mxu0 %v82
    %1690 = vmatpush1.msra.mxu0 %v81
    %1691 = vmatprep.subr.mxu0 %v86
    %1692 = vmatpush1.msra.mxu0 %v85
    %1693 = vmatprep.subr.mxu0 %v90
    %1694 = vmatpush1.msra.mxu0 %v89
    %1695 = vmatprep.subr.mxu0 %v94
    %1696 = vmatpush1.msra.mxu0 %v93
    %1697 = vmatprep.subr.mxu0 %v98
    %1698 = vmatpush1.msra.mxu0 %v97
    %1699 = vmatprep.subr.mxu0 %v102
    %1700 = vmatpush1.msra.mxu0 %v101
    %1701 = vmatprep.subr.mxu0 %v106
    %1702 = vmatpush1.msra.mxu0 %v105
    %1703 = vmatprep.subr.mxu0 %v110
    %1704 = vmatpush1.msra.mxu0 %v109
    %1705 = vmatprep.subr.mxu0 0.0
    %1706 = vmatpush1.msra.mxu0 0.0
    %1707 = vmatprep.subr.mxu0 0.0
    %1708 = vmatpush1.msra.mxu0 0.0
    %1709 = vmatprep.subr.mxu0 0.0
    %1710 = vmatpush1.msra.mxu0 0.0
    %1711 = vmatprep.subr.mxu0 0.0
    %1712 = vmatpush1.msra.mxu0 0.0
    %1713 = vmatprep.subr.mxu0 0.0
    %1714 = vmatpush1.msra.mxu0 0.0
    %1715 = vmatprep.subr.mxu0 0.0
    %1716 = vmatpush1.msra.mxu0 0.0
    %1717 = vmatprep.subr.mxu0 0.0
    %1718 = vmatpush1.msra.mxu0 0.0
    %1719 = vmatprep.subr.mxu0 0.0
    %1720 = vmatpush1.msra.mxu0 0.0
    %1721 = vmatprep.subr.mxu0 0.0
    %1722 = vmatpush1.msra.mxu0 0.0
    %1723 = vmatprep.subr.mxu0 0.0
    %1724 = vmatpush1.msra.mxu0 0.0
    %1725 = vmatprep.subr.mxu0 0.0
    %1726 = vmatpush1.msra.mxu0 0.0
    %1727 = vmatprep.subr.mxu0 0.0
    %1728 = vmatpush1.msra.mxu0 0.0
    %1729 = vmatprep.subr.mxu0 0.0
    %1730 = vmatpush1.msra.mxu0 0.0
    %1731 = vmatprep.subr.mxu0 0.0
    %1732 = vmatpush1.msra.mxu0 0.0
    %1733 = vmatprep.subr.mxu0 0.0
    %1734 = vmatpush1.msra.mxu0 0.0
    %1735 = vmatprep.subr.mxu0 0.0
    %1736 = vmatpush1.msra.mxu0 0.0
    %1737 = vmatprep.mubr.f32.mxu0 0.0
    %1738 = vmatmul.mubr.f32.gmra.mrb[0].mxu0 %v1589
    %v1739 = vpop.f32.mrb[0].mxu0
    %v1740 = vadd.f32 0.0, %v1739
    %v1741 = vpop.f32.mrb[0].mxu0
    %v1742 = vadd.f32 0.0, %v1741
    %1743 = vdwg.mxu0
    %1744 = vmatprep.subr.mxu0 %v52
    %1745 = vmatpush1.msra.mxu0 %v51
    %1746 = vmatprep.subr.mxu0 %v56
    %1747 = vmatpush1.msra.mxu0 %v55
    %1748 = vmatprep.subr.mxu0 %v60
    %1749 = vmatpush1.msra.mxu0 %v59
    %1750 = vmatprep.subr.mxu0 %v64
    %1751 = vmatpush1.msra.mxu0 %v63
    %1752 = vmatprep.subr.mxu0 %v68
    %1753 = vmatpush1.msra.mxu0 %v67
    %1754 = vmatprep.subr.mxu0 %v72
    %1755 = vmatpush1.msra.mxu0 %v71
    %1756 = vmatprep.subr.mxu0 %v76
    %1757 = vmatpush1.msra.mxu0 %v75
    %1758 = vmatprep.subr.mxu0 %v80
    %1759 = vmatpush1.msra.mxu0 %v79
    %1760 = vmatprep.subr.mxu0 %v84
    %1761 = vmatpush1.msra.mxu0 %v83
    %1762 = vmatprep.subr.mxu0 %v88
    %1763 = vmatpush1.msra.mxu0 %v87
    %1764 = vmatprep.subr.mxu0 %v92
    %1765 = vmatpush1.msra.mxu0 %v91
    %1766 = vmatprep.subr.mxu0 %v96
    %1767 = vmatpush1.msra.mxu0 %v95
    %1768 = vmatprep.subr.mxu0 %v100
    %1769 = vmatpush1.msra.mxu0 %v99
    %1770 = vmatprep.subr.mxu0 %v104
    %1771 = vmatpush1.msra.mxu0 %v103
    %1772 = vmatprep.subr.mxu0 %v108
    %1773 = vmatpush1.msra.mxu0 %v107
    %1774 = vmatprep.subr.mxu0 %v112
    %1775 = vmatpush1.msra.mxu0 %v111
    %1776 = vmatprep.subr.mxu0 0.0
    %1777 = vmatpush1.msra.mxu0 0.0
    %1778 = vmatprep.subr.mxu0 0.0
    %1779 = vmatpush1.msra.mxu0 0.0
    %1780 = vmatprep.subr.mxu0 0.0
    %1781 = vmatpush1.msra.mxu0 0.0
    %1782 = vmatprep.subr.mxu0 0.0
    %1783 = vmatpush1.msra.mxu0 0.0
    %1784 = vmatprep.subr.mxu0 0.0
    %1785 = vmatpush1.msra.mxu0 0.0
    %1786 = vmatprep.subr.mxu0 0.0
    %1787 = vmatpush1.msra.mxu0 0.0
    %1788 = vmatprep.subr.mxu0 0.0
    %1789 = vmatpush1.msra.mxu0 0.0
    %1790 = vmatprep.subr.mxu0 0.0
    %1791 = vmatpush1.msra.mxu0 0.0
    %1792 = vmatprep.subr.mxu0 0.0
    %1793 = vmatpush1.msra.mxu0 0.0
    %1794 = vmatprep.subr.mxu0 0.0
    %1795 = vmatpush1.msra.mxu0 0.0
    %1796 = vmatprep.subr.mxu0 0.0
    %1797 = vmatpush1.msra.mxu0 0.0
    %1798 = vmatprep.subr.mxu0 0.0
    %1799 = vmatpush1.msra.mxu0 0.0
    %1800 = vmatprep.subr.mxu0 0.0
    %1801 = vmatpush1.msra.mxu0 0.0
    %1802 = vmatprep.subr.mxu0 0.0
    %1803 = vmatpush1.msra.mxu0 0.0
    %1804 = vmatprep.subr.mxu0 0.0
    %1805 = vmatpush1.msra.mxu0 0.0
    %1806 = vmatprep.subr.mxu0 0.0
    %1807 = vmatpush1.msra.mxu0 0.0
    %1808 = vmatprep.mubr.f32.mxu0 0.0
    %1809 = vmatmul.mubr.f32.gmra.mrb[0].mxu0 %v1589
    %v1810 = vpop.f32.mrb[0].mxu0
    %v1811 = vadd.f32 0.0, %v1810
    %v1812 = vpop.f32.mrb[0].mxu0
    %v1813 = vadd.f32 0.0, %v1812
    %1814 = vdwg.mxu0
    %v1816 = vrot.slane %v1740, 5
    %v1818 = vadd.f32 %v31, %v1816
    %v1819 = vadd.f32 %v1818, %v837
    %vm1820 = vcmask 1043459
    %v1821 = vsel %vm1820, %v1819, -inf
    %1822 = vmax.xlane.f32.xlu0 %v1821
    %v1823 = vpop.xlane.xlu0 %1822
    %v1824 = vsub.f32 %v1819, %v1823
    %v1825 = vmul.f32 %v1824, 1.442695
    %v1826 = vpow.pop %v1825
    %v1827 = vsel %vm1820, %v1826, 0.0
    %1828 = vadd.xlane.f32.xlu0 %v1827
    %v1829 = vpop.xlane.xlu0 %1828
    %v1830 = vrcp.pop %v1829
    %v1831 = vmul.f32 %v1826, %v1830
    %v1833 = vrot.slane %v1831, 3
    %1835 = vmatprep.subr.mxu0 0.0
    %1836 = vmatpush1.msra.mxu0 %v33
    %1837 = vmatprep.subr.mxu0 0.0
    %1838 = vmatpush1.msra.mxu0 %v34
    %1839 = vmatprep.subr.mxu0 0.0
    %1840 = vmatpush1.msra.mxu0 %v35
    %1841 = vmatprep.subr.mxu0 0.0
    %1842 = vmatpush1.msra.mxu0 %v36
    %1843 = vmatprep.subr.mxu0 0.0
    %1844 = vmatpush1.msra.mxu0 %v37
    %1845 = vmatprep.subr.mxu0 0.0
    %1846 = vmatpush1.msra.mxu0 %v38
    %1847 = vmatprep.subr.mxu0 0.0
    %1848 = vmatpush1.msra.mxu0 %v39
    %1849 = vmatprep.subr.mxu0 0.0
    %1850 = vmatpush1.msra.mxu0 %v40
    %1851 = vmatprep.subr.mxu0 0.0
    %1852 = vmatpush1.msra.mxu0 %v41
    %1853 = vmatprep.subr.mxu0 0.0
    %1854 = vmatpush1.msra.mxu0 %v42
    %1855 = vmatprep.subr.mxu0 0.0
    %1856 = vmatpush1.msra.mxu0 %v43
    %1857 = vmatprep.subr.mxu0 0.0
    %1858 = vmatpush1.msra.mxu0 %v44
    %1859 = vmatprep.subr.mxu0 0.0
    %1860 = vmatpush1.msra.mxu0 %v45
    %1861 = vmatprep.subr.mxu0 0.0
    %1862 = vmatpush1.msra.mxu0 %v46
    %1863 = vmatprep.subr.mxu0 0.0
    %1864 = vmatpush1.msra.mxu0 %v47
    %1865 = vmatprep.subr.mxu0 0.0
    %1866 = vmatpush1.msra.mxu0 %v48
    %1867 = vmatprep.subr.mxu0 0.0
    %1868 = vmatpush1.msra.mxu0 0.0
    %1869 = vmatprep.subr.mxu0 0.0
    %1870 = vmatpush1.msra.mxu0 0.0
    %1871 = vmatprep.subr.mxu0 0.0
    %1872 = vmatpush1.msra.mxu0 0.0
    %1873 = vmatprep.subr.mxu0 0.0
    %1874 = vmatpush1.msra.mxu0 0.0
    %1875 = vmatprep.subr.mxu0 0.0
    %1876 = vmatpush1.msra.mxu0 0.0
    %1877 = vmatprep.subr.mxu0 0.0
    %1878 = vmatpush1.msra.mxu0 0.0
    %1879 = vmatprep.subr.mxu0 0.0
    %1880 = vmatpush1.msra.mxu0 0.0
    %1881 = vmatprep.subr.mxu0 0.0
    %1882 = vmatpush1.msra.mxu0 0.0
    %1883 = vmatprep.subr.mxu0 0.0
    %1884 = vmatpush1.msra.mxu0 0.0
    %1885 = vmatprep.subr.mxu0 0.0
    %1886 = vmatpush1.msra.mxu0 0.0
    %1887 = vmatprep.subr.mxu0 0.0
    %1888 = vmatpush1.msra.mxu0 0.0
    %1889 = vmatprep.subr.mxu0 0.0
    %1890 = vmatpush1.msra.mxu0 0.0
    %1891 = vmatprep.subr.mxu0 0.0
    %1892 = vmatpush1.msra.mxu0 0.0
    %1893 = vmatprep.subr.mxu0 0.0
    %1894 = vmatpush1.msra.mxu0 0.0
    %1895 = vmatprep.subr.mxu0 0.0
    %1896 = vmatpush1.msra.mxu0 0.0
    %1897 = vmatprep.subr.mxu0 0.0
    %1898 = vmatpush1.msra.mxu0 0.0
    %1899 = vmatprep.mubr.f32.mxu0 0.0
    %1900 = vmatmul.mubr.f32.gmra.mrb[0].mxu0 %v1833
    %v1901 = vpop.f32.mrb[0].mxu0
    %v1902 = vadd.f32 0.0, %v1901
    %v1903 = vpop.f32.mrb[0].mxu0
    %1904 = vdwg.mxu0
    %v1906 = vrot.slane %v1902, 5
    %v1908 = vadd.f32 %v32, %v1906
    %v1909 = vadd.f32 %v1908, %v410
    %v1910 = vmax.f32 %v1909, 0.0
    %v1912 = vrot.slane %v1910, 3
    %1914 = vmatprep.subr.mxu0 %v114
    %1915 = vmatpush1.msra.mxu0 %v113
    %1916 = vmatprep.subr.mxu0 %v117
    %1917 = vmatpush1.msra.mxu0 %v116
    %1918 = vmatprep.subr.mxu0 %v120
    %1919 = vmatpush1.msra.mxu0 %v119
    %1920 = vmatprep.subr.mxu0 %v123
    %1921 = vmatpush1.msra.mxu0 %v122
    %1922 = vmatprep.subr.mxu0 %v126
    %1923 = vmatpush1.msra.mxu0 %v125
    %1924 = vmatprep.subr.mxu0 %v129
    %1925 = vmatpush1.msra.mxu0 %v128
    %1926 = vmatprep.subr.mxu0 %v132
    %1927 = vmatpush1.msra.mxu0 %v131
    %1928 = vmatprep.subr.mxu0 %v135
    %1929 = vmatpush1.msra.mxu0 %v134
    %1930 = vmatprep.subr.mxu0 %v138
    %1931 = vmatpush1.msra.mxu0 %v137
    %1932 = vmatprep.subr.mxu0 %v141
    %1933 = vmatpush1.msra.mxu0 %v140
    %1934 = vmatprep.subr.mxu0 %v144
    %1935 = vmatpush1.msra.mxu0 %v143
    %1936 = vmatprep.subr.mxu0 %v147
    %1937 = vmatpush1.msra.mxu0 %v146
    %1938 = vmatprep.subr.mxu0 %v150
    %1939 = vmatpush1.msra.mxu0 %v149
    %1940 = vmatprep.subr.mxu0 %v153
    %1941 = vmatpush1.msra.mxu0 %v152
    %1942 = vmatprep.subr.mxu0 %v156
    %1943 = vmatpush1.msra.mxu0 %v155
    %1944 = vmatprep.subr.mxu0 %v159
    %1945 = vmatpush1.msra.mxu0 %v158
    %1946 = vmatprep.subr.mxu0 0.0
    %1947 = vmatpush1.msra.mxu0 0.0
    %1948 = vmatprep.subr.mxu0 0.0
    %1949 = vmatpush1.msra.mxu0 0.0
    %1950 = vmatprep.subr.mxu0 0.0
    %1951 = vmatpush1.msra.mxu0 0.0
    %1952 = vmatprep.subr.mxu0 0.0
    %1953 = vmatpush1.msra.mxu0 0.0
    %1954 = vmatprep.subr.mxu0 0.0
    %1955 = vmatpush1.msra.mxu0 0.0
    %1956 = vmatprep.subr.mxu0 0.0
    %1957 = vmatpush1.msra.mxu0 0.0
    %1958 = vmatprep.subr.mxu0 0.0
    %1959 = vmatpush1.msra.mxu0 0.0
    %1960 = vmatprep.subr.mxu0 0.0
    %1961 = vmatpush1.msra.mxu0 0.0
    %1962 = vmatprep.subr.mxu0 0.0
    %1963 = vmatpush1.msra.mxu0 0.0
    %1964 = vmatprep.subr.mxu0 0.0
    %1965 = vmatpush1.msra.mxu0 0.0
    %1966 = vmatprep.subr.mxu0 0.0
    %1967 = vmatpush1.msra.mxu0 0.0
    %1968 = vmatprep.subr.mxu0 0.0
    %1969 = vmatpush1.msra.mxu0 0.0
    %1970 = vmatprep.subr.mxu0 0.0
    %1971 = vmatpush1.msra.mxu0 0.0
    %1972 = vmatprep.subr.mxu0 0.0
    %1973 = vmatpush1.msra.mxu0 0.0
    %1974 = vmatprep.subr.mxu0 0.0
    %1975 = vmatpush1.msra.mxu0 0.0
    %1976 = vmatprep.subr.mxu0 0.0
    %1977 = vmatpush1.msra.mxu0 0.0
    %1978 = vmatprep.mubr.f32.mxu0 0.0
    %1979 = vmatmul.mubr.f32.gmra.mrb[0].mxu0 %v1912
    %v1980 = vpop.f32.mrb[0].mxu0
    %v1981 = vadd.f32 0.0, %v1980
    %v1982 = vpop.f32.mrb[0].mxu0
    %v1983 = vadd.f32 0.0, %v1982
    %1984 = vdwg.mxu0
    %1985 = vmatprep.subr.mxu0 0.0
    %1986 = vmatpush1.msra.mxu0 %v115
    %1987 = vmatprep.subr.mxu0 0.0
    %1988 = vmatpush1.msra.mxu0 %v118
    %1989 = vmatprep.subr.mxu0 0.0
    %1990 = vmatpush1.msra.mxu0 %v121
    %1991 = vmatprep.subr.mxu0 0.0
    %1992 = vmatpush1.msra.mxu0 %v124
    %1993 = vmatprep.subr.mxu0 0.0
    %1994 = vmatpush1.msra.mxu0 %v127
    %1995 = vmatprep.subr.mxu0 0.0
    %1996 = vmatpush1.msra.mxu0 %v130
    %1997 = vmatprep.subr.mxu0 0.0
    %1998 = vmatpush1.msra.mxu0 %v133
    %1999 = vmatprep.subr.mxu0 0.0
    %2000 = vmatpush1.msra.mxu0 %v136
    %2001 = vmatprep.subr.mxu0 0.0
    %2002 = vmatpush1.msra.mxu0 %v139
    %2003 = vmatprep.subr.mxu0 0.0
    %2004 = vmatpush1.msra.mxu0 %v142
    %2005 = vmatprep.subr.mxu0 0.0
    %2006 = vmatpush1.msra.mxu0 %v145
    %2007 = vmatprep.subr.mxu0 0.0
    %2008 = vmatpush1.msra.mxu0 %v148
    %2009 = vmatprep.subr.mxu0 0.0
    %2010 = vmatpush1.msra.mxu0 %v151
    %2011 = vmatprep.subr.mxu0 0.0
    %2012 = vmatpush1.msra.mxu0 %v154
    %2013 = vmatprep.subr.mxu0 0.0
    %2014 = vmatpush1.msra.mxu0 %v157
    %2015 = vmatprep.subr.mxu0 0.0
    %2016 = vmatpush1.msra.mxu0 %v160
    %2017 = vmatprep.subr.mxu0 0.0
    %2018 = vmatpush1.msra.mxu0 0.0
    %2019 = vmatprep.subr.mxu0 0.0
    %2020 = vmatpush1.msra.mxu0 0.0
    %2021 = vmatprep.subr.mxu0 0.0
    %2022 = vmatpush1.msra.mxu0 0.0
    %2023 = vmatprep.subr.mxu0 0.0
    %2024 = vmatpush1.msra.mxu0 0.0
    %2025 = vmatprep.subr.mxu0 0.0
    %2026 = vmatpush1.msra.mxu0 0.0
    %2027 = vmatprep.subr.mxu0 0.0
    %2028 = vmatpush1.msra.mxu0 0.0
    %2029 = vmatprep.subr.mxu0 0.0
    %2030 = vmatpush1.msra.mxu0 0.0
    %2031 = vmatprep.subr.mxu0 0.0
    %2032 = vmatpush1.msra.mxu0 0.0
    %2033 = vmatprep.subr.mxu0 0.0
    %2034 = vmatpush1.msra.mxu0 0.0
    %2035 = vmatprep.subr.mxu0 0.0
    %2036 = vmatpush1.msra.mxu0 0.0
    %2037 = vmatprep.subr.mxu0 0.0
    %2038 = vmatpush1.msra.mxu0 0.0
    %2039 = vmatprep.subr.mxu0 0.0
    %2040 = vmatpush1.msra.mxu0 0.0
    %2041 = vmatprep.subr.mxu0 0.0
    %2042 = vmatpush1.msra.mxu0 0.0
    %2043 = vmatprep.subr.mxu0 0.0
    %2044 = vmatpush1.msra.mxu0 0.0
    %2045 = vmatprep.subr.mxu0 0.0
    %2046 = vmatpush1.msra.mxu0 0.0
    %2047 = vmatprep.subr.mxu0 0.0
    %2048 = vmatpush1.msra.mxu0 0.0
    %2049 = vmatprep.mubr.f32.mxu0 0.0
    %2050 = vmatmul.mubr.f32.gmra.mrb[0].mxu0 %v1912
    %v2051 = vpop.f32.mrb[0].mxu0
    %v2052 = vadd.f32 0.0, %v2051
    %v2053 = vpop.f32.mrb[0].mxu0
    %2054 = vdwg.mxu0
    %v2055 = vadd.f32 %v1981, %v1742
    %v2056 = vadd.f32 %v2055, %v559
    %v2057 = vxor.u32 %v2056, 2147483648
    %v2058 = vmul.f32 %v2057, 1.442695
    %v2059 = vpow.pop %v2058
    %v2060 = vadd.f32 %v2059, 1.0
    %v2061 = vrcp.pop %v2060
    %v2062 = vmul.f32 1.0, %v2061
    %v2063 = vadd.f32 %v1983, %v1811
    %v2064 = vadd.f32 %v2063, %v572
    %v2065 = vxor.u32 %v2064, 2147483648
    %v2066 = vmul.f32 %v2065, 1.442695
    %v2067 = vpow.pop %v2066
    %v2068 = vadd.f32 %v2067, 1.0
    %v2069 = vrcp.pop %v2068
    %v2070 = vmul.f32 1.0, %v2069
    %v2071 = vadd.f32 %v2052, %v584
    %v2072 = vadd.f32 %v1813, %v590
    %v2073 = vmul.f32 %v2062, %v2072
    %v2074 = vadd.f32 %v2071, %v2073
    %v2075 = vtanh.pop %v2074
    %v2076 = vsub.f32 1.0, %v2070
    %v2077 = vmul.f32 %v2076, %v2075
    %v2078 = vmul.f32 %v2070, %v1589
    %v2079 = vadd.f32 %v2077, %v2078
    %2080 = vmatprep.subr.mxu0 0.0
    %2081 = vmatpush1.msra.mxu0 %v161
    %2082 = vmatprep.subr.mxu0 0.0
    %2083 = vmatpush1.msra.mxu0 %v162
    %2084 = vmatprep.subr.mxu0 0.0
    %2085 = vmatpush1.msra.mxu0 %v163
    %2086 = vmatprep.subr.mxu0 0.0
    %2087 = vmatpush1.msra.mxu0 %v164
    %2088 = vmatprep.subr.mxu0 0.0
    %2089 = vmatpush1.msra.mxu0 %v165
    %2090 = vmatprep.subr.mxu0 0.0
    %2091 = vmatpush1.msra.mxu0 %v166
    %2092 = vmatprep.subr.mxu0 0.0
    %2093 = vmatpush1.msra.mxu0 %v167
    %2094 = vmatprep.subr.mxu0 0.0
    %2095 = vmatpush1.msra.mxu0 %v168
    %2096 = vmatprep.subr.mxu0 0.0
    %2097 = vmatpush1.msra.mxu0 %v169
    %2098 = vmatprep.subr.mxu0 0.0
    %2099 = vmatpush1.msra.mxu0 %v170
    %2100 = vmatprep.subr.mxu0 0.0
    %2101 = vmatpush1.msra.mxu0 %v171
    %2102 = vmatprep.subr.mxu0 0.0
    %2103 = vmatpush1.msra.mxu0 %v172
    %2104 = vmatprep.subr.mxu0 0.0
    %2105 = vmatpush1.msra.mxu0 %v173
    %2106 = vmatprep.subr.mxu0 0.0
    %2107 = vmatpush1.msra.mxu0 %v174
    %2108 = vmatprep.subr.mxu0 0.0
    %2109 = vmatpush1.msra.mxu0 %v175
    %2110 = vmatprep.subr.mxu0 0.0
    %2111 = vmatpush1.msra.mxu0 %v176
    %2112 = vmatprep.subr.mxu0 0.0
    %2113 = vmatpush1.msra.mxu0 0.0
    %2114 = vmatprep.subr.mxu0 0.0
    %2115 = vmatpush1.msra.mxu0 0.0
    %2116 = vmatprep.subr.mxu0 0.0
    %2117 = vmatpush1.msra.mxu0 0.0
    %2118 = vmatprep.subr.mxu0 0.0
    %2119 = vmatpush1.msra.mxu0 0.0
    %2120 = vmatprep.subr.mxu0 0.0
    %2121 = vmatpush1.msra.mxu0 0.0
    %2122 = vmatprep.subr.mxu0 0.0
    %2123 = vmatpush1.msra.mxu0 0.0
    %2124 = vmatprep.subr.mxu0 0.0
    %2125 = vmatpush1.msra.mxu0 0.0
    %2126 = vmatprep.subr.mxu0 0.0
    %2127 = vmatpush1.msra.mxu0 0.0
    %2128 = vmatprep.subr.mxu0 0.0
    %2129 = vmatpush1.msra.mxu0 0.0
    %2130 = vmatprep.subr.mxu0 0.0
    %2131 = vmatpush1.msra.mxu0 0.0
    %2132 = vmatprep.subr.mxu0 0.0
    %2133 = vmatpush1.msra.mxu0 0.0
    %2134 = vmatprep.subr.mxu0 0.0
    %2135 = vmatpush1.msra.mxu0 0.0
    %2136 = vmatprep.subr.mxu0 0.0
    %2137 = vmatpush1.msra.mxu0 0.0
    %2138 = vmatprep.subr.mxu0 0.0
    %2139 = vmatpush1.msra.mxu0 0.0
    %2140 = vmatprep.subr.mxu0 0.0
    %2141 = vmatpush1.msra.mxu0 0.0
    %2142 = vmatprep.subr.mxu0 0.0
    %2143 = vmatpush1.msra.mxu0 0.0
    %2144 = vmatprep.mubr.f32.mxu0 0.0
    %2145 = vmatmul.mubr.f32.gmra.mrb[0].mxu0 %v2079
    %v2146 = vpop.f32.mrb[0].mxu0
    %v2147 = vadd.f32 %v603, %v2146
    %v2148 = vpop.f32.mrb[0].mxu0
    %2149 = vdwg.mxu0
    %v2150 = vsel %vm323, %v2147, -inf
    %2151 = vmax.xlane.f32.xlu0 %v2150
    %v2152 = vpop.xlane.xlu0 %2151
    %v2153 = vsub.f32 %v2147, %v2152
    %v2154 = vmul.f32 %v2153, 1.442695
    %v2155 = vpow.pop %v2154
    %v2156 = vsel %vm323, %v2155, 0.0
    %2157 = vadd.xlane.f32.xlu0 %v2156
    %v2158 = vpop.xlane.xlu0 %2157
    %v2159 = vlog2.pop %v2158
    %v2160 = vmul.f32 %v2159, 0.6931472
    %v2161 = vadd.f32 %v2152, %v2160
    %v2162 = vsub.f32 %v2147, %v2161
    %2163 = vmatprep.subr.mxu0 %v50
    %2164 = vmatpush1.msra.mxu0 %v49
    %2165 = vmatprep.subr.mxu0 %v54
    %2166 = vmatpush1.msra.mxu0 %v53
    %2167 = vmatprep.subr.mxu0 %v58
    %2168 = vmatpush1.msra.mxu0 %v57
    %2169 = vmatprep.subr.mxu0 %v62
    %2170 = vmatpush1.msra.mxu0 %v61
    %2171 = vmatprep.subr.mxu0 %v66
    %2172 = vmatpush1.msra.mxu0 %v65
    %2173 = vmatprep.subr.mxu0 %v70
    %2174 = vmatpush1.msra.mxu0 %v69
    %2175 = vmatprep.subr.mxu0 %v74
    %2176 = vmatpush1.msra.mxu0 %v73
    %2177 = vmatprep.subr.mxu0 %v78
    %2178 = vmatpush1.msra.mxu0 %v77
    %2179 = vmatprep.subr.mxu0 %v82
    %2180 = vmatpush1.msra.mxu0 %v81
    %2181 = vmatprep.subr.mxu0 %v86
    %2182 = vmatpush1.msra.mxu0 %v85
    %2183 = vmatprep.subr.mxu0 %v90
    %2184 = vmatpush1.msra.mxu0 %v89
    %2185 = vmatprep.subr.mxu0 %v94
    %2186 = vmatpush1.msra.mxu0 %v93
    %2187 = vmatprep.subr.mxu0 %v98
    %2188 = vmatpush1.msra.mxu0 %v97
    %2189 = vmatprep.subr.mxu0 %v102
    %2190 = vmatpush1.msra.mxu0 %v101
    %2191 = vmatprep.subr.mxu0 %v106
    %2192 = vmatpush1.msra.mxu0 %v105
    %2193 = vmatprep.subr.mxu0 %v110
    %2194 = vmatpush1.msra.mxu0 %v109
    %2195 = vmatprep.subr.mxu0 0.0
    %2196 = vmatpush1.msra.mxu0 0.0
    %2197 = vmatprep.subr.mxu0 0.0
    %2198 = vmatpush1.msra.mxu0 0.0
    %2199 = vmatprep.subr.mxu0 0.0
    %2200 = vmatpush1.msra.mxu0 0.0
    %2201 = vmatprep.subr.mxu0 0.0
    %2202 = vmatpush1.msra.mxu0 0.0
    %2203 = vmatprep.subr.mxu0 0.0
    %2204 = vmatpush1.msra.mxu0 0.0
    %2205 = vmatprep.subr.mxu0 0.0
    %2206 = vmatpush1.msra.mxu0 0.0
    %2207 = vmatprep.subr.mxu0 0.0
    %2208 = vmatpush1.msra.mxu0 0.0
    %2209 = vmatprep.subr.mxu0 0.0
    %2210 = vmatpush1.msra.mxu0 0.0
    %2211 = vmatprep.subr.mxu0 0.0
    %2212 = vmatpush1.msra.mxu0 0.0
    %2213 = vmatprep.subr.mxu0 0.0
    %2214 = vmatpush1.msra.mxu0 0.0
    %2215 = vmatprep.subr.mxu0 0.0
    %2216 = vmatpush1.msra.mxu0 0.0
    %2217 = vmatprep.subr.mxu0 0.0
    %2218 = vmatpush1.msra.mxu0 0.0
    %2219 = vmatprep.subr.mxu0 0.0
    %2220 = vmatpush1.msra.mxu0 0.0
    %2221 = vmatprep.subr.mxu0 0.0
    %2222 = vmatpush1.msra.mxu0 0.0
    %2223 = vmatprep.subr.mxu0 0.0
    %2224 = vmatpush1.msra.mxu0 0.0
    %2225 = vmatprep.subr.mxu0 0.0
    %2226 = vmatpush1.msra.mxu0 0.0
    %2227 = vmatprep.mubr.f32.mxu0 0.0
    %2228 = vmatmul.mubr.f32.gmra.mrb[0].mxu0 %v2079
    %v2229 = vpop.f32.mrb[0].mxu0
    %v2230 = vadd.f32 0.0, %v2229
    %v2231 = vpop.f32.mrb[0].mxu0
    %v2232 = vadd.f32 0.0, %v2231
    %2233 = vdwg.mxu0
    %2234 = vmatprep.subr.mxu0 %v52
    %2235 = vmatpush1.msra.mxu0 %v51
    %2236 = vmatprep.subr.mxu0 %v56
    %2237 = vmatpush1.msra.mxu0 %v55
    %2238 = vmatprep.subr.mxu0 %v60
    %2239 = vmatpush1.msra.mxu0 %v59
    %2240 = vmatprep.subr.mxu0 %v64
    %2241 = vmatpush1.msra.mxu0 %v63
    %2242 = vmatprep.subr.mxu0 %v68
    %2243 = vmatpush1.msra.mxu0 %v67
    %2244 = vmatprep.subr.mxu0 %v72
    %2245 = vmatpush1.msra.mxu0 %v71
    %2246 = vmatprep.subr.mxu0 %v76
    %2247 = vmatpush1.msra.mxu0 %v75
    %2248 = vmatprep.subr.mxu0 %v80
    %2249 = vmatpush1.msra.mxu0 %v79
    %2250 = vmatprep.subr.mxu0 %v84
    %2251 = vmatpush1.msra.mxu0 %v83
    %2252 = vmatprep.subr.mxu0 %v88
    %2253 = vmatpush1.msra.mxu0 %v87
    %2254 = vmatprep.subr.mxu0 %v92
    %2255 = vmatpush1.msra.mxu0 %v91
    %2256 = vmatprep.subr.mxu0 %v96
    %2257 = vmatpush1.msra.mxu0 %v95
    %2258 = vmatprep.subr.mxu0 %v100
    %2259 = vmatpush1.msra.mxu0 %v99
    %2260 = vmatprep.subr.mxu0 %v104
    %2261 = vmatpush1.msra.mxu0 %v103
    %2262 = vmatprep.subr.mxu0 %v108
    %2263 = vmatpush1.msra.mxu0 %v107
    %2264 = vmatprep.subr.mxu0 %v112
    %2265 = vmatpush1.msra.mxu0 %v111
    %2266 = vmatprep.subr.mxu0 0.0
    %2267 = vmatpush1.msra.mxu0 0.0
    %2268 = vmatprep.subr.mxu0 0.0
    %2269 = vmatpush1.msra.mxu0 0.0
    %2270 = vmatprep.subr.mxu0 0.0
    %2271 = vmatpush1.msra.mxu0 0.0
    %2272 = vmatprep.subr.mxu0 0.0
    %2273 = vmatpush1.msra.mxu0 0.0
    %2274 = vmatprep.subr.mxu0 0.0
    %2275 = vmatpush1.msra.mxu0 0.0
    %2276 = vmatprep.subr.mxu0 0.0
    %2277 = vmatpush1.msra.mxu0 0.0
    %2278 = vmatprep.subr.mxu0 0.0
    %2279 = vmatpush1.msra.mxu0 0.0
    %2280 = vmatprep.subr.mxu0 0.0
    %2281 = vmatpush1.msra.mxu0 0.0
    %2282 = vmatprep.subr.mxu0 0.0
    %2283 = vmatpush1.msra.mxu0 0.0
    %2284 = vmatprep.subr.mxu0 0.0
    %2285 = vmatpush1.msra.mxu0 0.0
    %2286 = vmatprep.subr.mxu0 0.0
    %2287 = vmatpush1.msra.mxu0 0.0
    %2288 = vmatprep.subr.mxu0 0.0
    %2289 = vmatpush1.msra.mxu0 0.0
    %2290 = vmatprep.subr.mxu0 0.0
    %2291 = vmatpush1.msra.mxu0 0.0
    %2292 = vmatprep.subr.mxu0 0.0
    %2293 = vmatpush1.msra.mxu0 0.0
    %2294 = vmatprep.subr.mxu0 0.0
    %2295 = vmatpush1.msra.mxu0 0.0
    %2296 = vmatprep.subr.mxu0 0.0
    %2297 = vmatpush1.msra.mxu0 0.0
    %2298 = vmatprep.mubr.f32.mxu0 0.0
    %2299 = vmatmul.mubr.f32.gmra.mrb[0].mxu0 %v2079
    %v2300 = vpop.f32.mrb[0].mxu0
    %v2301 = vadd.f32 0.0, %v2300
    %v2302 = vpop.f32.mrb[0].mxu0
    %v2303 = vadd.f32 0.0, %v2302
    %2304 = vdwg.mxu0
    %v2306 = vrot.slane %v2230, 4
    %v2308 = vadd.f32 %v31, %v2306
    %v2309 = vadd.f32 %v2308, %v837
    %vm2310 = vcmask 1044484
    %v2311 = vsel %vm2310, %v2309, -inf
    %2312 = vmax.xlane.f32.xlu0 %v2311
    %v2313 = vpop.xlane.xlu0 %2312
    %v2314 = vsub.f32 %v2309, %v2313
    %v2315 = vmul.f32 %v2314, 1.442695
    %v2316 = vpow.pop %v2315
    %v2317 = vsel %vm2310, %v2316, 0.0
    %2318 = vadd.xlane.f32.xlu0 %v2317
    %v2319 = vpop.xlane.xlu0 %2318
    %v2320 = vrcp.pop %v2319
    %v2321 = vmul.f32 %v2316, %v2320
    %v2323 = vrot.slane %v2321, 4
    %2325 = vmatprep.subr.mxu0 0.0
    %2326 = vmatpush1.msra.mxu0 %v33
    %2327 = vmatprep.subr.mxu0 0.0
    %2328 = vmatpush1.msra.mxu0 %v34
    %2329 = vmatprep.subr.mxu0 0.0
    %2330 = vmatpush1.msra.mxu0 %v35
    %2331 = vmatprep.subr.mxu0 0.0
    %2332 = vmatpush1.msra.mxu0 %v36
    %2333 = vmatprep.subr.mxu0 0.0
    %2334 = vmatpush1.msra.mxu0 %v37
    %2335 = vmatprep.subr.mxu0 0.0
    %2336 = vmatpush1.msra.mxu0 %v38
    %2337 = vmatprep.subr.mxu0 0.0
    %2338 = vmatpush1.msra.mxu0 %v39
    %2339 = vmatprep.subr.mxu0 0.0
    %2340 = vmatpush1.msra.mxu0 %v40
    %2341 = vmatprep.subr.mxu0 0.0
    %2342 = vmatpush1.msra.mxu0 %v41
    %2343 = vmatprep.subr.mxu0 0.0
    %2344 = vmatpush1.msra.mxu0 %v42
    %2345 = vmatprep.subr.mxu0 0.0
    %2346 = vmatpush1.msra.mxu0 %v43
    %2347 = vmatprep.subr.mxu0 0.0
    %2348 = vmatpush1.msra.mxu0 %v44
    %2349 = vmatprep.subr.mxu0 0.0
    %2350 = vmatpush1.msra.mxu0 %v45
    %2351 = vmatprep.subr.mxu0 0.0
    %2352 = vmatpush1.msra.mxu0 %v46
    %2353 = vmatprep.subr.mxu0 0.0
    %2354 = vmatpush1.msra.mxu0 %v47
    %2355 = vmatprep.subr.mxu0 0.0
    %2356 = vmatpush1.msra.mxu0 %v48
    %2357 = vmatprep.subr.mxu0 0.0
    %2358 = vmatpush1.msra.mxu0 0.0
    %2359 = vmatprep.subr.mxu0 0.0
    %2360 = vmatpush1.msra.mxu0 0.0
    %2361 = vmatprep.subr.mxu0 0.0
    %2362 = vmatpush1.msra.mxu0 0.0
    %2363 = vmatprep.subr.mxu0 0.0
    %2364 = vmatpush1.msra.mxu0 0.0
    %2365 = vmatprep.subr.mxu0 0.0
    %2366 = vmatpush1.msra.mxu0 0.0
    %2367 = vmatprep.subr.mxu0 0.0
    %2368 = vmatpush1.msra.mxu0 0.0
    %2369 = vmatprep.subr.mxu0 0.0
    %2370 = vmatpush1.msra.mxu0 0.0
    %2371 = vmatprep.subr.mxu0 0.0
    %2372 = vmatpush1.msra.mxu0 0.0
    %2373 = vmatprep.subr.mxu0 0.0
    %2374 = vmatpush1.msra.mxu0 0.0
    %2375 = vmatprep.subr.mxu0 0.0
    %2376 = vmatpush1.msra.mxu0 0.0
    %2377 = vmatprep.subr.mxu0 0.0
    %2378 = vmatpush1.msra.mxu0 0.0
    %2379 = vmatprep.subr.mxu0 0.0
    %2380 = vmatpush1.msra.mxu0 0.0
    %2381 = vmatprep.subr.mxu0 0.0
    %2382 = vmatpush1.msra.mxu0 0.0
    %2383 = vmatprep.subr.mxu0 0.0
    %2384 = vmatpush1.msra.mxu0 0.0
    %2385 = vmatprep.subr.mxu0 0.0
    %2386 = vmatpush1.msra.mxu0 0.0
    %2387 = vmatprep.subr.mxu0 0.0
    %2388 = vmatpush1.msra.mxu0 0.0
    %2389 = vmatprep.mubr.f32.mxu0 0.0
    %2390 = vmatmul.mubr.f32.gmra.mrb[0].mxu0 %v2323
    %v2391 = vpop.f32.mrb[0].mxu0
    %v2392 = vadd.f32 0.0, %v2391
    %v2393 = vpop.f32.mrb[0].mxu0
    %2394 = vdwg.mxu0
    %v2396 = vrot.slane %v2392, 4
    %v2398 = vadd.f32 %v32, %v2396
    %v2399 = vadd.f32 %v2398, %v410
    %v2400 = vmax.f32 %v2399, 0.0
    %v2402 = vrot.slane %v2400, 4
    %2404 = vmatprep.subr.mxu0 %v114
    %2405 = vmatpush1.msra.mxu0 %v113
    %2406 = vmatprep.subr.mxu0 %v117
    %2407 = vmatpush1.msra.mxu0 %v116
    %2408 = vmatprep.subr.mxu0 %v120
    %2409 = vmatpush1.msra.mxu0 %v119
    %2410 = vmatprep.subr.mxu0 %v123
    %2411 = vmatpush1.msra.mxu0 %v122
    %2412 = vmatprep.subr.mxu0 %v126
    %2413 = vmatpush1.msra.mxu0 %v125
    %2414 = vmatprep.subr.mxu0 %v129
    %2415 = vmatpush1.msra.mxu0 %v128
    %2416 = vmatprep.subr.mxu0 %v132
    %2417 = vmatpush1.msra.mxu0 %v131
    %2418 = vmatprep.subr.mxu0 %v135
    %2419 = vmatpush1.msra.mxu0 %v134
    %2420 = vmatprep.subr.mxu0 %v138
    %2421 = vmatpush1.msra.mxu0 %v137
    %2422 = vmatprep.subr.mxu0 %v141
    %2423 = vmatpush1.msra.mxu0 %v140
    %2424 = vmatprep.subr.mxu0 %v144
    %2425 = vmatpush1.msra.mxu0 %v143
    %2426 = vmatprep.subr.mxu0 %v147
    %2427 = vmatpush1.msra.mxu0 %v146
    %2428 = vmatprep.subr.mxu0 %v150
    %2429 = vmatpush1.msra.mxu0 %v149
    %2430 = vmatprep.subr.mxu0 %v153
    %2431 = vmatpush1.msra.mxu0 %v152
    %2432 = vmatprep.subr.mxu0 %v156
    %2433 = vmatpush1.msra.mxu0 %v155
    %2434 = vmatprep.subr.mxu0 %v159
    %2435 = vmatpush1.msra.mxu0 %v158
    %2436 = vmatprep.subr.mxu0 0.0
    %2437 = vmatpush1.msra.mxu0 0.0
    %2438 = vmatprep.subr.mxu0 0.0
    %2439 = vmatpush1.msra.mxu0 0.0
    %2440 = vmatprep.subr.mxu0 0.0
    %2441 = vmatpush1.msra.mxu0 0.0
    %2442 = vmatprep.subr.mxu0 0.0
    %2443 = vmatpush1.msra.mxu0 0.0
    %2444 = vmatprep.subr.mxu0 0.0
    %2445 = vmatpush1.msra.mxu0 0.0
    %2446 = vmatprep.subr.mxu0 0.0
    %2447 = vmatpush1.msra.mxu0 0.0
    %2448 = vmatprep.subr.mxu0 0.0
    %2449 = vmatpush1.msra.mxu0 0.0
    %2450 = vmatprep.subr.mxu0 0.0
    %2451 = vmatpush1.msra.mxu0 0.0
    %2452 = vmatprep.subr.mxu0 0.0
    %2453 = vmatpush1.msra.mxu0 0.0
    %2454 = vmatprep.subr.mxu0 0.0
    %2455 = vmatpush1.msra.mxu0 0.0
    %2456 = vmatprep.subr.mxu0 0.0
    %2457 = vmatpush1.msra.mxu0 0.0
    %2458 = vmatprep.subr.mxu0 0.0
    %2459 = vmatpush1.msra.mxu0 0.0
    %2460 = vmatprep.subr.mxu0 0.0
    %2461 = vmatpush1.msra.mxu0 0.0
    %2462 = vmatprep.subr.mxu0 0.0
    %2463 = vmatpush1.msra.mxu0 0.0
    %2464 = vmatprep.subr.mxu0 0.0
    %2465 = vmatpush1.msra.mxu0 0.0
    %2466 = vmatprep.subr.mxu0 0.0
    %2467 = vmatpush1.msra.mxu0 0.0
    %2468 = vmatprep.mubr.f32.mxu0 0.0
    %2469 = vmatmul.mubr.f32.gmra.mrb[0].mxu0 %v2402
    %v2470 = vpop.f32.mrb[0].mxu0
    %v2471 = vadd.f32 0.0, %v2470
    %v2472 = vpop.f32.mrb[0].mxu0
    %v2473 = vadd.f32 0.0, %v2472
    %2474 = vdwg.mxu0
    %2475 = vmatprep.subr.mxu0 0.0
    %2476 = vmatpush1.msra.mxu0 %v115
    %2477 = vmatprep.subr.mxu0 0.0
    %2478 = vmatpush1.msra.mxu0 %v118
    %2479 = vmatprep.subr.mxu0 0.0
    %2480 = vmatpush1.msra.mxu0 %v121
    %2481 = vmatprep.subr.mxu0 0.0
    %2482 = vmatpush1.msra.mxu0 %v124
    %2483 = vmatprep.subr.mxu0 0.0
    %2484 = vmatpush1.msra.mxu0 %v127
    %2485 = vmatprep.subr.mxu0 0.0
    %2486 = vmatpush1.msra.mxu0 %v130
    %2487 = vmatprep.subr.mxu0 0.0
    %2488 = vmatpush1.msra.mxu0 %v133
    %2489 = vmatprep.subr.mxu0 0.0
    %2490 = vmatpush1.msra.mxu0 %v136
    %2491 = vmatprep.subr.mxu0 0.0
    %2492 = vmatpush1.msra.mxu0 %v139
    %2493 = vmatprep.subr.mxu0 0.0
    %2494 = vmatpush1.msra.mxu0 %v142
    %2495 = vmatprep.subr.mxu0 0.0
    %2496 = vmatpush1.msra.mxu0 %v145
    %2497 = vmatprep.subr.mxu0 0.0
    %2498 = vmatpush1.msra.mxu0 %v148
    %2499 = vmatprep.subr.mxu0 0.0
    %2500 = vmatpush1.msra.mxu0 %v151
    %2501 = vmatprep.subr.mxu0 0.0
    %2502 = vmatpush1.msra.mxu0 %v154
    %2503 = vmatprep.subr.mxu0 0.0
    %2504 = vmatpush1.msra.mxu0 %v157
    %2505 = vmatprep.subr.mxu0 0.0
    %2506 = vmatpush1.msra.mxu0 %v160
    %2507 = vmatprep.subr.mxu0 0.0
    %2508 = vmatpush1.msra.mxu0 0.0
    %2509 = vmatprep.subr.mxu0 0.0
    %2510 = vmatpush1.msra.mxu0 0.0
    %2511 = vmatprep.subr.mxu0 0.0
    %2512 = vmatpush1.msra.mxu0 0.0
    %2513 = vmatprep.subr.mxu0 0.0
    %2514 = vmatpush1.msra.mxu0 0.0
    %2515 = vmatprep.subr.mxu0 0.0
    %2516 = vmatpush1.msra.mxu0 0.0
    %2517 = vmatprep.subr.mxu0 0.0
    %2518 = vmatpush1.msra.mxu0 0.0
    %2519 = vmatprep.subr.mxu0 0.0
    %2520 = vmatpush1.msra.mxu0 0.0
    %2521 = vmatprep.subr.mxu0 0.0
    %2522 = vmatpush1.msra.mxu0 0.0
    %2523 = vmatprep.subr.mxu0 0.0
    %2524 = vmatpush1.msra.mxu0 0.0
    %2525 = vmatprep.subr.mxu0 0.0
    %2526 = vmatpush1.msra.mxu0 0.0
    %2527 = vmatprep.subr.mxu0 0.0
    %2528 = vmatpush1.msra.mxu0 0.0
    %2529 = vmatprep.subr.mxu0 0.0
    %2530 = vmatpush1.msra.mxu0 0.0
    %2531 = vmatprep.subr.mxu0 0.0
    %2532 = vmatpush1.msra.mxu0 0.0
    %2533 = vmatprep.subr.mxu0 0.0
    %2534 = vmatpush1.msra.mxu0 0.0
    %2535 = vmatprep.subr.mxu0 0.0
    %2536 = vmatpush1.msra.mxu0 0.0
    %2537 = vmatprep.subr.mxu0 0.0
    %2538 = vmatpush1.msra.mxu0 0.0
    %2539 = vmatprep.mubr.f32.mxu0 0.0
    %2540 = vmatmul.mubr.f32.gmra.mrb[0].mxu0 %v2402
    %v2541 = vpop.f32.mrb[0].mxu0
    %v2542 = vadd.f32 0.0, %v2541
    %v2543 = vpop.f32.mrb[0].mxu0
    %2544 = vdwg.mxu0
    %v2545 = vadd.f32 %v2471, %v2232
    %v2546 = vadd.f32 %v2545, %v559
    %v2547 = vxor.u32 %v2546, 2147483648
    %v2548 = vmul.f32 %v2547, 1.442695
    %v2549 = vpow.pop %v2548
    %v2550 = vadd.f32 %v2549, 1.0
    %v2551 = vrcp.pop %v2550
    %v2552 = vmul.f32 1.0, %v2551
    %v2553 = vadd.f32 %v2473, %v2301
    %v2554 = vadd.f32 %v2553, %v572
    %v2555 = vxor.u32 %v2554, 2147483648
    %v2556 = vmul.f32 %v2555, 1.442695
    %v2557 = vpow.pop %v2556
    %v2558 = vadd.f32 %v2557, 1.0
    %v2559 = vrcp.pop %v2558
    %v2560 = vmul.f32 1.0, %v2559
    %v2561 = vadd.f32 %v2542, %v584
    %v2562 = vadd.f32 %v2303, %v590
    %v2563 = vmul.f32 %v2552, %v2562
    %v2564 = vadd.f32 %v2561, %v2563
    %v2565 = vtanh.pop %v2564
    %v2566 = vsub.f32 1.0, %v2560
    %v2567 = vmul.f32 %v2566, %v2565
    %v2568 = vmul.f32 %v2560, %v2079
    %v2569 = vadd.f32 %v2567, %v2568
    %2570 = vmatprep.subr.mxu0 0.0
    %2571 = vmatpush1.msra.mxu0 %v161
    %2572 = vmatprep.subr.mxu0 0.0
    %2573 = vmatpush1.msra.mxu0 %v162
    %2574 = vmatprep.subr.mxu0 0.0
    %2575 = vmatpush1.msra.mxu0 %v163
    %2576 = vmatprep.subr.mxu0 0.0
    %2577 = vmatpush1.msra.mxu0 %v164
    %2578 = vmatprep.subr.mxu0 0.0
    %2579 = vmatpush1.msra.mxu0 %v165
    %2580 = vmatprep.subr.mxu0 0.0
    %2581 = vmatpush1.msra.mxu0 %v166
    %2582 = vmatprep.subr.mxu0 0.0
    %2583 = vmatpush1.msra.mxu0 %v167
    %2584 = vmatprep.subr.mxu0 0.0
    %2585 = vmatpush1.msra.mxu0 %v168
    %2586 = vmatprep.subr.mxu0 0.0
    %2587 = vmatpush1.msra.mxu0 %v169
    %2588 = vmatprep.subr.mxu0 0.0
    %2589 = vmatpush1.msra.mxu0 %v170
    %2590 = vmatprep.subr.mxu0 0.0
    %2591 = vmatpush1.msra.mxu0 %v171
    %2592 = vmatprep.subr.mxu0 0.0
    %2593 = vmatpush1.msra.mxu0 %v172
    %2594 = vmatprep.subr.mxu0 0.0
    %2595 = vmatpush1.msra.mxu0 %v173
    %2596 = vmatprep.subr.mxu0 0.0
    %2597 = vmatpush1.msra.mxu0 %v174
    %2598 = vmatprep.subr.mxu0 0.0
    %2599 = vmatpush1.msra.mxu0 %v175
    %2600 = vmatprep.subr.mxu0 0.0
    %2601 = vmatpush1.msra.mxu0 %v176
    %2602 = vmatprep.subr.mxu0 0.0
    %2603 = vmatpush1.msra.mxu0 0.0
    %2604 = vmatprep.subr.mxu0 0.0
    %2605 = vmatpush1.msra.mxu0 0.0
    %2606 = vmatprep.subr.mxu0 0.0
    %2607 = vmatpush1.msra.mxu0 0.0
    %2608 = vmatprep.subr.mxu0 0.0
    %2609 = vmatpush1.msra.mxu0 0.0
    %2610 = vmatprep.subr.mxu0 0.0
    %2611 = vmatpush1.msra.mxu0 0.0
    %2612 = vmatprep.subr.mxu0 0.0
    %2613 = vmatpush1.msra.mxu0 0.0
    %2614 = vmatprep.subr.mxu0 0.0
    %2615 = vmatpush1.msra.mxu0 0.0
    %2616 = vmatprep.subr.mxu0 0.0
    %2617 = vmatpush1.msra.mxu0 0.0
    %2618 = vmatprep.subr.mxu0 0.0
    %2619 = vmatpush1.msra.mxu0 0.0
    %2620 = vmatprep.subr.mxu0 0.0
    %2621 = vmatpush1.msra.mxu0 0.0
    %2622 = vmatprep.subr.mxu0 0.0
    %2623 = vmatpush1.msra.mxu0 0.0
    %2624 = vmatprep.subr.mxu0 0.0
    %2625 = vmatpush1.msra.mxu0 0.0
    %2626 = vmatprep.subr.mxu0 0.0
    %2627 = vmatpush1.msra.mxu0 0.0
    %2628 = vmatprep.subr.mxu0 0.0
    %2629 = vmatpush1.msra.mxu0 0.0
    %2630 = vmatprep.subr.mxu0 0.0
    %2631 = vmatpush1.msra.mxu0 0.0
    %2632 = vmatprep.subr.mxu0 0.0
    %2633 = vmatpush1.msra.mxu0 0.0
    %2634 = vmatprep.mubr.f32.mxu0 0.0
    %2635 = vmatmul.mubr.f32.gmra.mrb[0].mxu0 %v2569
    %v2636 = vpop.f32.mrb[0].mxu0
    %v2637 = vadd.f32 %v603, %v2636
    %v2638 = vpop.f32.mrb[0].mxu0
    %2639 = vdwg.mxu0
    %v2640 = vsel %vm323, %v2637, -inf
    %2641 = vmax.xlane.f32.xlu0 %v2640
    %v2642 = vpop.xlane.xlu0 %2641
    %v2643 = vsub.f32 %v2637, %v2642
    %v2644 = vmul.f32 %v2643, 1.442695
    %v2645 = vpow.pop %v2644
    %v2646 = vsel %vm323, %v2645, 0.0
    %2647 = vadd.xlane.f32.xlu0 %v2646
    %v2648 = vpop.xlane.xlu0 %2647
    %v2649 = vlog2.pop %v2648
    %v2650 = vmul.f32 %v2649, 0.6931472
    %v2651 = vadd.f32 %v2642, %v2650
    %v2652 = vsub.f32 %v2637, %v2651
    %2653 = vmatprep.subr.mxu0 %v50
    %2654 = vmatpush1.msra.mxu0 %v49
    %2655 = vmatprep.subr.mxu0 %v54
    %2656 = vmatpush1.msra.mxu0 %v53
    %2657 = vmatprep.subr.mxu0 %v58
    %2658 = vmatpush1.msra.mxu0 %v57
    %2659 = vmatprep.subr.mxu0 %v62
    %2660 = vmatpush1.msra.mxu0 %v61
    %2661 = vmatprep.subr.mxu0 %v66
    %2662 = vmatpush1.msra.mxu0 %v65
    %2663 = vmatprep.subr.mxu0 %v70
    %2664 = vmatpush1.msra.mxu0 %v69
    %2665 = vmatprep.subr.mxu0 %v74
    %2666 = vmatpush1.msra.mxu0 %v73
    %2667 = vmatprep.subr.mxu0 %v78
    %2668 = vmatpush1.msra.mxu0 %v77
    %2669 = vmatprep.subr.mxu0 %v82
    %2670 = vmatpush1.msra.mxu0 %v81
    %2671 = vmatprep.subr.mxu0 %v86
    %2672 = vmatpush1.msra.mxu0 %v85
    %2673 = vmatprep.subr.mxu0 %v90
    %2674 = vmatpush1.msra.mxu0 %v89
    %2675 = vmatprep.subr.mxu0 %v94
    %2676 = vmatpush1.msra.mxu0 %v93
    %2677 = vmatprep.subr.mxu0 %v98
    %2678 = vmatpush1.msra.mxu0 %v97
    %2679 = vmatprep.subr.mxu0 %v102
    %2680 = vmatpush1.msra.mxu0 %v101
    %2681 = vmatprep.subr.mxu0 %v106
    %2682 = vmatpush1.msra.mxu0 %v105
    %2683 = vmatprep.subr.mxu0 %v110
    %2684 = vmatpush1.msra.mxu0 %v109
    %2685 = vmatprep.subr.mxu0 0.0
    %2686 = vmatpush1.msra.mxu0 0.0
    %2687 = vmatprep.subr.mxu0 0.0
    %2688 = vmatpush1.msra.mxu0 0.0
    %2689 = vmatprep.subr.mxu0 0.0
    %2690 = vmatpush1.msra.mxu0 0.0
    %2691 = vmatprep.subr.mxu0 0.0
    %2692 = vmatpush1.msra.mxu0 0.0
    %2693 = vmatprep.subr.mxu0 0.0
    %2694 = vmatpush1.msra.mxu0 0.0
    %2695 = vmatprep.subr.mxu0 0.0
    %2696 = vmatpush1.msra.mxu0 0.0
    %2697 = vmatprep.subr.mxu0 0.0
    %2698 = vmatpush1.msra.mxu0 0.0
    %2699 = vmatprep.subr.mxu0 0.0
    %2700 = vmatpush1.msra.mxu0 0.0
    %2701 = vmatprep.subr.mxu0 0.0
    %2702 = vmatpush1.msra.mxu0 0.0
    %2703 = vmatprep.subr.mxu0 0.0
    %2704 = vmatpush1.msra.mxu0 0.0
    %2705 = vmatprep.subr.mxu0 0.0
    %2706 = vmatpush1.msra.mxu0 0.0
    %2707 = vmatprep.subr.mxu0 0.0
    %2708 = vmatpush1.msra.mxu0 0.0
    %2709 = vmatprep.subr.mxu0 0.0
    %2710 = vmatpush1.msra.mxu0 0.0
    %2711 = vmatprep.subr.mxu0 0.0
    %2712 = vmatpush1.msra.mxu0 0.0
    %2713 = vmatprep.subr.mxu0 0.0
    %2714 = vmatpush1.msra.mxu0 0.0
    %2715 = vmatprep.subr.mxu0 0.0
    %2716 = vmatpush1.msra.mxu0 0.0
    %2717 = vmatprep.mubr.f32.mxu0 0.0
    %2718 = vmatmul.mubr.f32.gmra.mrb[0].mxu0 %v2569
    %v2719 = vpop.f32.mrb[0].mxu0
    %v2720 = vadd.f32 0.0, %v2719
    %v2721 = vpop.f32.mrb[0].mxu0
    %v2722 = vadd.f32 0.0, %v2721
    %2723 = vdwg.mxu0
    %2724 = vmatprep.subr.mxu0 %v52
    %2725 = vmatpush1.msra.mxu0 %v51
    %2726 = vmatprep.subr.mxu0 %v56
    %2727 = vmatpush1.msra.mxu0 %v55
    %2728 = vmatprep.subr.mxu0 %v60
    %2729 = vmatpush1.msra.mxu0 %v59
    %2730 = vmatprep.subr.mxu0 %v64
    %2731 = vmatpush1.msra.mxu0 %v63
    %2732 = vmatprep.subr.mxu0 %v68
    %2733 = vmatpush1.msra.mxu0 %v67
    %2734 = vmatprep.subr.mxu0 %v72
    %2735 = vmatpush1.msra.mxu0 %v71
    %2736 = vmatprep.subr.mxu0 %v76
    %2737 = vmatpush1.msra.mxu0 %v75
    %2738 = vmatprep.subr.mxu0 %v80
    %2739 = vmatpush1.msra.mxu0 %v79
    %2740 = vmatprep.subr.mxu0 %v84
    %2741 = vmatpush1.msra.mxu0 %v83
    %2742 = vmatprep.subr.mxu0 %v88
    %2743 = vmatpush1.msra.mxu0 %v87
    %2744 = vmatprep.subr.mxu0 %v92
    %2745 = vmatpush1.msra.mxu0 %v91
    %2746 = vmatprep.subr.mxu0 %v96
    %2747 = vmatpush1.msra.mxu0 %v95
    %2748 = vmatprep.subr.mxu0 %v100
    %2749 = vmatpush1.msra.mxu0 %v99
    %2750 = vmatprep.subr.mxu0 %v104
    %2751 = vmatpush1.msra.mxu0 %v103
    %2752 = vmatprep.subr.mxu0 %v108
    %2753 = vmatpush1.msra.mxu0 %v107
    %2754 = vmatprep.subr.mxu0 %v112
    %2755 = vmatpush1.msra.mxu0 %v111
    %2756 = vmatprep.subr.mxu0 0.0
    %2757 = vmatpush1.msra.mxu0 0.0
    %2758 = vmatprep.subr.mxu0 0.0
    %2759 = vmatpush1.msra.mxu0 0.0
    %2760 = vmatprep.subr.mxu0 0.0
    %2761 = vmatpush1.msra.mxu0 0.0
    %2762 = vmatprep.subr.mxu0 0.0
    %2763 = vmatpush1.msra.mxu0 0.0
    %2764 = vmatprep.subr.mxu0 0.0
    %2765 = vmatpush1.msra.mxu0 0.0
    %2766 = vmatprep.subr.mxu0 0.0
    %2767 = vmatpush1.msra.mxu0 0.0
    %2768 = vmatprep.subr.mxu0 0.0
    %2769 = vmatpush1.msra.mxu0 0.0
    %2770 = vmatprep.subr.mxu0 0.0
    %2771 = vmatpush1.msra.mxu0 0.0
    %2772 = vmatprep.subr.mxu0 0.0
    %2773 = vmatpush1.msra.mxu0 0.0
    %2774 = vmatprep.subr.mxu0 0.0
    %2775 = vmatpush1.msra.mxu0 0.0
    %2776 = vmatprep.subr.mxu0 0.0
    %2777 = vmatpush1.msra.mxu0 0.0
    %2778 = vmatprep.subr.mxu0 0.0
    %2779 = vmatpush1.msra.mxu0 0.0
    %2780 = vmatprep.subr.mxu0 0.0
    %2781 = vmatpush1.msra.mxu0 0.0
    %2782 = vmatprep.subr.mxu0 0.0
    %2783 = vmatpush1.msra.mxu0 0.0
    %2784 = vmatprep.subr.mxu0 0.0
    %2785 = vmatpush1.msra.mxu0 0.0
    %2786 = vmatprep.subr.mxu0 0.0
    %2787 = vmatpush1.msra.mxu0 0.0
    %2788 = vmatprep.mubr.f32.mxu0 0.0
    %2789 = vmatmul.mubr.f32.gmra.mrb[0].mxu0 %v2569
    %v2790 = vpop.f32.mrb[0].mxu0
    %v2791 = vadd.f32 0.0, %v2790
    %v2792 = vpop.f32.mrb[0].mxu0
    %v2793 = vadd.f32 0.0, %v2792
    %2794 = vdwg.mxu0
    %v2796 = vrot.slane %v2720, 3
    %v2798 = vadd.f32 %v31, %v2796
    %v2799 = vadd.f32 %v2798, %v837
    %vm2800 = vcmask 1045509
    %v2801 = vsel %vm2800, %v2799, -inf
    %2802 = vmax.xlane.f32.xlu0 %v2801
    %v2803 = vpop.xlane.xlu0 %2802
    %v2804 = vsub.f32 %v2799, %v2803
    %v2805 = vmul.f32 %v2804, 1.442695
    %v2806 = vpow.pop %v2805
    %v2807 = vsel %vm2800, %v2806, 0.0
    %2808 = vadd.xlane.f32.xlu0 %v2807
    %v2809 = vpop.xlane.xlu0 %2808
    %v2810 = vrcp.pop %v2809
    %v2811 = vmul.f32 %v2806, %v2810
    %v2813 = vrot.slane %v2811, 5
    %2815 = vmatprep.subr.mxu0 0.0
    %2816 = vmatpush1.msra.mxu0 %v33
    %2817 = vmatprep.subr.mxu0 0.0
    %2818 = vmatpush1.msra.mxu0 %v34
    %2819 = vmatprep.subr.mxu0 0.0
    %2820 = vmatpush1.msra.mxu0 %v35
    %2821 = vmatprep.subr.mxu0 0.0
    %2822 = vmatpush1.msra.mxu0 %v36
    %2823 = vmatprep.subr.mxu0 0.0
    %2824 = vmatpush1.msra.mxu0 %v37
    %2825 = vmatprep.subr.mxu0 0.0
    %2826 = vmatpush1.msra.mxu0 %v38
    %2827 = vmatprep.subr.mxu0 0.0
    %2828 = vmatpush1.msra.mxu0 %v39
    %2829 = vmatprep.subr.mxu0 0.0
    %2830 = vmatpush1.msra.mxu0 %v40
    %2831 = vmatprep.subr.mxu0 0.0
    %2832 = vmatpush1.msra.mxu0 %v41
    %2833 = vmatprep.subr.mxu0 0.0
    %2834 = vmatpush1.msra.mxu0 %v42
    %2835 = vmatprep.subr.mxu0 0.0
    %2836 = vmatpush1.msra.mxu0 %v43
    %2837 = vmatprep.subr.mxu0 0.0
    %2838 = vmatpush1.msra.mxu0 %v44
    %2839 = vmatprep.subr.mxu0 0.0
    %2840 = vmatpush1.msra.mxu0 %v45
    %2841 = vmatprep.subr.mxu0 0.0
    %2842 = vmatpush1.msra.mxu0 %v46
    %2843 = vmatprep.subr.mxu0 0.0
    %2844 = vmatpush1.msra.mxu0 %v47
    %2845 = vmatprep.subr.mxu0 0.0
    %2846 = vmatpush1.msra.mxu0 %v48
    %2847 = vmatprep.subr.mxu0 0.0
    %2848 = vmatpush1.msra.mxu0 0.0
    %2849 = vmatprep.subr.mxu0 0.0
    %2850 = vmatpush1.msra.mxu0 0.0
    %2851 = vmatprep.subr.mxu0 0.0
    %2852 = vmatpush1.msra.mxu0 0.0
    %2853 = vmatprep.subr.mxu0 0.0
    %2854 = vmatpush1.msra.mxu0 0.0
    %2855 = vmatprep.subr.mxu0 0.0
    %2856 = vmatpush1.msra.mxu0 0.0
    %2857 = vmatprep.subr.mxu0 0.0
    %2858 = vmatpush1.msra.mxu0 0.0
    %2859 = vmatprep.subr.mxu0 0.0
    %2860 = vmatpush1.msra.mxu0 0.0
    %2861 = vmatprep.subr.mxu0 0.0
    %2862 = vmatpush1.msra.mxu0 0.0
    %2863 = vmatprep.subr.mxu0 0.0
    %2864 = vmatpush1.msra.mxu0 0.0
    %2865 = vmatprep.subr.mxu0 0.0
    %2866 = vmatpush1.msra.mxu0 0.0
    %2867 = vmatprep.subr.mxu0 0.0
    %2868 = vmatpush1.msra.mxu0 0.0
    %2869 = vmatprep.subr.mxu0 0.0
    %2870 = vmatpush1.msra.mxu0 0.0
    %2871 = vmatprep.subr.mxu0 0.0
    %2872 = vmatpush1.msra.mxu0 0.0
    %2873 = vmatprep.subr.mxu0 0.0
    %2874 = vmatpush1.msra.mxu0 0.0
    %2875 = vmatprep.subr.mxu0 0.0
    %2876 = vmatpush1.msra.mxu0 0.0
    %2877 = vmatprep.subr.mxu0 0.0
    %2878 = vmatpush1.msra.mxu0 0.0
    %2879 = vmatprep.mubr.f32.mxu0 0.0
    %2880 = vmatmul.mubr.f32.gmra.mrb[0].mxu0 %v2813
    %v2881 = vpop.f32.mrb[0].mxu0
    %v2882 = vadd.f32 0.0, %v2881
    %v2883 = vpop.f32.mrb[0].mxu0
    %2884 = vdwg.mxu0
    %v2886 = vrot.slane %v2882, 3
    %v2888 = vadd.f32 %v32, %v2886
    %v2889 = vadd.f32 %v2888, %v410
    %v2890 = vmax.f32 %v2889, 0.0
    %v2892 = vrot.slane %v2890, 5
    %2894 = vmatprep.subr.mxu0 %v114
    %2895 = vmatpush1.msra.mxu0 %v113
    %2896 = vmatprep.subr.mxu0 %v117
    %2897 = vmatpush1.msra.mxu0 %v116
    %2898 = vmatprep.subr.mxu0 %v120
    %2899 = vmatpush1.msra.mxu0 %v119
    %2900 = vmatprep.subr.mxu0 %v123
    %2901 = vmatpush1.msra.mxu0 %v122
    %2902 = vmatprep.subr.mxu0 %v126
    %2903 = vmatpush1.msra.mxu0 %v125
    %2904 = vmatprep.subr.mxu0 %v129
    %2905 = vmatpush1.msra.mxu0 %v128
    %2906 = vmatprep.subr.mxu0 %v132
    %2907 = vmatpush1.msra.mxu0 %v131
    %2908 = vmatprep.subr.mxu0 %v135
    %2909 = vmatpush1.msra.mxu0 %v134
    %2910 = vmatprep.subr.mxu0 %v138
    %2911 = vmatpush1.msra.mxu0 %v137
    %2912 = vmatprep.subr.mxu0 %v141
    %2913 = vmatpush1.msra.mxu0 %v140
    %2914 = vmatprep.subr.mxu0 %v144
    %2915 = vmatpush1.msra.mxu0 %v143
    %2916 = vmatprep.subr.mxu0 %v147
    %2917 = vmatpush1.msra.mxu0 %v146
    %2918 = vmatprep.subr.mxu0 %v150
    %2919 = vmatpush1.msra.mxu0 %v149
    %2920 = vmatprep.subr.mxu0 %v153
    %2921 = vmatpush1.msra.mxu0 %v152
    %2922 = vmatprep.subr.mxu0 %v156
    %2923 = vmatpush1.msra.mxu0 %v155
    %2924 = vmatprep.subr.mxu0 %v159
    %2925 = vmatpush1.msra.mxu0 %v158
    %2926 = vmatprep.subr.mxu0 0.0
    %2927 = vmatpush1.msra.mxu0 0.0
    %2928 = vmatprep.subr.mxu0 0.0
    %2929 = vmatpush1.msra.mxu0 0.0
    %2930 = vmatprep.subr.mxu0 0.0
    %2931 = vmatpush1.msra.mxu0 0.0
    %2932 = vmatprep.subr.mxu0 0.0
    %2933 = vmatpush1.msra.mxu0 0.0
    %2934 = vmatprep.subr.mxu0 0.0
    %2935 = vmatpush1.msra.mxu0 0.0
    %2936 = vmatprep.subr.mxu0 0.0
    %2937 = vmatpush1.msra.mxu0 0.0
    %2938 = vmatprep.subr.mxu0 0.0
    %2939 = vmatpush1.msra.mxu0 0.0
    %2940 = vmatprep.subr.mxu0 0.0
    %2941 = vmatpush1.msra.mxu0 0.0
    %2942 = vmatprep.subr.mxu0 0.0
    %2943 = vmatpush1.msra.mxu0 0.0
    %2944 = vmatprep.subr.mxu0 0.0
    %2945 = vmatpush1.msra.mxu0 0.0
    %2946 = vmatprep.subr.mxu0 0.0
    %2947 = vmatpush1.msra.mxu0 0.0
    %2948 = vmatprep.subr.mxu0 0.0
    %2949 = vmatpush1.msra.mxu0 0.0
    %2950 = vmatprep.subr.mxu0 0.0
    %2951 = vmatpush1.msra.mxu0 0.0
    %2952 = vmatprep.subr.mxu0 0.0
    %2953 = vmatpush1.msra.mxu0 0.0
    %2954 = vmatprep.subr.mxu0 0.0
    %2955 = vmatpush1.msra.mxu0 0.0
    %2956 = vmatprep.subr.mxu0 0.0
    %2957 = vmatpush1.msra.mxu0 0.0
    %2958 = vmatprep.mubr.f32.mxu0 0.0
    %2959 = vmatmul.mubr.f32.gmra.mrb[0].mxu0 %v2892
    %v2960 = vpop.f32.mrb[0].mxu0
    %v2961 = vadd.f32 0.0, %v2960
    %v2962 = vpop.f32.mrb[0].mxu0
    %v2963 = vadd.f32 0.0, %v2962
    %2964 = vdwg.mxu0
    %2965 = vmatprep.subr.mxu0 0.0
    %2966 = vmatpush1.msra.mxu0 %v115
    %2967 = vmatprep.subr.mxu0 0.0
    %2968 = vmatpush1.msra.mxu0 %v118
    %2969 = vmatprep.subr.mxu0 0.0
    %2970 = vmatpush1.msra.mxu0 %v121
    %2971 = vmatprep.subr.mxu0 0.0
    %2972 = vmatpush1.msra.mxu0 %v124
    %2973 = vmatprep.subr.mxu0 0.0
    %2974 = vmatpush1.msra.mxu0 %v127
    %2975 = vmatprep.subr.mxu0 0.0
    %2976 = vmatpush1.msra.mxu0 %v130
    %2977 = vmatprep.subr.mxu0 0.0
    %2978 = vmatpush1.msra.mxu0 %v133
    %2979 = vmatprep.subr.mxu0 0.0
    %2980 = vmatpush1.msra.mxu0 %v136
    %2981 = vmatprep.subr.mxu0 0.0
    %2982 = vmatpush1.msra.mxu0 %v139
    %2983 = vmatprep.subr.mxu0 0.0
    %2984 = vmatpush1.msra.mxu0 %v142
    %2985 = vmatprep.subr.mxu0 0.0
    %2986 = vmatpush1.msra.mxu0 %v145
    %2987 = vmatprep.subr.mxu0 0.0
    %2988 = vmatpush1.msra.mxu0 %v148
    %2989 = vmatprep.subr.mxu0 0.0
    %2990 = vmatpush1.msra.mxu0 %v151
    %2991 = vmatprep.subr.mxu0 0.0
    %2992 = vmatpush1.msra.mxu0 %v154
    %2993 = vmatprep.subr.mxu0 0.0
    %2994 = vmatpush1.msra.mxu0 %v157
    %2995 = vmatprep.subr.mxu0 0.0
    %2996 = vmatpush1.msra.mxu0 %v160
    %2997 = vmatprep.subr.mxu0 0.0
    %2998 = vmatpush1.msra.mxu0 0.0
    %2999 = vmatprep.subr.mxu0 0.0
    %3000 = vmatpush1.msra.mxu0 0.0
    %3001 = vmatprep.subr.mxu0 0.0
    %3002 = vmatpush1.msra.mxu0 0.0
    %3003 = vmatprep.subr.mxu0 0.0
    %3004 = vmatpush1.msra.mxu0 0.0
    %3005 = vmatprep.subr.mxu0 0.0
    %3006 = vmatpush1.msra.mxu0 0.0
    %3007 = vmatprep.subr.mxu0 0.0
    %3008 = vmatpush1.msra.mxu0 0.0
    %3009 = vmatprep.subr.mxu0 0.0
    %3010 = vmatpush1.msra.mxu0 0.0
    %3011 = vmatprep.subr.mxu0 0.0
    %3012 = vmatpush1.msra.mxu0 0.0
    %3013 = vmatprep.subr.mxu0 0.0
    %3014 = vmatpush1.msra.mxu0 0.0
    %3015 = vmatprep.subr.mxu0 0.0
    %3016 = vmatpush1.msra.mxu0 0.0
    %3017 = vmatprep.subr.mxu0 0.0
    %3018 = vmatpush1.msra.mxu0 0.0
    %3019 = vmatprep.subr.mxu0 0.0
    %3020 = vmatpush1.msra.mxu0 0.0
    %3021 = vmatprep.subr.mxu0 0.0
    %3022 = vmatpush1.msra.mxu0 0.0
    %3023 = vmatprep.subr.mxu0 0.0
    %3024 = vmatpush1.msra.mxu0 0.0
    %3025 = vmatprep.subr.mxu0 0.0
    %3026 = vmatpush1.msra.mxu0 0.0
    %3027 = vmatprep.subr.mxu0 0.0
    %3028 = vmatpush1.msra.mxu0 0.0
    %3029 = vmatprep.mubr.f32.mxu0 0.0
    %3030 = vmatmul.mubr.f32.gmra.mrb[0].mxu0 %v2892
    %v3031 = vpop.f32.mrb[0].mxu0
    %v3032 = vadd.f32 0.0, %v3031
    %v3033 = vpop.f32.mrb[0].mxu0
    %3034 = vdwg.mxu0
    %v3035 = vadd.f32 %v2961, %v2722
    %v3036 = vadd.f32 %v3035, %v559
    %v3037 = vxor.u32 %v3036, 2147483648
    %v3038 = vmul.f32 %v3037, 1.442695
    %v3039 = vpow.pop %v3038
    %v3040 = vadd.f32 %v3039, 1.0
    %v3041 = vrcp.pop %v3040
    %v3042 = vmul.f32 1.0, %v3041
    %v3043 = vadd.f32 %v2963, %v2791
    %v3044 = vadd.f32 %v3043, %v572
    %v3045 = vxor.u32 %v3044, 2147483648
    %v3046 = vmul.f32 %v3045, 1.442695
    %v3047 = vpow.pop %v3046
    %v3048 = vadd.f32 %v3047, 1.0
    %v3049 = vrcp.pop %v3048
    %v3050 = vmul.f32 1.0, %v3049
    %v3051 = vadd.f32 %v3032, %v584
    %v3052 = vadd.f32 %v2793, %v590
    %v3053 = vmul.f32 %v3042, %v3052
    %v3054 = vadd.f32 %v3051, %v3053
    %v3055 = vtanh.pop %v3054
    %v3056 = vsub.f32 1.0, %v3050
    %v3057 = vmul.f32 %v3056, %v3055
    %v3058 = vmul.f32 %v3050, %v2569
    %v3059 = vadd.f32 %v3057, %v3058
    %3060 = vmatprep.subr.mxu0 0.0
    %3061 = vmatpush1.msra.mxu0 %v161
    %3062 = vmatprep.subr.mxu0 0.0
    %3063 = vmatpush1.msra.mxu0 %v162
    %3064 = vmatprep.subr.mxu0 0.0
    %3065 = vmatpush1.msra.mxu0 %v163
    %3066 = vmatprep.subr.mxu0 0.0
    %3067 = vmatpush1.msra.mxu0 %v164
    %3068 = vmatprep.subr.mxu0 0.0
    %3069 = vmatpush1.msra.mxu0 %v165
    %3070 = vmatprep.subr.mxu0 0.0
    %3071 = vmatpush1.msra.mxu0 %v166
    %3072 = vmatprep.subr.mxu0 0.0
    %3073 = vmatpush1.msra.mxu0 %v167
    %3074 = vmatprep.subr.mxu0 0.0
    %3075 = vmatpush1.msra.mxu0 %v168
    %3076 = vmatprep.subr.mxu0 0.0
    %3077 = vmatpush1.msra.mxu0 %v169
    %3078 = vmatprep.subr.mxu0 0.0
    %3079 = vmatpush1.msra.mxu0 %v170
    %3080 = vmatprep.subr.mxu0 0.0
    %3081 = vmatpush1.msra.mxu0 %v171
    %3082 = vmatprep.subr.mxu0 0.0
    %3083 = vmatpush1.msra.mxu0 %v172
    %3084 = vmatprep.subr.mxu0 0.0
    %3085 = vmatpush1.msra.mxu0 %v173
    %3086 = vmatprep.subr.mxu0 0.0
    %3087 = vmatpush1.msra.mxu0 %v174
    %3088 = vmatprep.subr.mxu0 0.0
    %3089 = vmatpush1.msra.mxu0 %v175
    %3090 = vmatprep.subr.mxu0 0.0
    %3091 = vmatpush1.msra.mxu0 %v176
    %3092 = vmatprep.subr.mxu0 0.0
    %3093 = vmatpush1.msra.mxu0 0.0
    %3094 = vmatprep.subr.mxu0 0.0
    %3095 = vmatpush1.msra.mxu0 0.0
    %3096 = vmatprep.subr.mxu0 0.0
    %3097 = vmatpush1.msra.mxu0 0.0
    %3098 = vmatprep.subr.mxu0 0.0
    %3099 = vmatpush1.msra.mxu0 0.0
    %3100 = vmatprep.subr.mxu0 0.0
    %3101 = vmatpush1.msra.mxu0 0.0
    %3102 = vmatprep.subr.mxu0 0.0
    %3103 = vmatpush1.msra.mxu0 0.0
    %3104 = vmatprep.subr.mxu0 0.0
    %3105 = vmatpush1.msra.mxu0 0.0
    %3106 = vmatprep.subr.mxu0 0.0
    %3107 = vmatpush1.msra.mxu0 0.0
    %3108 = vmatprep.subr.mxu0 0.0
    %3109 = vmatpush1.msra.mxu0 0.0
    %3110 = vmatprep.subr.mxu0 0.0
    %3111 = vmatpush1.msra.mxu0 0.0
    %3112 = vmatprep.subr.mxu0 0.0
    %3113 = vmatpush1.msra.mxu0 0.0
    %3114 = vmatprep.subr.mxu0 0.0
    %3115 = vmatpush1.msra.mxu0 0.0
    %3116 = vmatprep.subr.mxu0 0.0
    %3117 = vmatpush1.msra.mxu0 0.0
    %3118 = vmatprep.subr.mxu0 0.0
    %3119 = vmatpush1.msra.mxu0 0.0
    %3120 = vmatprep.subr.mxu0 0.0
    %3121 = vmatpush1.msra.mxu0 0.0
    %3122 = vmatprep.subr.mxu0 0.0
    %3123 = vmatpush1.msra.mxu0 0.0
    %3124 = vmatprep.mubr.f32.mxu0 0.0
    %3125 = vmatmul.mubr.f32.gmra.mrb[0].mxu0 %v3059
    %v3126 = vpop.f32.mrb[0].mxu0
    %v3127 = vadd.f32 %v603, %v3126
    %v3128 = vpop.f32.mrb[0].mxu0
    %3129 = vdwg.mxu0
    %v3130 = vsel %vm323, %v3127, -inf
    %3131 = vmax.xlane.f32.xlu0 %v3130
    %v3132 = vpop.xlane.xlu0 %3131
    %v3133 = vsub.f32 %v3127, %v3132
    %v3134 = vmul.f32 %v3133, 1.442695
    %v3135 = vpow.pop %v3134
    %v3136 = vsel %vm323, %v3135, 0.0
    %3137 = vadd.xlane.f32.xlu0 %v3136
    %v3138 = vpop.xlane.xlu0 %3137
    %v3139 = vlog2.pop %v3138
    %v3140 = vmul.f32 %v3139, 0.6931472
    %v3141 = vadd.f32 %v3132, %v3140
    %v3142 = vsub.f32 %v3127, %v3141
    %v3144 = vrot.slane %v1182, 7
    %v3147 = vrot.slane %v1672, 6
    %v3150 = vrot.slane %v2162, 5
    %v3153 = vrot.slane %v2652, 4
    %v3156 = vrot.slane %v3142, 3
    %v3158 = vsel %vm323, %v687, %v3144
    %vm3159 = vcmask 1041408
    %v3160 = vsel %vm3159, %v3158, %v3147
    %vm3161 = vcmask 1042432
    %v3162 = vsel %vm3161, %v3160, %v3150
    %vm3163 = vcmask 1043456
    %v3164 = vsel %vm3163, %v3162, %v3153
    %vm3165 = vcmask 1044480
    %v3166 = vsel %vm3165, %v3164, %v3156
    %3167 = vst [vmem:[#allocation2] sm:$0x3f] %v3166
    %v3168 = vsel %vm323, %v334, %v851
    %v3169 = vsel %vm3159, %v3168, %v1341
    %v3170 = vsel %vm3161, %v3169, %v1831
    %v3171 = vsel %vm3163, %v3170, %v2321
    %v3172 = vsel %vm3165, %v3171, %v2811
    %3173 = vst [vmem:[#allocation4] sm:$0x3f] %v3172
    %3174 = vst [vmem:[%s9] sm:$0x1] %v3059
    // Predicated region
    $region30: #{decoder_forward.1} parent=1 // pred_check
      _
    $region31: #{decoder_forward.1} parent=1 // pred_check_branch
      %3176 = sbr.rel (0) target = $region33
    $region32: #{decoder_forward.1} parent=1 // pred_region
      %s3178 = ssub.s32 128, 128
      %3179 = vsyncadd [#allocation3], %s3178
      %s3181 = sshll.u32 [#allocation2], 4
      %s3182 = int_to_ptr.vmem [resolvable:$true] %s3181
      %3184 = dma.vmem_to_hbm [thread:$0]  %s3182, 128, %s7, [#allocation3]
    $region33: #{decoder_forward.1} parent=1 // pred_fallthru
      _
    // Predicated region
    $region34: #{decoder_forward.1} parent=1 // pred_check
      _
    $region35: #{decoder_forward.1} parent=1 // pred_check_branch
      %3186 = sbr.rel (0) target = $region37
    $region36: #{decoder_forward.1} parent=1 // pred_region
      %s3188 = ssub.s32 128, 128
      %3189 = vsyncadd [#allocation5], %s3188
      %s3191 = sshll.u32 [#allocation4], 4
      %s3192 = int_to_ptr.vmem [resolvable:$true] %s3191
      %3194 = dma.vmem_to_hbm [thread:$0]  %s3192, 128, %s8, [#allocation5]
    $region37: #{decoder_forward.1} parent=1 // pred_fallthru
      _
    // Predicated region
    $region38: #{decoder_forward.1} parent=1 // pred_check
      _
    $region39: #{decoder_forward.1} parent=1 // pred_check_branch
      %3196 = sbr.rel (0) target = $region41
    $region40: #{decoder_forward.1} parent=1 // pred_region
      _
    $region41: #{decoder_forward.1} parent=1 // pred_fallthru
      _
    // Predicated region
    $region42: #{decoder_forward.1} parent=1 // pred_check
      _
    $region43: #{decoder_forward.1} parent=1 // pred_check_branch
      %3198 = sbr.rel (0) target = $region45
    $region44: #{decoder_forward.1} parent=1 // pred_region
      %3199 = dma.done [#allocation3], 128
    $region45: #{decoder_forward.1} parent=1 // pred_fallthru
      _
    // Predicated region
    $region46: #{decoder_forward.1} parent=1 // pred_check
      _
    $region47: #{decoder_forward.1} parent=1 // pred_check_branch
      %3201 = sbr.rel (0) target = $region49
    $region48: #{decoder_forward.1} parent=1 // pred_region
      %3202 = dma.done [#allocation5], 128
    $region49: #{decoder_forward.1} parent=1 // pred_fallthru
      _
    // Predicated region
    $region50: #{decoder_forward.1} parent=1 // pred_check
      _
    $region51: #{decoder_forward.1} parent=1 // pred_check_branch
      %3204 = sbr.rel (0) target = $region53
    $region52: #{decoder_forward.1} parent=1 // pred_region
      _
    $region53: #{decoder_forward.1} parent=1 // pred_fallthru
      _
    %3205 = vsyncpa [#allocation3], 1
    %3206 = vsyncpa [#allocation5], 1

</llo_original>
